<compile_context>
chip_gen: v7x
topology: tpu7x:2x2x1
jax: 0.10.0
libtpu: 0.0.40
codegen_flags: <defaults>
</compile_context>

<pallas_src>
import functools
import math

import jax
import jax.numpy as jnp
from jax.experimental import pallas as pl
from jax.experimental.pallas import tpu as pltpu

EPS = 1e-5          # PyTorch BatchNorm default eps
LANE = 128
SUBLANE = 8


def _round_up(x, m):
    return (x + m - 1) // m * m


def _vmem_limit(per_step_bytes):
    # per_step_bytes already accounts for double-buffering; add slack, keep a
    # sane floor, cap below physical VMEM of the largest-memory generations.
    return int(min(max(per_step_bytes + (8 << 20), 32 << 20), 96 << 20))


def _pick_tm(m):
    m = _round_up(m, SUBLANE)
    if m <= 128:
        return m
    if m <= 512:
        return 128     # >=2 M-steps: keeps both v7x TensorCores fed at small batch
    if m <= 2048:
        return 256
    return 512         # big batch: fewer grid steps / larger MXU M tiles


def _pick_hw_tile(hw, img_blk, max_rows=4096):
    """Pick an hw tile (divides hw, multiple of 16) bounding rows per block."""
    if img_blk * hw <= max_rows or hw % 16 != 0:
        return hw
    t = max(16, (max_rows // img_blk) // 16 * 16)
    while t > 16 and hw % t:
        t -= 16
    return t if hw % t == 0 else hw


# ----------------------------------------------------------------------------
# Pallas kernels
# ----------------------------------------------------------------------------
def _conv_stem_kernel(p_ref, w_ref, b_ref, o_ref, acc_ref, *, hw):
    """im2col conv (bf16 MXU, K=C*9 unpadded) -> BN shift -> ReLU -> avg pool.

    Grid axis 1 tiles the spatial (hw) dimension; the pooled sum is accumulated
    in an f32 VMEM scratch and finalized (scaled + bf16 cast) at the last step.
    """
    j = pl.program_id(1)

    @pl.when(j == 0)
    def _():
        acc_ref[...] = jnp.zeros_like(acc_ref)

    x = p_ref[...]                                        # (IB, T, K) bf16
    ib, t, k = x.shape
    y = jnp.dot(x.reshape(ib * t, k), w_ref[...],
                preferred_element_type=jnp.float32)       # (IB*T, F) f32
    # BN scale is folded into the bf16 weights at pack time; only shift + ReLU.
    y = jnp.maximum(y + b_ref[...], 0.0)
    acc_ref[...] += jnp.sum(y.reshape(ib, t, -1), axis=1)

    @pl.when(j == pl.num_programs(1) - 1)
    def _():
        # AdaptiveAvgPool2d((1,1)) == mean over spatial positions; emit bf16.
        o_ref[...] = (acc_ref[...] * (1.0 / hw)).astype(o_ref.dtype)


def _fused_mlp_kernel(x_ref, w1, b1, w2, b2, w3, b3, w4, b4, w5, b5,
                      z_ref, p_ref):
    """Projection MLP (3 layers) + predictor (2 layers), fully fused.

    BN(eval) scales are folded into the bf16 weights; each layer is
    matmul (f32 accumulation) + per-feature shift (+ optional ReLU).
    """
    def layer(h_bf16, w_ref, b_ref, relu):
        y = jnp.dot(h_bf16, w_ref[...],
                    preferred_element_type=jnp.float32) + b_ref[...]
        return jnp.maximum(y, 0.0) if relu else y

    h = layer(x_ref[...], w1, b1, True)                   # Linear+BN+ReLU
    h = layer(h.astype(jnp.bfloat16), w2, b2, True)       # Linear+BN+ReLU
    z = layer(h.astype(jnp.bfloat16), w3, b3, False)      # Linear(+bias)+BN(no affine)
    # Store z immediately: overlaps its output DMA with the predictor matmuls
    # and releases the f32 live range early.
    z_ref[...] = z.astype(z_ref.dtype)
    h = layer(z.astype(jnp.bfloat16), w4, b4, True)       # pred Linear+BN+ReLU
    p_ref[...] = layer(h.astype(jnp.bfloat16), w5, b5, False).astype(p_ref.dtype)


# ----------------------------------------------------------------------------
# pallas_call wrappers
# ----------------------------------------------------------------------------
def conv_bn_relu_gap(patches, w_t, shift, *, hw, hw_tile, img_blk):
    """patches: (n_imgs, hw, K) bf16 -> pooled features (n_imgs, F) bf16."""
    n_img, _, k = patches.shape
    f = w_t.shape[1]
    grid = (n_img // img_blk, hw // hw_tile)
    est = 2 * (img_blk * hw_tile * k * 2       # patches block (double-buffered)
               + k * f * 2 + f * 4             # resident weight + shift
               + img_blk * f * 2)              # output block
    est += img_blk * f * 4                     # f32 accumulator scratch
    return pl.pallas_call(
        functools.partial(_conv_stem_kernel, hw=hw),
        grid=grid,
        out_shape=jax.ShapeDtypeStruct((n_img, f), jnp.bfloat16),
        in_specs=[
            pl.BlockSpec((img_blk, hw_tile, k), lambda i, j: (i, j, 0)),
            pl.BlockSpec((k, f), lambda i, j: (0, 0)),     # weight resident
            pl.BlockSpec((1, f), lambda i, j: (0, 0)),     # shift resident
        ],
        out_specs=pl.BlockSpec((img_blk, f), lambda i, j: (i, 0)),
        scratch_shapes=[pltpu.VMEM((img_blk, f), jnp.float32)],
        compiler_params=pltpu.CompilerParams(
            dimension_semantics=("parallel", "arbitrary"),
            vmem_limit_bytes=_vmem_limit(est)),
    )(patches, w_t, shift)


def fused_mlp_predictor(feat, weights, shifts, *, tm):
    """feat: (M, prev_dim) bf16 -> (z, p), each (M, dim) f32, in one kernel."""
    m, in_dim = feat.shape
    dim = weights[2].shape[1]
    grid = (m // tm,)

    def _const(i):
        return (0, 0)

    in_specs = [pl.BlockSpec((tm, in_dim), lambda i: (i, 0))]
    args = [feat]
    wbytes = 0
    for w, b in zip(weights, shifts):
        in_specs.append(pl.BlockSpec(w.shape, _const))     # weights resident in VMEM
        in_specs.append(pl.BlockSpec(b.shape, _const))
        args += [w, b]
        wbytes += w.size * w.dtype.itemsize + b.size * b.dtype.itemsize

    est = 2 * (tm * in_dim * 2 + wbytes + 2 * tm * dim * 4)
    return pl.pallas_call(
        _fused_mlp_kernel,
        grid=grid,
        out_shape=(jax.ShapeDtypeStruct((m, dim), jnp.float32),
                   jax.ShapeDtypeStruct((m, dim), jnp.float32)),
        in_specs=in_specs,
        out_specs=(pl.BlockSpec((tm, dim), lambda i: (i, 0)),
                   pl.BlockSpec((tm, dim), lambda i: (i, 0))),
        compiler_params=pltpu.CompilerParams(
            dimension_semantics=("parallel",),
            vmem_limit_bytes=_vmem_limit(est)),
    )(*args)


# ----------------------------------------------------------------------------
# Glue (im2col, BN folding, parameter init / packing)
# ----------------------------------------------------------------------------
def im2col_3x3(x):
    """x: (B, C, H, W) -> (B, H*W, C*9); patch feature order is (C, kh, kw)."""
    B, C, H, W = x.shape
    xp = jnp.pad(x, ((0, 0), (0, 0), (1, 1), (1, 1)))
    cols = [xp[:, :, dh:dh + H, dw:dw + W] for dh in range(3) for dw in range(3)]
    p = jnp.stack(cols, axis=2)        # (B, C, 9, H, W)
    p = p.transpose(0, 3, 4, 1, 2)     # (B, H, W, C, 9)
    return p.reshape(B, H * W, C * 9)


def init_params(key, C, prev_dim, dim, pred_dim):
    ks = jax.random.split(key, 8)

    def w(k, shape, fan_in):
        return jax.random.normal(k, shape, jnp.float32) / jnp.sqrt(float(fan_in))

    P = {}
    # backbone stem: Conv2d(C, prev_dim, 3, padding=1, bias=False) + BN2d
    P["conv_w"] = w(ks[0], (prev_dim, C, 3, 3), C * 9)
    P["conv_g"] = jnp.ones((prev_dim,)); P["conv_b"] = jnp.zeros((prev_dim,))
    # projection MLP (encoder.fc)
    P["w1"] = w(ks[1], (prev_dim, prev_dim), prev_dim)
    P["g1"] = jnp.ones((prev_dim,)); P["b1"] = jnp.zeros((prev_dim,))
    P["w2"] = w(ks[2], (prev_dim, prev_dim), prev_dim)
    P["g2"] = jnp.ones((prev_dim,)); P["b2"] = jnp.zeros((prev_dim,))
    P["w3"] = w(ks[3], (dim, prev_dim), prev_dim)               # Linear(prev_dim, dim), with bias
    P["b3"] = 0.01 * jax.random.normal(ks[4], (dim,), jnp.float32)
    # predictor
    P["pw1"] = w(ks[5], (pred_dim, dim), dim)
    P["pg1"] = jnp.ones((pred_dim,)); P["pb1"] = jnp.zeros((pred_dim,))
    P["pw2"] = w(ks[6], (dim, pred_dim), pred_dim)
    P["pb2"] = 0.01 * jax.random.normal(ks[7], (dim,), jnp.float32)
    return P


def pack_params(P):
    """Fold BN (eval, mean=0, var=1) scales into bf16 weights; shifts stay f32."""
    s = (1.0 + EPS) ** -0.5          # BN eval scale with running_var=1
    F = P["conv_w"].shape[0]
    k = P["conv_w"].shape[1] * 9

    # conv stem: (C*9, F) weight, K kept UNPADDED (full-extent block in the kernel).
    conv_w_t = (P["conv_w"].reshape(F, k).T * (P["conv_g"] * s)[None, :]).astype(jnp.bfloat16)
    conv_shift = P["conv_b"].reshape(1, F).astype(jnp.float32)

    def fold(w_t, gamma):
        return (w_t * (gamma * s)[None, :]).astype(jnp.bfloat16)

    weights = (fold(P["w1"].T, P["g1"]),
               fold(P["w2"].T, P["g2"]),
               (P["w3"].T * s).astype(jnp.bfloat16),       # affine-free BN folded into W3
               fold(P["pw1"].T, P["pg1"]),
               P["pw2"].T.astype(jnp.bfloat16))            # plain Linear
    shifts = (P["b1"].reshape(1, -1).astype(jnp.float32),
              P["b2"].reshape(1, -1).astype(jnp.float32),
              (P["b3"] * s).reshape(1, -1).astype(jnp.float32),
              P["pb1"].reshape(1, -1).astype(jnp.float32),
              P["pb2"].reshape(1, -1).astype(jnp.float32))
    return conv_w_t, conv_shift, weights, shifts


# ----------------------------------------------------------------------------
# SimSiam forward
# ----------------------------------------------------------------------------
def simsiam_forward(x, packed):
    conv_w_t, conv_shift, weights, shifts = packed
    B = x.shape[0]
    H, W = x.shape[-2:]
    hw = H * W

    # torch.unbind(x, 1) -> run BOTH views as one 2B-row batch.
    xall = jnp.concatenate([x[:, 0], x[:, 1]], axis=0)             # (2B, C, H, W)
    n_img = xall.shape[0]

    # Tile selection: big image blocks for the mem-bound stem, M tile for the MLP.
    img_blk = min(32, _round_up(n_img, SUBLANE))
    n_img_pad = _round_up(n_img, img_blk)
    tm = _pick_tm(n_img_pad)
    n_img_pad = _round_up(n_img_pad, tm)
    hw_tile = _pick_hw_tile(hw, img_blk)

    xall = jnp.pad(xall, ((0, n_img_pad - n_img), (0, 0), (0, 0), (0, 0)))

    # im2col, K = C*9 UNPADDED, bf16 at the kernel boundary.
    patches = im2col_3x3(xall).astype(jnp.bfloat16)                # (n_img_pad, hw, C*9)

    # conv3x3 -> BN -> ReLU -> global average pool (one kernel, bf16 output)
    feat = conv_bn_relu_gap(patches, conv_w_t, conv_shift,
                            hw=hw, hw_tile=hw_tile, img_blk=img_blk)

    # projection MLP + predictor (one fused kernel, weights resident in VMEM)
    z_all, p_all = fused_mlp_predictor(feat, weights, shifts, tm=tm)

    z1, z2 = z_all[:B], z_all[B:2 * B]
    p1, p2 = p_all[:B], p_all[B:2 * B]
    return p1, p2, jax.lax.stop_gradient(z1), jax.lax.stop_gradient(z2)


# ----------------------------------------------------------------------------
if __name__ == "__main__":
    B, C, H, W = 2, 3, 16, 16
    prev_dim, dim, pred_dim = 128, 256, 128   # scaled-down (2048 / 2048 / 512 in the paper)

    key = jax.random.PRNGKey(0)
    kx, kp = jax.random.split(key)
    x = jax.random.normal(kx, (B, 2, C, H, W), jnp.float32)
    packed = pack_params(init_params(kp, C, prev_dim, dim, pred_dim))

    fwd = jax.jit(lambda inp: simsiam_forward(inp, packed))
    p1, p2, z1, z2 = fwd(x)
    jax.block_until_ready((p1, p2, z1, z2))

    assert p1.shape == (B, dim) and p2.shape == (B, dim)
    assert z1.shape == (B, dim) and z2.shape == (B, dim)
    assert jnp.all(jnp.isfinite(p1)) and jnp.all(jnp.isfinite(p2))
    assert jnp.all(jnp.isfinite(z1)) and jnp.all(jnp.isfinite(z2))
    print("KERNEL_OK")
</pallas_src>

<mosaic_0001>
module attributes {stable_mosaic.version = 11 : i64} {
  func.func @_conv_stem_kernel(%arg0: i32, %arg1: i32, %arg2: memref<8x256x27xbf16, #tpu.memory_space<vmem>>, %arg3: memref<27x128xbf16, #tpu.memory_space<vmem>>, %arg4: memref<1x128xf32, #tpu.memory_space<vmem>>, %arg5: memref<8x128xbf16, #tpu.memory_space<vmem>>, %arg6: memref<8x128xf32, #tpu.memory_space<vmem>>) attributes {dimension_semantics = [#tpu.dimension_semantics<parallel>, #tpu.dimension_semantics<arbitrary>], iteration_bounds = array<i64: 1, 1>, scalar_prefetch = 0 : i64, scratch_operands = 1 : i64, tpu.core_type = #tpu.core_type<tc>, window_params = [{transform_indices = @transform_0, window_bounds = array<i64: 8, 256, 27>}, {pipeline_mode = #tpu.pipeline_mode<synchronous>, transform_indices = @transform_1, window_bounds = array<i64: 27, 128>}, {pipeline_mode = #tpu.pipeline_mode<synchronous>, transform_indices = @transform_2, window_bounds = array<i64: 1, 128>}, {transform_indices = @transform_3, window_bounds = array<i64: 8, 128>}]} {
    %c0_i32 = arith.constant 0 : i32
    %0 = arith.cmpi eq, %arg1, %c0_i32 : i32
    %1 = arith.extui %0 : i1 to i32
    %c0_i32_0 = arith.constant 0 : i32
    %2 = arith.cmpi ne, %1, %c0_i32_0 : i32
    scf.if %2 {
      %cst_15 = arith.constant 0.000000e+00 : f32
      %20 = vector.broadcast %cst_15 : f32 to vector<8x128xf32>
      %c0_16 = arith.constant 0 : index
      %c0_17 = arith.constant 0 : index
      %21 = vector.load %arg6[%c0_16, %c0_17] : memref<8x128xf32, #tpu.memory_space<vmem>>, vector<8x128xf32>
      tpu.vector_store %arg6[%c0_16, %c0_17], %20 {strides = array<i32>} : memref<8x128xf32, #tpu.memory_space<vmem>>, vector<8x128xf32>,
    } else {
    }
    %c0 = arith.constant 0 : index
    %c0_1 = arith.constant 0 : index
    %c0_2 = arith.constant 0 : index
    %3 = vector.load %arg2[%c0, %c0_1, %c0_2] : memref<8x256x27xbf16, #tpu.memory_space<vmem>>, vector<8x256x27xbf16>
    %4 = vector.shape_cast %3 : vector<8x256x27xbf16> to vector<2048x27xbf16>
    %c0_3 = arith.constant 0 : index
    %c0_4 = arith.constant 0 : index
    %5 = vector.load %arg3[%c0_3, %c0_4] : memref<27x128xbf16, #tpu.memory_space<vmem>>, vector<27x128xbf16>
    %cst = arith.constant dense<0.000000e+00> : vector<2048x128xf32>
    %6 = tpu.matmul %4, %5, %cst {dimension_numbers = #tpu.dot_dimension_numbers<[1], [0], [0], [1], [0, 0, 1, 1], [], []>} : vector<2048x27xbf16>, vector<27x128xbf16>, vector<2048x128xf32> -> vector<2048x128xf32>
    %c0_5 = arith.constant 0 : index
    %c0_6 = arith.constant 0 : index
    %7 = vector.load %arg4[%c0_5, %c0_6] : memref<1x128xf32, #tpu.memory_space<vmem>>, vector<1x128xf32>
    %8 = vector.broadcast %7 : vector<1x128xf32> to vector<2048x128xf32>
    %9 = arith.addf %6, %8 : vector<2048x128xf32>
    %cst_7 = arith.constant 0.000000e+00 : f32
    %10 = vector.broadcast %cst_7 : f32 to vector<2048x128xf32>
    %11 = arith.maximumf %9, %10 : vector<2048x128xf32>
    %c0_8 = arith.constant 0 : index
    %c0_9 = arith.constant 0 : index
    %12 = vector.load %arg6[%c0_8, %c0_9] : memref<8x128xf32, #tpu.memory_space<vmem>>, vector<8x128xf32>
    %13 = vector.shape_cast %11 : vector<2048x128xf32> to vector<8x256x128xf32>
    %cst_10 = arith.constant dense<0.000000e+00> : vector<8x128xf32>
    %14 = vector.multi_reduction <add>, %13, %cst_10 [1] : vector<8x256x128xf32> to vector<8x128xf32>
    %15 = arith.addf %12, %14 : vector<8x128xf32>
    %c0_11 = arith.constant 0 : index
    %c0_12 = arith.constant 0 : index
    %16 = vector.load %arg6[%c0_11, %c0_12] : memref<8x128xf32, #tpu.memory_space<vmem>>, vector<8x128xf32>
    tpu.vector_store %arg6[%c0_11, %c0_12], %15 {strides = array<i32>} : memref<8x128xf32, #tpu.memory_space<vmem>>, vector<8x128xf32>,
    %c0_i32_13 = arith.constant 0 : i32
    %17 = arith.cmpi eq, %arg1, %c0_i32_13 : i32
    %18 = arith.extui %17 : i1 to i32
    %c0_i32_14 = arith.constant 0 : i32
    %19 = arith.cmpi ne, %18, %c0_i32_14 : i32
    scf.if %19 {
      %c0_15 = arith.constant 0 : index
      %c0_16 = arith.constant 0 : index
      %20 = vector.load %arg6[%c0_15, %c0_16] : memref<8x128xf32, #tpu.memory_space<vmem>>, vector<8x128xf32>
      %cst_17 = arith.constant 3.906250e-03 : f32
      %21 = vector.broadcast %cst_17 : f32 to vector<8x128xf32>
      %22 = arith.mulf %20, %21 : vector<8x128xf32>
      %23 = arith.truncf %22 : vector<8x128xf32> to vector<8x128xbf16>
      %c0_18 = arith.constant 0 : index
      %c0_19 = arith.constant 0 : index
      %24 = vector.load %arg5[%c0_18, %c0_19] : memref<8x128xbf16, #tpu.memory_space<vmem>>, vector<8x128xbf16>
      tpu.vector_store %arg5[%c0_18, %c0_19], %23 {strides = array<i32>} : memref<8x128xbf16, #tpu.memory_space<vmem>>, vector<8x128xbf16>,
    } else {
    }
    return
  }
  func.func @transform_0(%arg0: i32, %arg1: i32) -> (i32, i32, i32) {
    %c0_i32 = arith.constant 0 : i32
    %c0_i32_0 = arith.constant 0 : i32
    return %arg0, %arg1, %c0_i32 : i32, i32, i32
  }
  func.func @transform_1(%arg0: i32, %arg1: i32) -> (i32, i32) {
    %c0_i32 = arith.constant 0 : i32
    %c0_i32_0 = arith.constant 0 : i32
    %c0_i32_1 = arith.constant 0 : i32
    return %c0_i32, %c0_i32_0 : i32, i32
  }
  func.func @transform_2(%arg0: i32, %arg1: i32) -> (i32, i32) {
    %c0_i32 = arith.constant 0 : i32
    %c0_i32_0 = arith.constant 0 : i32
    %c0_i32_1 = arith.constant 0 : i32
    return %c0_i32, %c0_i32_0 : i32, i32
  }
  func.func @transform_3(%arg0: i32, %arg1: i32) -> (i32, i32) {
    %c0_i32 = arith.constant 0 : i32
    %c0_i32_0 = arith.constant 0 : i32
    return %arg0, %c0_i32 : i32, i32
  }
}

module attributes {stable_mosaic.version = 11 : i64} {
  func.func @_fused_mlp_kernel(%arg0: i32, %arg1: memref<8x128xbf16, #tpu.memory_space<vmem>>, %arg2: memref<128x128xbf16, #tpu.memory_space<vmem>>, %arg3: memref<1x128xf32, #tpu.memory_space<vmem>>, %arg4: memref<128x128xbf16, #tpu.memory_space<vmem>>, %arg5: memref<1x128xf32, #tpu.memory_space<vmem>>, %arg6: memref<128x256xbf16, #tpu.memory_space<vmem>>, %arg7: memref<1x256xf32, #tpu.memory_space<vmem>>, %arg8: memref<256x128xbf16, #tpu.memory_space<vmem>>, %arg9: memref<1x128xf32, #tpu.memory_space<vmem>>, %arg10: memref<128x256xbf16, #tpu.memory_space<vmem>>, %arg11: memref<1x256xf32, #tpu.memory_space<vmem>>, %arg12: memref<8x256xf32, #tpu.memory_space<vmem>>, %arg13: memref<8x256xf32, #tpu.memory_space<vmem>>) attributes {dimension_semantics = [#tpu.dimension_semantics<parallel>], iteration_bounds = array<i64: 1>, scalar_prefetch = 0 : i64, scratch_operands = 0 : i64, tpu.core_type = #tpu.core_type<tc>, window_params = [{transform_indices = @transform_0, window_bounds = array<i64: 8, 128>}, {pipeline_mode = #tpu.pipeline_mode<synchronous>, transform_indices = @transform_1, window_bounds = array<i64: 128, 128>}, {pipeline_mode = #tpu.pipeline_mode<synchronous>, transform_indices = @transform_2, window_bounds = array<i64: 1, 128>}, {pipeline_mode = #tpu.pipeline_mode<synchronous>, transform_indices = @transform_3, window_bounds = array<i64: 128, 128>}, {pipeline_mode = #tpu.pipeline_mode<synchronous>, transform_indices = @transform_4, window_bounds = array<i64: 1, 128>}, {pipeline_mode = #tpu.pipeline_mode<synchronous>, transform_indices = @transform_5, window_bounds = array<i64: 128, 256>}, {pipeline_mode = #tpu.pipeline_mode<synchronous>, transform_indices = @transform_6, window_bounds = array<i64: 1, 256>}, {pipeline_mode = #tpu.pipeline_mode<synchronous>, transform_indices = @transform_7, window_bounds = array<i64: 256, 128>}, {pipeline_mode = #tpu.pipeline_mode<synchronous>, transform_indices = @transform_8, window_bounds = array<i64: 1, 128>}, {pipeline_mode = #tpu.pipeline_mode<synchronous>, transform_indices = @transform_9, window_bounds = array<i64: 128, 256>}, {pipeline_mode = #tpu.pipeline_mode<synchronous>, transform_indices = @transform_10, window_bounds = array<i64: 1, 256>}, {transform_indices = @transform_11, window_bounds = array<i64: 8, 256>}, {transform_indices = @transform_12, window_bounds = array<i64: 8, 256>}]} {
    %c0 = arith.constant 0 : index
    %c0_0 = arith.constant 0 : index
    %0 = vector.load %arg1[%c0, %c0_0] : memref<8x128xbf16, #tpu.memory_space<vmem>>, vector<8x128xbf16>
    %c0_1 = arith.constant 0 : index
    %c0_2 = arith.constant 0 : index
    %1 = vector.load %arg2[%c0_1, %c0_2] : memref<128x128xbf16, #tpu.memory_space<vmem>>, vector<128x128xbf16>
    %cst = arith.constant dense<0.000000e+00> : vector<8x128xf32>
    %2 = tpu.matmul %0, %1, %cst {dimension_numbers = #tpu.dot_dimension_numbers<[1], [0], [0], [1], [0, 0, 1, 1], [], []>} : vector<8x128xbf16>, vector<128x128xbf16>, vector<8x128xf32> -> vector<8x128xf32>
    %c0_3 = arith.constant 0 : index
    %c0_4 = arith.constant 0 : index
    %3 = vector.load %arg3[%c0_3, %c0_4] : memref<1x128xf32, #tpu.memory_space<vmem>>, vector<1x128xf32>
    %4 = vector.broadcast %3 : vector<1x128xf32> to vector<8x128xf32>
    %5 = arith.addf %2, %4 : vector<8x128xf32>
    %cst_5 = arith.constant 0.000000e+00 : f32
    %6 = vector.broadcast %cst_5 : f32 to vector<8x128xf32>
    %7 = arith.maximumf %5, %6 : vector<8x128xf32>
    %8 = arith.truncf %7 : vector<8x128xf32> to vector<8x128xbf16>
    %c0_6 = arith.constant 0 : index
    %c0_7 = arith.constant 0 : index
    %9 = vector.load %arg4[%c0_6, %c0_7] : memref<128x128xbf16, #tpu.memory_space<vmem>>, vector<128x128xbf16>
    %cst_8 = arith.constant dense<0.000000e+00> : vector<8x128xf32>
    %10 = tpu.matmul %8, %9, %cst_8 {dimension_numbers = #tpu.dot_dimension_numbers<[1], [0], [0], [1], [0, 0, 1, 1], [], []>} : vector<8x128xbf16>, vector<128x128xbf16>, vector<8x128xf32> -> vector<8x128xf32>
    %c0_9 = arith.constant 0 : index
    %c0_10 = arith.constant 0 : index
    %11 = vector.load %arg5[%c0_9, %c0_10] : memref<1x128xf32, #tpu.memory_space<vmem>>, vector<1x128xf32>
    %12 = vector.broadcast %11 : vector<1x128xf32> to vector<8x128xf32>
    %13 = arith.addf %10, %12 : vector<8x128xf32>
    %cst_11 = arith.constant 0.000000e+00 : f32
    %14 = vector.broadcast %cst_11 : f32 to vector<8x128xf32>
    %15 = arith.maximumf %13, %14 : vector<8x128xf32>
    %16 = arith.truncf %15 : vector<8x128xf32> to vector<8x128xbf16>
    %c0_12 = arith.constant 0 : index
    %c0_13 = arith.constant 0 : index
    %17 = vector.load %arg6[%c0_12, %c0_13] : memref<128x256xbf16, #tpu.memory_space<vmem>>, vector<128x256xbf16>
    %cst_14 = arith.constant dense<0.000000e+00> : vector<8x256xf32>
    %18 = tpu.matmul %16, %17, %cst_14 {dimension_numbers = #tpu.dot_dimension_numbers<[1], [0], [0], [1], [0, 0, 1, 1], [], []>} : vector<8x128xbf16>, vector<128x256xbf16>, vector<8x256xf32> -> vector<8x256xf32>
    %c0_15 = arith.constant 0 : index
    %c0_16 = arith.constant 0 : index
    %19 = vector.load %arg7[%c0_15, %c0_16] : memref<1x256xf32, #tpu.memory_space<vmem>>, vector<1x256xf32>
    %20 = vector.broadcast %19 : vector<1x256xf32> to vector<8x256xf32>
    %21 = arith.addf %18, %20 : vector<8x256xf32>
    %c0_17 = arith.constant 0 : index
    %c0_18 = arith.constant 0 : index
    %22 = vector.load %arg12[%c0_17, %c0_18] : memref<8x256xf32, #tpu.memory_space<vmem>>, vector<8x256xf32>
    tpu.vector_store %arg12[%c0_17, %c0_18], %21 {strides = array<i32>} : memref<8x256xf32, #tpu.memory_space<vmem>>, vector<8x256xf32>,
    %23 = arith.truncf %21 : vector<8x256xf32> to vector<8x256xbf16>
    %c0_19 = arith.constant 0 : index
    %c0_20 = arith.constant 0 : index
    %24 = vector.load %arg8[%c0_19, %c0_20] : memref<256x128xbf16, #tpu.memory_space<vmem>>, vector<256x128xbf16>
    %cst_21 = arith.constant dense<0.000000e+00> : vector<8x128xf32>
    %25 = tpu.matmul %23, %24, %cst_21 {dimension_numbers = #tpu.dot_dimension_numbers<[1], [0], [0], [1], [0, 0, 1, 1], [], []>} : vector<8x256xbf16>, vector<256x128xbf16>, vector<8x128xf32> -> vector<8x128xf32>
    %c0_22 = arith.constant 0 : index
    %c0_23 = arith.constant 0 : index
    %26 = vector.load %arg9[%c0_22, %c0_23] : memref<1x128xf32, #tpu.memory_space<vmem>>, vector<1x128xf32>
    %27 = vector.broadcast %26 : vector<1x128xf32> to vector<8x128xf32>
    %28 = arith.addf %25, %27 : vector<8x128xf32>
    %cst_24 = arith.constant 0.000000e+00 : f32
    %29 = vector.broadcast %cst_24 : f32 to vector<8x128xf32>
    %30 = arith.maximumf %28, %29 : vector<8x128xf32>
    %31 = arith.truncf %30 : vector<8x128xf32> to vector<8x128xbf16>
    %c0_25 = arith.constant 0 : index
    %c0_26 = arith.constant 0 : index
    %32 = vector.load %arg10[%c0_25, %c0_26] : memref<128x256xbf16, #tpu.memory_space<vmem>>, vector<128x256xbf16>
    %cst_27 = arith.constant dense<0.000000e+00> : vector<8x256xf32>
    %33 = tpu.matmul %31, %32, %cst_27 {dimension_numbers = #tpu.dot_dimension_numbers<[1], [0], [0], [1], [0, 0, 1, 1], [], []>} : vector<8x128xbf16>, vector<128x256xbf16>, vector<8x256xf32> -> vector<8x256xf32>
    %c0_28 = arith.constant 0 : index
    %c0_29 = arith.constant 0 : index
    %34 = vector.load %arg11[%c0_28, %c0_29] : memref<1x256xf32, #tpu.memory_space<vmem>>, vector<1x256xf32>
    %35 = vector.broadcast %34 : vector<1x256xf32> to vector<8x256xf32>
    %36 = arith.addf %33, %35 : vector<8x256xf32>
    %c0_30 = arith.constant 0 : index
    %c0_31 = arith.constant 0 : index
    %37 = vector.load %arg13[%c0_30, %c0_31] : memref<8x256xf32, #tpu.memory_space<vmem>>, vector<8x256xf32>
    tpu.vector_store %arg13[%c0_30, %c0_31], %36 {strides = array<i32>} : memref<8x256xf32, #tpu.memory_space<vmem>>, vector<8x256xf32>,
    return
  }
  func.func @transform_0(%arg0: i32) -> (i32, i32) {
    %c0_i32 = arith.constant 0 : i32
    %c0_i32_0 = arith.constant 0 : i32
    return %arg0, %c0_i32 : i32, i32
  }
  func.func @transform_1(%arg0: i32) -> (i32, i32) {
    %c0_i32 = arith.constant 0 : i32
    %c0_i32_0 = arith.constant 0 : i32
    %c0_i32_1 = arith.constant 0 : i32
    return %c0_i32, %c0_i32_0 : i32, i32
  }
  func.func @transform_2(%arg0: i32) -> (i32, i32) {
    %c0_i32 = arith.constant 0 : i32
    %c0_i32_0 = arith.constant 0 : i32
    %c0_i32_1 = arith.constant 0 : i32
    return %c0_i32, %c0_i32_0 : i32, i32
  }
  func.func @transform_3(%arg0: i32) -> (i32, i32) {
    %c0_i32 = arith.constant 0 : i32
    %c0_i32_0 = arith.constant 0 : i32
    %c0_i32_1 = arith.constant 0 : i32
    return %c0_i32, %c0_i32_0 : i32, i32
  }
  func.func @transform_4(%arg0: i32) -> (i32, i32) {
    %c0_i32 = arith.constant 0 : i32
    %c0_i32_0 = arith.constant 0 : i32
    %c0_i32_1 = arith.constant 0 : i32
    return %c0_i32, %c0_i32_0 : i32, i32
  }
  func.func @transform_5(%arg0: i32) -> (i32, i32) {
    %c0_i32 = arith.constant 0 : i32
    %c0_i32_0 = arith.constant 0 : i32
    %c0_i32_1 = arith.constant 0 : i32
    return %c0_i32, %c0_i32_0 : i32, i32
  }
  func.func @transform_6(%arg0: i32) -> (i32, i32) {
    %c0_i32 = arith.constant 0 : i32
    %c0_i32_0 = arith.constant 0 : i32
    %c0_i32_1 = arith.constant 0 : i32
    return %c0_i32, %c0_i32_0 : i32, i32
  }
  func.func @transform_7(%arg0: i32) -> (i32, i32) {
    %c0_i32 = arith.constant 0 : i32
    %c0_i32_0 = arith.constant 0 : i32
    %c0_i32_1 = arith.constant 0 : i32
    return %c0_i32, %c0_i32_0 : i32, i32
  }
  func.func @transform_8(%arg0: i32) -> (i32, i32) {
    %c0_i32 = arith.constant 0 : i32
    %c0_i32_0 = arith.constant 0 : i32
    %c0_i32_1 = arith.constant 0 : i32
    return %c0_i32, %c0_i32_0 : i32, i32
  }
  func.func @transform_9(%arg0: i32) -> (i32, i32) {
    %c0_i32 = arith.constant 0 : i32
    %c0_i32_0 = arith.constant 0 : i32
    %c0_i32_1 = arith.constant 0 : i32
    return %c0_i32, %c0_i32_0 : i32, i32
  }
  func.func @transform_10(%arg0: i32) -> (i32, i32) {
    %c0_i32 = arith.constant 0 : i32
    %c0_i32_0 = arith.constant 0 : i32
    %c0_i32_1 = arith.constant 0 : i32
    return %c0_i32, %c0_i32_0 : i32, i32
  }
  func.func @transform_11(%arg0: i32) -> (i32, i32) {
    %c0_i32 = arith.constant 0 : i32
    %c0_i32_0 = arith.constant 0 : i32
    return %arg0, %c0_i32 : i32, i32
  }
  func.func @transform_12(%arg0: i32) -> (i32, i32) {
    %c0_i32 = arith.constant 0 : i32
    %c0_i32_0 = arith.constant 0 : i32
    return %arg0, %c0_i32 : i32, i32
  }
}

</mosaic_0001>

<llo_original>
// kernel: _lambda_.3
$region0: #{_lambda_.3}
  #allocation0 [shape = 'u32[]', space=smem, size = 0x4, offset = 0x4, fixed_abs, tag = 'smem constant byte address 0x4 - core index']
  #allocation1 [shape = 'u32[144,128]{1,0:T(1,128)}', space=vmem, size = 0x12000, scoped, tag = 'internal scratch']
  %s0 = inlined_call_operand.vmem [shape: bf16[8,128], index: 0, kind: input, shape index: {}]
  %s1 = inlined_call_operand.vmem [shape: bf16[128,128], index: 1, kind: input, shape index: {}]
  %s2 = inlined_call_operand.vmem [shape: f32[1,128], index: 2, kind: input, shape index: {}, may-alias: {2,4,8}]
  %s3 = inlined_call_operand.vmem [shape: bf16[128,128], index: 3, kind: input, shape index: {}]
  %s4 = inlined_call_operand.vmem [shape: f32[1,128], index: 4, kind: input, shape index: {}, may-alias: {2,4,8}]
  %s5 = inlined_call_operand.vmem [shape: bf16[128,256], index: 5, kind: input, shape index: {}]
  %s6 = inlined_call_operand.vmem [shape: f32[1,256], index: 6, kind: input, shape index: {}]
  %s7 = inlined_call_operand.vmem [shape: bf16[256,128], index: 7, kind: input, shape index: {}]
  %s8 = inlined_call_operand.vmem [shape: f32[1,128], index: 8, kind: input, shape index: {}, may-alias: {2,4,8}]
  %s9 = inlined_call_operand.vmem [shape: bf16[128,256], index: 9, kind: input, shape index: {}]
  %s10 = inlined_call_operand.vmem [shape: f32[1,256], index: 10, kind: input, shape index: {}]
  %s11 = inlined_call_operand.vmem [shape: f32[8,256], index: 11, kind: output, shape index: {0}]
  %s12 = inlined_call_operand.vmem [shape: f32[8,256], index: 12, kind: output, shape index: {1}]
  %13 = xla_tuple %s11, %s12
  %s14 = sld [smem:[#allocation0]]
  $region62: #{_lambda_.3} parent=0
    _
  %s16 = ssub.s32 1, %s14
  %s17 = scalar_select 0, %s16, %s14
  // Predicated region
  $region2: #{_lambda_.3} parent=0 // pred_check
    _
  $region3: #{_lambda_.3} parent=0 // pred_check_branch
    %19 = sbr.rel (0) target = $region5
  $region4: #{_lambda_.3} parent=0 // pred_region
    _
  $region5: #{_lambda_.3} parent=0 // pred_fallthru
    _
  // Predicated region
  $region6: #{_lambda_.3} parent=0 // pred_check
    _
  $region7: #{_lambda_.3} parent=0 // pred_check_branch
    %21 = sbr.rel (0) target = $region9
  $region8: #{_lambda_.3} parent=0 // pred_region
    _
  $region9: #{_lambda_.3} parent=0 // pred_fallthru
    _
  // Predicated region
  $region10: #{_lambda_.3} parent=0 // pred_check
    _
  $region11: #{_lambda_.3} parent=0 // pred_check_branch
    %23 = sbr.rel (0) target = $region13
  $region12: #{_lambda_.3} parent=0 // pred_region
    _
  $region13: #{_lambda_.3} parent=0 // pred_fallthru
    _
  // Predicated region
  $region14: #{_lambda_.3} parent=0 // pred_check
    _
  $region15: #{_lambda_.3} parent=0 // pred_check_branch
    %25 = sbr.rel (0) target = $region17
  $region16: #{_lambda_.3} parent=0 // pred_region
    _
  $region17: #{_lambda_.3} parent=0 // pred_fallthru
    _
  // Predicated region
  $region18: #{_lambda_.3} parent=0 // pred_check
    _
  $region19: #{_lambda_.3} parent=0 // pred_check_branch
    %27 = sbr.rel (0) target = $region21
  $region20: #{_lambda_.3} parent=0 // pred_region
    _
  $region21: #{_lambda_.3} parent=0 // pred_fallthru
    _
  // Predicated region
  $region22: #{_lambda_.3} parent=0 // pred_check
    _
  $region23: #{_lambda_.3} parent=0 // pred_check_branch
    %29 = sbr.rel (0) target = $region25
  $region24: #{_lambda_.3} parent=0 // pred_region
    _
  $region25: #{_lambda_.3} parent=0 // pred_fallthru
    _
  // Predicated region
  $region26: #{_lambda_.3} parent=0 // pred_check
    _
  $region27: #{_lambda_.3} parent=0 // pred_check_branch
    %31 = sbr.rel (0) target = $region29
  $region28: #{_lambda_.3} parent=0 // pred_region
    _
  $region29: #{_lambda_.3} parent=0 // pred_fallthru
    _
  // Predicated region
  $region30: #{_lambda_.3} parent=0 // pred_check
    _
  $region31: #{_lambda_.3} parent=0 // pred_check_branch
    %33 = sbr.rel (0) target = $region33
  $region32: #{_lambda_.3} parent=0 // pred_region
    _
  $region33: #{_lambda_.3} parent=0 // pred_fallthru
    _
  // Predicated region
  $region34: #{_lambda_.3} parent=0 // pred_check
    _
  $region35: #{_lambda_.3} parent=0 // pred_check_branch
    %35 = sbr.rel (0) target = $region37
  $region36: #{_lambda_.3} parent=0 // pred_region
    _
  $region37: #{_lambda_.3} parent=0 // pred_fallthru
    _
  // Predicated region
  $region38: #{_lambda_.3} parent=0 // pred_check
    _
  $region39: #{_lambda_.3} parent=0 // pred_check_branch
    %37 = sbr.rel (0) target = $region41
  $region40: #{_lambda_.3} parent=0 // pred_region
    _
  $region41: #{_lambda_.3} parent=0 // pred_fallthru
    _
  // Predicated region
  $region42: #{_lambda_.3} parent=0 // pred_check
    _
  $region43: #{_lambda_.3} parent=0 // pred_check_branch
    %39 = sbr.rel (0) target = $region45
  $region44: #{_lambda_.3} parent=0 // pred_region
    _
  $region45: #{_lambda_.3} parent=0 // pred_fallthru
    _
  %v41 = vld [vmem:[%s0] sm:$0xf]
  %v42 = vld [vmem:[%s1] sm:$0xf]
  %v43 = vld [vmem:[%s1 + $0x4] sm:$0xf]
  %v44 = vld [vmem:[%s1 + $0x8] sm:$0xf]
  %v45 = vld [vmem:[%s1 + $0xc] sm:$0xf]
  %v46 = vld [vmem:[%s1 + $0x10] sm:$0xf]
  %v47 = vld [vmem:[%s1 + $0x14] sm:$0xf]
  %v48 = vld [vmem:[%s1 + $0x18] sm:$0xf]
  %v49 = vld [vmem:[%s1 + $0x1c] sm:$0xf]
  %v50 = vld [vmem:[%s1 + $0x20] sm:$0xf]
  %v51 = vld [vmem:[%s1 + $0x24] sm:$0xf]
  %v52 = vld [vmem:[%s1 + $0x28] sm:$0xf]
  %v53 = vld [vmem:[%s1 + $0x2c] sm:$0xf]
  %v54 = vld [vmem:[%s1 + $0x30] sm:$0xf]
  %v55 = vld [vmem:[%s1 + $0x34] sm:$0xf]
  %v56 = vld [vmem:[%s1 + $0x38] sm:$0xf]
  %v57 = vld [vmem:[%s1 + $0x3c] sm:$0xf]
  %v58 = vld [vmem:[%s2] sm:$0x1]
  %v60 = vlaneseq
  %v61 = vshrl.u32 %v60, 7
  %v62 = vsub.s32 0, %v61
  %v63 = vrot.slane %v58, %v62
  %v81 = vunpack.c.l.b16 %v42
  %v82 = vunpack.c.l.b16 %v43
  %v83 = vunpack.c.l.b16 %v44
  %v84 = vunpack.c.l.b16 %v45
  %v85 = vunpack.c.l.b16 %v46
  %v86 = vunpack.c.l.b16 %v47
  %v87 = vunpack.c.l.b16 %v48
  %v88 = vunpack.c.l.b16 %v49
  %v89 = vunpack.c.l.b16 %v50
  %v90 = vunpack.c.l.b16 %v51
  %v91 = vunpack.c.l.b16 %v52
  %v92 = vunpack.c.l.b16 %v53
  %v93 = vunpack.c.l.b16 %v54
  %v94 = vunpack.c.l.b16 %v55
  %v95 = vunpack.c.l.b16 %v56
  %v96 = vunpack.c.l.b16 %v57
  %v97 = vpack.c.b16 %v82, %v81
  %v98 = vpack.c.b16 %v84, %v83
  %v99 = vpack.c.b16 %v86, %v85
  %v100 = vpack.c.b16 %v88, %v87
  %v101 = vpack.c.b16 %v90, %v89
  %v102 = vpack.c.b16 %v92, %v91
  %v103 = vpack.c.b16 %v94, %v93
  %v104 = vpack.c.b16 %v96, %v95
  %113 = vmatprep.subr.bf16.mxu0 0
  %114 = vmatpush1.bf16.msra.mxu0 %v97
  %115 = vmatprep.subr.bf16.mxu0 0
  %116 = vmatpush1.bf16.msra.mxu0 %v98
  %117 = vmatprep.subr.bf16.mxu0 0
  %118 = vmatpush1.bf16.msra.mxu0 %v99
  %119 = vmatprep.subr.bf16.mxu0 0
  %120 = vmatpush1.bf16.msra.mxu0 %v100
  %121 = vmatprep.subr.bf16.mxu0 0
  %122 = vmatpush1.bf16.msra.mxu0 %v101
  %123 = vmatprep.subr.bf16.mxu0 0
  %124 = vmatpush1.bf16.msra.mxu0 %v102
  %125 = vmatprep.subr.bf16.mxu0 0
  %126 = vmatpush1.bf16.msra.mxu0 %v103
  %127 = vmatprep.subr.bf16.mxu0 0
  %128 = vmatpush1.bf16.msra.mxu0 %v104
  %129 = vmatprep.subr.bf16.mxu0 0
  %130 = vmatpush1.bf16.msra.mxu0 0
  %131 = vmatprep.subr.bf16.mxu0 0
  %132 = vmatpush1.bf16.msra.mxu0 0
  %133 = vmatprep.subr.bf16.mxu0 0
  %134 = vmatpush1.bf16.msra.mxu0 0
  %135 = vmatprep.subr.bf16.mxu0 0
  %136 = vmatpush1.bf16.msra.mxu0 0
  %137 = vmatprep.subr.bf16.mxu0 0
  %138 = vmatpush1.bf16.msra.mxu0 0
  %139 = vmatprep.subr.bf16.mxu0 0
  %140 = vmatpush1.bf16.msra.mxu0 0
  %141 = vmatprep.subr.bf16.mxu0 0
  %142 = vmatpush1.bf16.msra.mxu0 0
  %143 = vmatprep.subr.bf16.mxu0 0
  %144 = vmatpush1.bf16.msra.mxu0 0
  %145 = vmatprep.mubr.bf16.mxu0 0
  %146 = vmatmul.mubr.bf16.gmra.mrb[0].mxu0 %v41
  %v147 = vpop.f32.mrb[0].mxu0
  %v148 = vadd.f32 %v63, %v147
  %v149 = vpop.f32.mrb[0].mxu0
  %v150 = vpop.f32.mrb[0].mxu0
  %v151 = vpop.f32.mrb[0].mxu0
  %152 = vdwg.mxu0
  %v153 = vmax.f32 %v148, 0.0
  %v154 = vpack.c.bf16 %v153, %v153
  %v155 = vld [vmem:[%s3] sm:$0xf]
  %v156 = vld [vmem:[%s3 + $0x4] sm:$0xf]
  %v157 = vld [vmem:[%s3 + $0x8] sm:$0xf]
  %v158 = vld [vmem:[%s3 + $0xc] sm:$0xf]
  %v159 = vld [vmem:[%s3 + $0x10] sm:$0xf]
  %v160 = vld [vmem:[%s3 + $0x14] sm:$0xf]
  %v161 = vld [vmem:[%s3 + $0x18] sm:$0xf]
  %v162 = vld [vmem:[%s3 + $0x1c] sm:$0xf]
  %v163 = vld [vmem:[%s3 + $0x20] sm:$0xf]
  %v164 = vld [vmem:[%s3 + $0x24] sm:$0xf]
  %v165 = vld [vmem:[%s3 + $0x28] sm:$0xf]
  %v166 = vld [vmem:[%s3 + $0x2c] sm:$0xf]
  %v167 = vld [vmem:[%s3 + $0x30] sm:$0xf]
  %v168 = vld [vmem:[%s3 + $0x34] sm:$0xf]
  %v169 = vld [vmem:[%s3 + $0x38] sm:$0xf]
  %v170 = vld [vmem:[%s3 + $0x3c] sm:$0xf]
  %v171 = vld [vmem:[%s4] sm:$0x1]
  %v173 = vlaneseq
  %v174 = vshrl.u32 %v173, 7
  %v175 = vsub.s32 0, %v174
  %v176 = vrot.slane %v171, %v175
  %v194 = vunpack.c.l.b16 %v155
  %v195 = vunpack.c.l.b16 %v156
  %v196 = vunpack.c.l.b16 %v157
  %v197 = vunpack.c.l.b16 %v158
  %v198 = vunpack.c.l.b16 %v159
  %v199 = vunpack.c.l.b16 %v160
  %v200 = vunpack.c.l.b16 %v161
  %v201 = vunpack.c.l.b16 %v162
  %v202 = vunpack.c.l.b16 %v163
  %v203 = vunpack.c.l.b16 %v164
  %v204 = vunpack.c.l.b16 %v165
  %v205 = vunpack.c.l.b16 %v166
  %v206 = vunpack.c.l.b16 %v167
  %v207 = vunpack.c.l.b16 %v168
  %v208 = vunpack.c.l.b16 %v169
  %v209 = vunpack.c.l.b16 %v170
  %v210 = vpack.c.b16 %v195, %v194
  %v211 = vpack.c.b16 %v197, %v196
  %v212 = vpack.c.b16 %v199, %v198
  %v213 = vpack.c.b16 %v201, %v200
  %v214 = vpack.c.b16 %v203, %v202
  %v215 = vpack.c.b16 %v205, %v204
  %v216 = vpack.c.b16 %v207, %v206
  %v217 = vpack.c.b16 %v209, %v208
  %226 = vmatprep.subr.bf16.mxu0 0
  %227 = vmatpush1.bf16.msra.mxu0 %v210
  %228 = vmatprep.subr.bf16.mxu0 0
  %229 = vmatpush1.bf16.msra.mxu0 %v211
  %230 = vmatprep.subr.bf16.mxu0 0
  %231 = vmatpush1.bf16.msra.mxu0 %v212
  %232 = vmatprep.subr.bf16.mxu0 0
  %233 = vmatpush1.bf16.msra.mxu0 %v213
  %234 = vmatprep.subr.bf16.mxu0 0
  %235 = vmatpush1.bf16.msra.mxu0 %v214
  %236 = vmatprep.subr.bf16.mxu0 0
  %237 = vmatpush1.bf16.msra.mxu0 %v215
  %238 = vmatprep.subr.bf16.mxu0 0
  %239 = vmatpush1.bf16.msra.mxu0 %v216
  %240 = vmatprep.subr.bf16.mxu0 0
  %241 = vmatpush1.bf16.msra.mxu0 %v217
  %242 = vmatprep.subr.bf16.mxu0 0
  %243 = vmatpush1.bf16.msra.mxu0 0
  %244 = vmatprep.subr.bf16.mxu0 0
  %245 = vmatpush1.bf16.msra.mxu0 0
  %246 = vmatprep.subr.bf16.mxu0 0
  %247 = vmatpush1.bf16.msra.mxu0 0
  %248 = vmatprep.subr.bf16.mxu0 0
  %249 = vmatpush1.bf16.msra.mxu0 0
  %250 = vmatprep.subr.bf16.mxu0 0
  %251 = vmatpush1.bf16.msra.mxu0 0
  %252 = vmatprep.subr.bf16.mxu0 0
  %253 = vmatpush1.bf16.msra.mxu0 0
  %254 = vmatprep.subr.bf16.mxu0 0
  %255 = vmatpush1.bf16.msra.mxu0 0
  %256 = vmatprep.subr.bf16.mxu0 0
  %257 = vmatpush1.bf16.msra.mxu0 0
  %258 = vmatprep.mubr.bf16.mxu0 0
  %259 = vmatmul.mubr.bf16.gmra.mrb[0].mxu0 %v154
  %v260 = vpop.f32.mrb[0].mxu0
  %v261 = vadd.f32 %v176, %v260
  %v262 = vpop.f32.mrb[0].mxu0
  %v263 = vpop.f32.mrb[0].mxu0
  %v264 = vpop.f32.mrb[0].mxu0
  %265 = vdwg.mxu0
  %v266 = vmax.f32 %v261, 0.0
  %v267 = vpack.c.bf16 %v266, %v266
  %v268 = vld [vmem:[%s5] sm:$0xff]
  %v269 = vld [vmem:[%s5 + $0x8] sm:$0xff]
  %v270 = vld [vmem:[%s5 + $0x10] sm:$0xff]
  %v271 = vld [vmem:[%s5 + $0x18] sm:$0xff]
  %v272 = vld [vmem:[%s5 + $0x20] sm:$0xff]
  %v273 = vld [vmem:[%s5 + $0x28] sm:$0xff]
  %v274 = vld [vmem:[%s5 + $0x30] sm:$0xff]
  %v275 = vld [vmem:[%s5 + $0x38] sm:$0xff]
  %v276 = vld [vmem:[%s5 + $0x40] sm:$0xff]
  %v277 = vld [vmem:[%s5 + $0x48] sm:$0xff]
  %v278 = vld [vmem:[%s5 + $0x50] sm:$0xff]
  %v279 = vld [vmem:[%s5 + $0x58] sm:$0xff]
  %v280 = vld [vmem:[%s5 + $0x60] sm:$0xff]
  %v281 = vld [vmem:[%s5 + $0x68] sm:$0xff]
  %v282 = vld [vmem:[%s5 + $0x70] sm:$0xff]
  %v283 = vld [vmem:[%s5 + $0x78] sm:$0xff]
  %v284 = vld [vmem:[%s6] sm:$0x3]
  %v286 = vlaneseq
  %v287 = vshrl.u32 %v286, 7
  %v288 = vsub.s32 0, %v287
  %v289 = vrot.slane %v284, %v288
  %v290 = vlaneseq
  %v291 = vshrl.u32 %v290, 7
  %v292 = vsub.s32 1, %v291
  %v293 = vrot.slane %v284, %v292
  %v312 = vunpack.c.l.b16 %v268
  %v313 = vunpack.c.h.b16 %v268
  %v314 = vunpack.c.l.b16 %v269
  %v315 = vunpack.c.h.b16 %v269
  %v316 = vunpack.c.l.b16 %v270
  %v317 = vunpack.c.h.b16 %v270
  %v318 = vunpack.c.l.b16 %v271
  %v319 = vunpack.c.h.b16 %v271
  %v320 = vunpack.c.l.b16 %v272
  %v321 = vunpack.c.h.b16 %v272
  %v322 = vunpack.c.l.b16 %v273
  %v323 = vunpack.c.h.b16 %v273
  %v324 = vunpack.c.l.b16 %v274
  %v325 = vunpack.c.h.b16 %v274
  %v326 = vunpack.c.l.b16 %v275
  %v327 = vunpack.c.h.b16 %v275
  %v328 = vunpack.c.l.b16 %v276
  %v329 = vunpack.c.h.b16 %v276
  %v330 = vunpack.c.l.b16 %v277
  %v331 = vunpack.c.h.b16 %v277
  %v332 = vunpack.c.l.b16 %v278
  %v333 = vunpack.c.h.b16 %v278
  %v334 = vunpack.c.l.b16 %v279
  %v335 = vunpack.c.h.b16 %v279
  %v336 = vunpack.c.l.b16 %v280
  %v337 = vunpack.c.h.b16 %v280
  %v338 = vunpack.c.l.b16 %v281
  %v339 = vunpack.c.h.b16 %v281
  %v340 = vunpack.c.l.b16 %v282
  %v341 = vunpack.c.h.b16 %v282
  %v342 = vunpack.c.l.b16 %v283
  %v343 = vunpack.c.h.b16 %v283
  %v344 = vpack.c.b16 %v314, %v312
  %v345 = vpack.c.b16 %v315, %v313
  %v346 = vpack.c.b16 %v318, %v316
  %v347 = vpack.c.b16 %v319, %v317
  %v348 = vpack.c.b16 %v322, %v320
  %v349 = vpack.c.b16 %v323, %v321
  %v350 = vpack.c.b16 %v326, %v324
  %v351 = vpack.c.b16 %v327, %v325
  %v352 = vpack.c.b16 %v330, %v328
  %v353 = vpack.c.b16 %v331, %v329
  %v354 = vpack.c.b16 %v334, %v332
  %v355 = vpack.c.b16 %v335, %v333
  %v356 = vpack.c.b16 %v338, %v336
  %v357 = vpack.c.b16 %v339, %v337
  %v358 = vpack.c.b16 %v342, %v340
  %v359 = vpack.c.b16 %v343, %v341
  %376 = vmatprep.subr.bf16.mxu0 %v345
  %377 = vmatpush1.bf16.msra.mxu0 %v344
  %378 = vmatprep.subr.bf16.mxu0 %v347
  %379 = vmatpush1.bf16.msra.mxu0 %v346
  %380 = vmatprep.subr.bf16.mxu0 %v349
  %381 = vmatpush1.bf16.msra.mxu0 %v348
  %382 = vmatprep.subr.bf16.mxu0 %v351
  %383 = vmatpush1.bf16.msra.mxu0 %v350
  %384 = vmatprep.subr.bf16.mxu0 %v353
  %385 = vmatpush1.bf16.msra.mxu0 %v352
  %386 = vmatprep.subr.bf16.mxu0 %v355
  %387 = vmatpush1.bf16.msra.mxu0 %v354
  %388 = vmatprep.subr.bf16.mxu0 %v357
  %389 = vmatpush1.bf16.msra.mxu0 %v356
  %390 = vmatprep.subr.bf16.mxu0 %v359
  %391 = vmatpush1.bf16.msra.mxu0 %v358
  %392 = vmatprep.subr.bf16.mxu0 0
  %393 = vmatpush1.bf16.msra.mxu0 0
  %394 = vmatprep.subr.bf16.mxu0 0
  %395 = vmatpush1.bf16.msra.mxu0 0
  %396 = vmatprep.subr.bf16.mxu0 0
  %397 = vmatpush1.bf16.msra.mxu0 0
  %398 = vmatprep.subr.bf16.mxu0 0
  %399 = vmatpush1.bf16.msra.mxu0 0
  %400 = vmatprep.subr.bf16.mxu0 0
  %401 = vmatpush1.bf16.msra.mxu0 0
  %402 = vmatprep.subr.bf16.mxu0 0
  %403 = vmatpush1.bf16.msra.mxu0 0
  %404 = vmatprep.subr.bf16.mxu0 0
  %405 = vmatpush1.bf16.msra.mxu0 0
  %406 = vmatprep.subr.bf16.mxu0 0
  %407 = vmatpush1.bf16.msra.mxu0 0
  %408 = vmatprep.mubr.bf16.mxu0 0
  %409 = vmatmul.mubr.bf16.gmra.mrb[0].mxu0 %v267
  %v410 = vpop.f32.mrb[0].mxu0
  %v411 = vadd.f32 %v289, %v410
  %v412 = vpop.f32.mrb[0].mxu0
  %v413 = vadd.f32 %v293, %v412
  %v414 = vpop.f32.mrb[0].mxu0
  %v415 = vpop.f32.mrb[0].mxu0
  %416 = vdwg.mxu0
  %417 = vst [vmem:[%s11] sm:$0xff] %v411
  %418 = vst [vmem:[%s11 + $0x8] sm:$0xff] %v413
  %v419 = vpack.c.bf16 %v411, %v411
  %v420 = vpack.c.bf16 %v413, %v413
  %v421 = vld [vmem:[%s7] sm:$0xf]
  %v422 = vld [vmem:[%s7 + $0x4] sm:$0xf]
  %v423 = vld [vmem:[%s7 + $0x8] sm:$0xf]
  %v424 = vld [vmem:[%s7 + $0xc] sm:$0xf]
  %v425 = vld [vmem:[%s7 + $0x10] sm:$0xf]
  %v426 = vld [vmem:[%s7 + $0x14] sm:$0xf]
  %v427 = vld [vmem:[%s7 + $0x18] sm:$0xf]
  %v428 = vld [vmem:[%s7 + $0x1c] sm:$0xf]
  %v429 = vld [vmem:[%s7 + $0x20] sm:$0xf]
  %v430 = vld [vmem:[%s7 + $0x24] sm:$0xf]
  %v431 = vld [vmem:[%s7 + $0x28] sm:$0xf]
  %v432 = vld [vmem:[%s7 + $0x2c] sm:$0xf]
  %v433 = vld [vmem:[%s7 + $0x30] sm:$0xf]
  %v434 = vld [vmem:[%s7 + $0x34] sm:$0xf]
  %v435 = vld [vmem:[%s7 + $0x38] sm:$0xf]
  %v436 = vld [vmem:[%s7 + $0x3c] sm:$0xf]
  %v437 = vld [vmem:[%s7 + $0x40] sm:$0xf]
  %v438 = vld [vmem:[%s7 + $0x44] sm:$0xf]
  %v439 = vld [vmem:[%s7 + $0x48] sm:$0xf]
  %v440 = vld [vmem:[%s7 + $0x4c] sm:$0xf]
  %v441 = vld [vmem:[%s7 + $0x50] sm:$0xf]
  %v442 = vld [vmem:[%s7 + $0x54] sm:$0xf]
  %v443 = vld [vmem:[%s7 + $0x58] sm:$0xf]
  %v444 = vld [vmem:[%s7 + $0x5c] sm:$0xf]
  %v445 = vld [vmem:[%s7 + $0x60] sm:$0xf]
  %v446 = vld [vmem:[%s7 + $0x64] sm:$0xf]
  %v447 = vld [vmem:[%s7 + $0x68] sm:$0xf]
  %v448 = vld [vmem:[%s7 + $0x6c] sm:$0xf]
  %v449 = vld [vmem:[%s7 + $0x70] sm:$0xf]
  %v450 = vld [vmem:[%s7 + $0x74] sm:$0xf]
  %v451 = vld [vmem:[%s7 + $0x78] sm:$0xf]
  %v452 = vld [vmem:[%s7 + $0x7c] sm:$0xf]
  %v453 = vld [vmem:[%s8] sm:$0x1]
  %v455 = vlaneseq
  %v456 = vshrl.u32 %v455, 7
  %v457 = vsub.s32 0, %v456
  %v458 = vrot.slane %v453, %v457
  %v492 = vunpack.c.l.b16 %v421
  %v493 = vunpack.c.l.b16 %v422
  %v494 = vunpack.c.l.b16 %v423
  %v495 = vunpack.c.l.b16 %v424
  %v496 = vunpack.c.l.b16 %v425
  %v497 = vunpack.c.l.b16 %v426
  %v498 = vunpack.c.l.b16 %v427
  %v499 = vunpack.c.l.b16 %v428
  %v500 = vunpack.c.l.b16 %v429
  %v501 = vunpack.c.l.b16 %v430
  %v502 = vunpack.c.l.b16 %v431
  %v503 = vunpack.c.l.b16 %v432
  %v504 = vunpack.c.l.b16 %v433
  %v505 = vunpack.c.l.b16 %v434
  %v506 = vunpack.c.l.b16 %v435
  %v507 = vunpack.c.l.b16 %v436
  %v508 = vunpack.c.l.b16 %v437
  %v509 = vunpack.c.l.b16 %v438
  %v510 = vunpack.c.l.b16 %v439
  %v511 = vunpack.c.l.b16 %v440
  %v512 = vunpack.c.l.b16 %v441
  %v513 = vunpack.c.l.b16 %v442
  %v514 = vunpack.c.l.b16 %v443
  %v515 = vunpack.c.l.b16 %v444
  %v516 = vunpack.c.l.b16 %v445
  %v517 = vunpack.c.l.b16 %v446
  %v518 = vunpack.c.l.b16 %v447
  %v519 = vunpack.c.l.b16 %v448
  %v520 = vunpack.c.l.b16 %v449
  %v521 = vunpack.c.l.b16 %v450
  %v522 = vunpack.c.l.b16 %v451
  %v523 = vunpack.c.l.b16 %v452
  %v524 = vpack.c.b16 %v493, %v492
  %v525 = vpack.c.b16 %v495, %v494
  %v526 = vpack.c.b16 %v497, %v496
  %v527 = vpack.c.b16 %v499, %v498
  %v528 = vpack.c.b16 %v501, %v500
  %v529 = vpack.c.b16 %v503, %v502
  %v530 = vpack.c.b16 %v505, %v504
  %v531 = vpack.c.b16 %v507, %v506
  %v532 = vpack.c.b16 %v509, %v508
  %v533 = vpack.c.b16 %v511, %v510
  %v534 = vpack.c.b16 %v513, %v512
  %v535 = vpack.c.b16 %v515, %v514
  %v536 = vpack.c.b16 %v517, %v516
  %v537 = vpack.c.b16 %v519, %v518
  %v538 = vpack.c.b16 %v521, %v520
  %v539 = vpack.c.b16 %v523, %v522
  %556 = vmatprep.subr.bf16.mxu0 0
  %557 = vmatpush1.bf16.msra.mxu0 %v524
  %558 = vmatprep.subr.bf16.mxu0 0
  %559 = vmatpush1.bf16.msra.mxu0 %v525
  %560 = vmatprep.subr.bf16.mxu0 0
  %561 = vmatpush1.bf16.msra.mxu0 %v526
  %562 = vmatprep.subr.bf16.mxu0 0
  %563 = vmatpush1.bf16.msra.mxu0 %v527
  %564 = vmatprep.subr.bf16.mxu0 0
  %565 = vmatpush1.bf16.msra.mxu0 %v528
  %566 = vmatprep.subr.bf16.mxu0 0
  %567 = vmatpush1.bf16.msra.mxu0 %v529
  %568 = vmatprep.subr.bf16.mxu0 0
  %569 = vmatpush1.bf16.msra.mxu0 %v530
  %570 = vmatprep.subr.bf16.mxu0 0
  %571 = vmatpush1.bf16.msra.mxu0 %v531
  %572 = vmatprep.subr.bf16.mxu0 0
  %573 = vmatpush1.bf16.msra.mxu0 %v532
  %574 = vmatprep.subr.bf16.mxu0 0
  %575 = vmatpush1.bf16.msra.mxu0 %v533
  %576 = vmatprep.subr.bf16.mxu0 0
  %577 = vmatpush1.bf16.msra.mxu0 %v534
  %578 = vmatprep.subr.bf16.mxu0 0
  %579 = vmatpush1.bf16.msra.mxu0 %v535
  %580 = vmatprep.subr.bf16.mxu0 0
  %581 = vmatpush1.bf16.msra.mxu0 %v536
  %582 = vmatprep.subr.bf16.mxu0 0
  %583 = vmatpush1.bf16.msra.mxu0 %v537
  %584 = vmatprep.subr.bf16.mxu0 0
  %585 = vmatpush1.bf16.msra.mxu0 %v538
  %586 = vmatprep.subr.bf16.mxu0 0
  %587 = vmatpush1.bf16.msra.mxu0 %v539
  %588 = vmatprep.mubr.bf16.mxu0 %v420
  %589 = vmatmul.mubr.bf16.gmra.mrb[0].mxu0 %v419
  %v590 = vpop.f32.mrb[0].mxu0
  %v591 = vadd.f32 %v458, %v590
  %v592 = vpop.f32.mrb[0].mxu0
  %v593 = vpop.f32.mrb[0].mxu0
  %v594 = vpop.f32.mrb[0].mxu0
  %595 = vdwg.mxu0
  %v596 = vmax.f32 %v591, 0.0
  %v597 = vpack.c.bf16 %v596, %v596
  %v598 = vld [vmem:[%s9] sm:$0xff]
  %v599 = vld [vmem:[%s9 + $0x8] sm:$0xff]
  %v600 = vld [vmem:[%s9 + $0x10] sm:$0xff]
  %v601 = vld [vmem:[%s9 + $0x18] sm:$0xff]
  %v602 = vld [vmem:[%s9 + $0x20] sm:$0xff]
  %v603 = vld [vmem:[%s9 + $0x28] sm:$0xff]
  %v604 = vld [vmem:[%s9 + $0x30] sm:$0xff]
  %v605 = vld [vmem:[%s9 + $0x38] sm:$0xff]
  %v606 = vld [vmem:[%s9 + $0x40] sm:$0xff]
  %v607 = vld [vmem:[%s9 + $0x48] sm:$0xff]
  %v608 = vld [vmem:[%s9 + $0x50] sm:$0xff]
  %v609 = vld [vmem:[%s9 + $0x58] sm:$0xff]
  %v610 = vld [vmem:[%s9 + $0x60] sm:$0xff]
  %v611 = vld [vmem:[%s9 + $0x68] sm:$0xff]
  %v612 = vld [vmem:[%s9 + $0x70] sm:$0xff]
  %v613 = vld [vmem:[%s9 + $0x78] sm:$0xff]
  %v614 = vld [vmem:[%s10] sm:$0x3]
  %v616 = vlaneseq
  %v617 = vshrl.u32 %v616, 7
  %v618 = vsub.s32 0, %v617
  %v619 = vrot.slane %v614, %v618
  %v620 = vlaneseq
  %v621 = vshrl.u32 %v620, 7
  %v622 = vsub.s32 1, %v621
  %v623 = vrot.slane %v614, %v622
  %v642 = vunpack.c.l.b16 %v598
  %v643 = vunpack.c.h.b16 %v598
  %v644 = vunpack.c.l.b16 %v599
  %v645 = vunpack.c.h.b16 %v599
  %v646 = vunpack.c.l.b16 %v600
  %v647 = vunpack.c.h.b16 %v600
  %v648 = vunpack.c.l.b16 %v601
  %v649 = vunpack.c.h.b16 %v601
  %v650 = vunpack.c.l.b16 %v602
  %v651 = vunpack.c.h.b16 %v602
  %v652 = vunpack.c.l.b16 %v603
  %v653 = vunpack.c.h.b16 %v603
  %v654 = vunpack.c.l.b16 %v604
  %v655 = vunpack.c.h.b16 %v604
  %v656 = vunpack.c.l.b16 %v605
  %v657 = vunpack.c.h.b16 %v605
  %v658 = vunpack.c.l.b16 %v606
  %v659 = vunpack.c.h.b16 %v606
  %v660 = vunpack.c.l.b16 %v607
  %v661 = vunpack.c.h.b16 %v607
  %v662 = vunpack.c.l.b16 %v608
  %v663 = vunpack.c.h.b16 %v608
  %v664 = vunpack.c.l.b16 %v609
  %v665 = vunpack.c.h.b16 %v609
  %v666 = vunpack.c.l.b16 %v610
  %v667 = vunpack.c.h.b16 %v610
  %v668 = vunpack.c.l.b16 %v611
  %v669 = vunpack.c.h.b16 %v611
  %v670 = vunpack.c.l.b16 %v612
  %v671 = vunpack.c.h.b16 %v612
  %v672 = vunpack.c.l.b16 %v613
  %v673 = vunpack.c.h.b16 %v613
  %v674 = vpack.c.b16 %v644, %v642
  %v675 = vpack.c.b16 %v645, %v643
  %v676 = vpack.c.b16 %v648, %v646
  %v677 = vpack.c.b16 %v649, %v647
  %v678 = vpack.c.b16 %v652, %v650
  %v679 = vpack.c.b16 %v653, %v651
  %v680 = vpack.c.b16 %v656, %v654
  %v681 = vpack.c.b16 %v657, %v655
  %v682 = vpack.c.b16 %v660, %v658
  %v683 = vpack.c.b16 %v661, %v659
  %v684 = vpack.c.b16 %v664, %v662
  %v685 = vpack.c.b16 %v665, %v663
  %v686 = vpack.c.b16 %v668, %v666
  %v687 = vpack.c.b16 %v669, %v667
  %v688 = vpack.c.b16 %v672, %v670
  %v689 = vpack.c.b16 %v673, %v671
  %706 = vmatprep.subr.bf16.mxu0 %v675
  %707 = vmatpush1.bf16.msra.mxu0 %v674
  %708 = vmatprep.subr.bf16.mxu0 %v677
  %709 = vmatpush1.bf16.msra.mxu0 %v676
  %710 = vmatprep.subr.bf16.mxu0 %v679
  %711 = vmatpush1.bf16.msra.mxu0 %v678
  %712 = vmatprep.subr.bf16.mxu0 %v681
  %713 = vmatpush1.bf16.msra.mxu0 %v680
  %714 = vmatprep.subr.bf16.mxu0 %v683
  %715 = vmatpush1.bf16.msra.mxu0 %v682
  %716 = vmatprep.subr.bf16.mxu0 %v685
  %717 = vmatpush1.bf16.msra.mxu0 %v684
  %718 = vmatprep.subr.bf16.mxu0 %v687
  %719 = vmatpush1.bf16.msra.mxu0 %v686
  %720 = vmatprep.subr.bf16.mxu0 %v689
  %721 = vmatpush1.bf16.msra.mxu0 %v688
  %722 = vmatprep.subr.bf16.mxu0 0
  %723 = vmatpush1.bf16.msra.mxu0 0
  %724 = vmatprep.subr.bf16.mxu0 0
  %725 = vmatpush1.bf16.msra.mxu0 0
  %726 = vmatprep.subr.bf16.mxu0 0
  %727 = vmatpush1.bf16.msra.mxu0 0
  %728 = vmatprep.subr.bf16.mxu0 0
  %729 = vmatpush1.bf16.msra.mxu0 0
  %730 = vmatprep.subr.bf16.mxu0 0
  %731 = vmatpush1.bf16.msra.mxu0 0
  %732 = vmatprep.subr.bf16.mxu0 0
  %733 = vmatpush1.bf16.msra.mxu0 0
  %734 = vmatprep.subr.bf16.mxu0 0
  %735 = vmatpush1.bf16.msra.mxu0 0
  %736 = vmatprep.subr.bf16.mxu0 0
  %737 = vmatpush1.bf16.msra.mxu0 0
  %738 = vmatprep.mubr.bf16.mxu0 0
  %739 = vmatmul.mubr.bf16.gmra.mrb[0].mxu0 %v597
  %v740 = vpop.f32.mrb[0].mxu0
  %v741 = vadd.f32 %v619, %v740
  %v742 = vpop.f32.mrb[0].mxu0
  %v743 = vadd.f32 %v623, %v742
  %v744 = vpop.f32.mrb[0].mxu0
  %v745 = vpop.f32.mrb[0].mxu0
  %746 = vdwg.mxu0
  %747 = vst [vmem:[%s12] sm:$0xff] %v741
  %748 = vst [vmem:[%s12 + $0x8] sm:$0xff] %v743
  // Predicated region
  $region46: #{_lambda_.3} parent=0 // pred_check
    _
  $region47: #{_lambda_.3} parent=0 // pred_check_branch
    %750 = sbr.rel (0) target = $region49
  $region48: #{_lambda_.3} parent=0 // pred_region
    _
  $region49: #{_lambda_.3} parent=0 // pred_fallthru
    _
  // Predicated region
  $region50: #{_lambda_.3} parent=0 // pred_check
    _
  $region51: #{_lambda_.3} parent=0 // pred_check_branch
    %752 = sbr.rel (0) target = $region53
  $region52: #{_lambda_.3} parent=0 // pred_region
    _
  $region53: #{_lambda_.3} parent=0 // pred_fallthru
    _
  // Predicated region
  $region54: #{_lambda_.3} parent=0 // pred_check
    _
  $region55: #{_lambda_.3} parent=0 // pred_check_branch
    %754 = sbr.rel (0) target = $region57
  $region56: #{_lambda_.3} parent=0 // pred_region
    _
  $region57: #{_lambda_.3} parent=0 // pred_fallthru
    _
  // Predicated region
  $region58: #{_lambda_.3} parent=0 // pred_check
    _
  $region59: #{_lambda_.3} parent=0 // pred_check_branch
    %756 = sbr.rel (0) target = $region61
  $region60: #{_lambda_.3} parent=0 // pred_region
    _
  $region61: #{_lambda_.3} parent=0 // pred_fallthru
    _

// kernel: _lambda_.2
$region0: #{_lambda_.2}
  #allocation0 [shape = 'u32[]', space=smem, size = 0x4, offset = 0x4, fixed_abs, tag = 'smem constant byte address 0x4 - core index']
  #allocation1 [shape = 'u32[144,128]{1,0:T(1,128)}', space=vmem, size = 0x12000, scoped, tag = 'internal scratch']
  #allocation2 [shape = 'f32[8,128]{1,0:T(8,128)}', space=vmem, size = 0x1000, scoped, tag = 'scratch operand']
  %s0 = inlined_call_operand.vmem [shape: bf16[8,256,27], index: 0, kind: input, shape index: {}]
  %s1 = inlined_call_operand.vmem [shape: bf16[27,128], index: 1, kind: input, shape index: {}]
  %s2 = inlined_call_operand.vmem [shape: f32[1,128], index: 2, kind: input, shape index: {}]
  %s3 = inlined_call_operand.vmem [shape: bf16[8,128], index: 3, kind: output, shape index: {}]
  %s4 = sld [smem:[#allocation0]]
  $region30: #{_lambda_.2} parent=0
    _
  %s6 = ssub.s32 1, %s4
  %s7 = scalar_select 0, %s6, %s4
  // Predicated region
  $region2: #{_lambda_.2} parent=0 // pred_check
    _
  $region3: #{_lambda_.2} parent=0 // pred_check_branch
    %9 = sbr.rel (0) target = $region5
  $region4: #{_lambda_.2} parent=0 // pred_region
    _
  $region5: #{_lambda_.2} parent=0 // pred_fallthru
    _
  // Predicated region
  $region6: #{_lambda_.2} parent=0 // pred_check
    _
  $region7: #{_lambda_.2} parent=0 // pred_check_branch
    %11 = sbr.rel (0) target = $region9
  $region8: #{_lambda_.2} parent=0 // pred_region
    _
  $region9: #{_lambda_.2} parent=0 // pred_fallthru
    _
  // Predicated region
  $region10: #{_lambda_.2} parent=0 // pred_check
    _
  $region11: #{_lambda_.2} parent=0 // pred_check_branch
    %13 = sbr.rel (0) target = $region13
  $region12: #{_lambda_.2} parent=0 // pred_region
    _
  $region13: #{_lambda_.2} parent=0 // pred_fallthru
    _
  %p15 = scmp.eq.s32.totalorder 0, 0
  // Predicated region
  $region14: #{_lambda_.2} parent=0 // pred_check
    %p16 = pneg %p15
  $region15: #{_lambda_.2} parent=0 // pred_check_branch
    %18 = sbr.rel (%p16) target = $region17
  $region16: #{_lambda_.2} parent=0 // pred_region
    %19 = vst [vmem:[#allocation2] sm:$0xff] 0.0
  $region17: #{_lambda_.2} parent=0 // pred_fallthru
    _
  %v20 = vld [vmem:[%s0] sm:$0xf]
  %v21 = vld [vmem:[%s0 + $0x4] sm:$0xf]
  %v22 = vld [vmem:[%s0 + $0x8] sm:$0xf]
  %v23 = vld [vmem:[%s0 + $0xc] sm:$0xf]
  %v24 = vld [vmem:[%s0 + $0x10] sm:$0xf]
  %v25 = vld [vmem:[%s0 + $0x14] sm:$0xf]
  %v26 = vld [vmem:[%s0 + $0x18] sm:$0xf]
  %v27 = vld [vmem:[%s0 + $0x1c] sm:$0xf]
  %v28 = vld [vmem:[%s0 + $0x20] sm:$0xf]
  %v29 = vld [vmem:[%s0 + $0x24] sm:$0xf]
  %v30 = vld [vmem:[%s0 + $0x28] sm:$0xf]
  %v31 = vld [vmem:[%s0 + $0x2c] sm:$0xf]
  %v32 = vld [vmem:[%s0 + $0x30] sm:$0xf]
  %v33 = vld [vmem:[%s0 + $0x34] sm:$0xf]
  %v34 = vld [vmem:[%s0 + $0x38] sm:$0xf]
  %v35 = vld [vmem:[%s0 + $0x3c] sm:$0xf]
  %v36 = vld [vmem:[%s0 + $0x40] sm:$0xf]
  %v37 = vld [vmem:[%s0 + $0x44] sm:$0xf]
  %v38 = vld [vmem:[%s0 + $0x48] sm:$0xf]
  %v39 = vld [vmem:[%s0 + $0x4c] sm:$0xf]
  %v40 = vld [vmem:[%s0 + $0x50] sm:$0xf]
  %v41 = vld [vmem:[%s0 + $0x54] sm:$0xf]
  %v42 = vld [vmem:[%s0 + $0x58] sm:$0xf]
  %v43 = vld [vmem:[%s0 + $0x5c] sm:$0xf]
  %v44 = vld [vmem:[%s0 + $0x60] sm:$0xf]
  %v45 = vld [vmem:[%s0 + $0x64] sm:$0xf]
  %v46 = vld [vmem:[%s0 + $0x68] sm:$0xf]
  %v47 = vld [vmem:[%s0 + $0x6c] sm:$0xf]
  %v48 = vld [vmem:[%s0 + $0x70] sm:$0xf]
  %v49 = vld [vmem:[%s0 + $0x74] sm:$0xf]
  %v50 = vld [vmem:[%s0 + $0x78] sm:$0xf]
  %v51 = vld [vmem:[%s0 + $0x7c] sm:$0xf]
  %v52 = vld [vmem:[%s0 + $0x80] sm:$0xf]
  %v53 = vld [vmem:[%s0 + $0x84] sm:$0xf]
  %v54 = vld [vmem:[%s0 + $0x88] sm:$0xf]
  %v55 = vld [vmem:[%s0 + $0x8c] sm:$0xf]
  %v56 = vld [vmem:[%s0 + $0x90] sm:$0xf]
  %v57 = vld [vmem:[%s0 + $0x94] sm:$0xf]
  %v58 = vld [vmem:[%s0 + $0x98] sm:$0xf]
  %v59 = vld [vmem:[%s0 + $0x9c] sm:$0xf]
  %v60 = vld [vmem:[%s0 + $0xa0] sm:$0xf]
  %v61 = vld [vmem:[%s0 + $0xa4] sm:$0xf]
  %v62 = vld [vmem:[%s0 + $0xa8] sm:$0xf]
  %v63 = vld [vmem:[%s0 + $0xac] sm:$0xf]
  %v64 = vld [vmem:[%s0 + $0xb0] sm:$0xf]
  %v65 = vld [vmem:[%s0 + $0xb4] sm:$0xf]
  %v66 = vld [vmem:[%s0 + $0xb8] sm:$0xf]
  %v67 = vld [vmem:[%s0 + $0xbc] sm:$0xf]
  %v68 = vld [vmem:[%s0 + $0xc0] sm:$0xf]
  %v69 = vld [vmem:[%s0 + $0xc4] sm:$0xf]
  %v70 = vld [vmem:[%s0 + $0xc8] sm:$0xf]
  %v71 = vld [vmem:[%s0 + $0xcc] sm:$0xf]
  %v72 = vld [vmem:[%s0 + $0xd0] sm:$0xf]
  %v73 = vld [vmem:[%s0 + $0xd4] sm:$0xf]
  %v74 = vld [vmem:[%s0 + $0xd8] sm:$0xf]
  %v75 = vld [vmem:[%s0 + $0xdc] sm:$0xf]
  %v76 = vld [vmem:[%s0 + $0xe0] sm:$0xf]
  %v77 = vld [vmem:[%s0 + $0xe4] sm:$0xf]
  %v78 = vld [vmem:[%s0 + $0xe8] sm:$0xf]
  %v79 = vld [vmem:[%s0 + $0xec] sm:$0xf]
  %v80 = vld [vmem:[%s0 + $0xf0] sm:$0xf]
  %v81 = vld [vmem:[%s0 + $0xf4] sm:$0xf]
  %v82 = vld [vmem:[%s0 + $0xf8] sm:$0xf]
  %v83 = vld [vmem:[%s0 + $0xfc] sm:$0xf]
  %v84 = vld [vmem:[%s0 + $0x100] sm:$0xf]
  %v85 = vld [vmem:[%s0 + $0x104] sm:$0xf]
  %v86 = vld [vmem:[%s0 + $0x108] sm:$0xf]
  %v87 = vld [vmem:[%s0 + $0x10c] sm:$0xf]
  %v88 = vld [vmem:[%s0 + $0x110] sm:$0xf]
  %v89 = vld [vmem:[%s0 + $0x114] sm:$0xf]
  %v90 = vld [vmem:[%s0 + $0x118] sm:$0xf]
  %v91 = vld [vmem:[%s0 + $0x11c] sm:$0xf]
  %v92 = vld [vmem:[%s0 + $0x120] sm:$0xf]
  %v93 = vld [vmem:[%s0 + $0x124] sm:$0xf]
  %v94 = vld [vmem:[%s0 + $0x128] sm:$0xf]
  %v95 = vld [vmem:[%s0 + $0x12c] sm:$0xf]
  %v96 = vld [vmem:[%s0 + $0x130] sm:$0xf]
  %v97 = vld [vmem:[%s0 + $0x134] sm:$0xf]
  %v98 = vld [vmem:[%s0 + $0x138] sm:$0xf]
  %v99 = vld [vmem:[%s0 + $0x13c] sm:$0xf]
  %v100 = vld [vmem:[%s0 + $0x140] sm:$0xf]
  %v101 = vld [vmem:[%s0 + $0x144] sm:$0xf]
  %v102 = vld [vmem:[%s0 + $0x148] sm:$0xf]
  %v103 = vld [vmem:[%s0 + $0x14c] sm:$0xf]
  %v104 = vld [vmem:[%s0 + $0x150] sm:$0xf]
  %v105 = vld [vmem:[%s0 + $0x154] sm:$0xf]
  %v106 = vld [vmem:[%s0 + $0x158] sm:$0xf]
  %v107 = vld [vmem:[%s0 + $0x15c] sm:$0xf]
  %v108 = vld [vmem:[%s0 + $0x160] sm:$0xf]
  %v109 = vld [vmem:[%s0 + $0x164] sm:$0xf]
  %v110 = vld [vmem:[%s0 + $0x168] sm:$0xf]
  %v111 = vld [vmem:[%s0 + $0x16c] sm:$0xf]
  %v112 = vld [vmem:[%s0 + $0x170] sm:$0xf]
  %v113 = vld [vmem:[%s0 + $0x174] sm:$0xf]
  %v114 = vld [vmem:[%s0 + $0x178] sm:$0xf]
  %v115 = vld [vmem:[%s0 + $0x17c] sm:$0xf]
  %v116 = vld [vmem:[%s0 + $0x180] sm:$0xf]
  %v117 = vld [vmem:[%s0 + $0x184] sm:$0xf]
  %v118 = vld [vmem:[%s0 + $0x188] sm:$0xf]
  %v119 = vld [vmem:[%s0 + $0x18c] sm:$0xf]
  %v120 = vld [vmem:[%s0 + $0x190] sm:$0xf]
  %v121 = vld [vmem:[%s0 + $0x194] sm:$0xf]
  %v122 = vld [vmem:[%s0 + $0x198] sm:$0xf]
  %v123 = vld [vmem:[%s0 + $0x19c] sm:$0xf]
  %v124 = vld [vmem:[%s0 + $0x1a0] sm:$0xf]
  %v125 = vld [vmem:[%s0 + $0x1a4] sm:$0xf]
  %v126 = vld [vmem:[%s0 + $0x1a8] sm:$0xf]
  %v127 = vld [vmem:[%s0 + $0x1ac] sm:$0xf]
  %v128 = vld [vmem:[%s0 + $0x1b0] sm:$0xf]
  %v129 = vld [vmem:[%s0 + $0x1b4] sm:$0xf]
  %v130 = vld [vmem:[%s0 + $0x1b8] sm:$0xf]
  %v131 = vld [vmem:[%s0 + $0x1bc] sm:$0xf]
  %v132 = vld [vmem:[%s0 + $0x1c0] sm:$0xf]
  %v133 = vld [vmem:[%s0 + $0x1c4] sm:$0xf]
  %v134 = vld [vmem:[%s0 + $0x1c8] sm:$0xf]
  %v135 = vld [vmem:[%s0 + $0x1cc] sm:$0xf]
  %v136 = vld [vmem:[%s0 + $0x1d0] sm:$0xf]
  %v137 = vld [vmem:[%s0 + $0x1d4] sm:$0xf]
  %v138 = vld [vmem:[%s0 + $0x1d8] sm:$0xf]
  %v139 = vld [vmem:[%s0 + $0x1dc] sm:$0xf]
  %v140 = vld [vmem:[%s0 + $0x1e0] sm:$0xf]
  %v141 = vld [vmem:[%s0 + $0x1e4] sm:$0xf]
  %v142 = vld [vmem:[%s0 + $0x1e8] sm:$0xf]
  %v143 = vld [vmem:[%s0 + $0x1ec] sm:$0xf]
  %v144 = vld [vmem:[%s0 + $0x1f0] sm:$0xf]
  %v145 = vld [vmem:[%s0 + $0x1f4] sm:$0xf]
  %v146 = vld [vmem:[%s0 + $0x1f8] sm:$0xf]
  %v147 = vld [vmem:[%s0 + $0x1fc] sm:$0xf]
  %v148 = vld [vmem:[%s0 + $0x200] sm:$0xf]
  %v149 = vld [vmem:[%s0 + $0x204] sm:$0xf]
  %v150 = vld [vmem:[%s0 + $0x208] sm:$0xf]
  %v151 = vld [vmem:[%s0 + $0x20c] sm:$0xf]
  %v152 = vld [vmem:[%s0 + $0x210] sm:$0xf]
  %v153 = vld [vmem:[%s0 + $0x214] sm:$0xf]
  %v154 = vld [vmem:[%s0 + $0x218] sm:$0xf]
  %v155 = vld [vmem:[%s0 + $0x21c] sm:$0xf]
  %v156 = vld [vmem:[%s0 + $0x220] sm:$0xf]
  %v157 = vld [vmem:[%s0 + $0x224] sm:$0xf]
  %v158 = vld [vmem:[%s0 + $0x228] sm:$0xf]
  %v159 = vld [vmem:[%s0 + $0x22c] sm:$0xf]
  %v160 = vld [vmem:[%s0 + $0x230] sm:$0xf]
  %v161 = vld [vmem:[%s0 + $0x234] sm:$0xf]
  %v162 = vld [vmem:[%s0 + $0x238] sm:$0xf]
  %v163 = vld [vmem:[%s0 + $0x23c] sm:$0xf]
  %v164 = vld [vmem:[%s0 + $0x240] sm:$0xf]
  %v165 = vld [vmem:[%s0 + $0x244] sm:$0xf]
  %v166 = vld [vmem:[%s0 + $0x248] sm:$0xf]
  %v167 = vld [vmem:[%s0 + $0x24c] sm:$0xf]
  %v168 = vld [vmem:[%s0 + $0x250] sm:$0xf]
  %v169 = vld [vmem:[%s0 + $0x254] sm:$0xf]
  %v170 = vld [vmem:[%s0 + $0x258] sm:$0xf]
  %v171 = vld [vmem:[%s0 + $0x25c] sm:$0xf]
  %v172 = vld [vmem:[%s0 + $0x260] sm:$0xf]
  %v173 = vld [vmem:[%s0 + $0x264] sm:$0xf]
  %v174 = vld [vmem:[%s0 + $0x268] sm:$0xf]
  %v175 = vld [vmem:[%s0 + $0x26c] sm:$0xf]
  %v176 = vld [vmem:[%s0 + $0x270] sm:$0xf]
  %v177 = vld [vmem:[%s0 + $0x274] sm:$0xf]
  %v178 = vld [vmem:[%s0 + $0x278] sm:$0xf]
  %v179 = vld [vmem:[%s0 + $0x27c] sm:$0xf]
  %v180 = vld [vmem:[%s0 + $0x280] sm:$0xf]
  %v181 = vld [vmem:[%s0 + $0x284] sm:$0xf]
  %v182 = vld [vmem:[%s0 + $0x288] sm:$0xf]
  %v183 = vld [vmem:[%s0 + $0x28c] sm:$0xf]
  %v184 = vld [vmem:[%s0 + $0x290] sm:$0xf]
  %v185 = vld [vmem:[%s0 + $0x294] sm:$0xf]
  %v186 = vld [vmem:[%s0 + $0x298] sm:$0xf]
  %v187 = vld [vmem:[%s0 + $0x29c] sm:$0xf]
  %v188 = vld [vmem:[%s0 + $0x2a0] sm:$0xf]
  %v189 = vld [vmem:[%s0 + $0x2a4] sm:$0xf]
  %v190 = vld [vmem:[%s0 + $0x2a8] sm:$0xf]
  %v191 = vld [vmem:[%s0 + $0x2ac] sm:$0xf]
  %v192 = vld [vmem:[%s0 + $0x2b0] sm:$0xf]
  %v193 = vld [vmem:[%s0 + $0x2b4] sm:$0xf]
  %v194 = vld [vmem:[%s0 + $0x2b8] sm:$0xf]
  %v195 = vld [vmem:[%s0 + $0x2bc] sm:$0xf]
  %v196 = vld [vmem:[%s0 + $0x2c0] sm:$0xf]
  %v197 = vld [vmem:[%s0 + $0x2c4] sm:$0xf]
  %v198 = vld [vmem:[%s0 + $0x2c8] sm:$0xf]
  %v199 = vld [vmem:[%s0 + $0x2cc] sm:$0xf]
  %v200 = vld [vmem:[%s0 + $0x2d0] sm:$0xf]
  %v201 = vld [vmem:[%s0 + $0x2d4] sm:$0xf]
  %v202 = vld [vmem:[%s0 + $0x2d8] sm:$0xf]
  %v203 = vld [vmem:[%s0 + $0x2dc] sm:$0xf]
  %v204 = vld [vmem:[%s0 + $0x2e0] sm:$0xf]
  %v205 = vld [vmem:[%s0 + $0x2e4] sm:$0xf]
  %v206 = vld [vmem:[%s0 + $0x2e8] sm:$0xf]
  %v207 = vld [vmem:[%s0 + $0x2ec] sm:$0xf]
  %v208 = vld [vmem:[%s0 + $0x2f0] sm:$0xf]
  %v209 = vld [vmem:[%s0 + $0x2f4] sm:$0xf]
  %v210 = vld [vmem:[%s0 + $0x2f8] sm:$0xf]
  %v211 = vld [vmem:[%s0 + $0x2fc] sm:$0xf]
  %v212 = vld [vmem:[%s0 + $0x300] sm:$0xf]
  %v213 = vld [vmem:[%s0 + $0x304] sm:$0xf]
  %v214 = vld [vmem:[%s0 + $0x308] sm:$0xf]
  %v215 = vld [vmem:[%s0 + $0x30c] sm:$0xf]
  %v216 = vld [vmem:[%s0 + $0x310] sm:$0xf]
  %v217 = vld [vmem:[%s0 + $0x314] sm:$0xf]
  %v218 = vld [vmem:[%s0 + $0x318] sm:$0xf]
  %v219 = vld [vmem:[%s0 + $0x31c] sm:$0xf]
  %v220 = vld [vmem:[%s0 + $0x320] sm:$0xf]
  %v221 = vld [vmem:[%s0 + $0x324] sm:$0xf]
  %v222 = vld [vmem:[%s0 + $0x328] sm:$0xf]
  %v223 = vld [vmem:[%s0 + $0x32c] sm:$0xf]
  %v224 = vld [vmem:[%s0 + $0x330] sm:$0xf]
  %v225 = vld [vmem:[%s0 + $0x334] sm:$0xf]
  %v226 = vld [vmem:[%s0 + $0x338] sm:$0xf]
  %v227 = vld [vmem:[%s0 + $0x33c] sm:$0xf]
  %v228 = vld [vmem:[%s0 + $0x340] sm:$0xf]
  %v229 = vld [vmem:[%s0 + $0x344] sm:$0xf]
  %v230 = vld [vmem:[%s0 + $0x348] sm:$0xf]
  %v231 = vld [vmem:[%s0 + $0x34c] sm:$0xf]
  %v232 = vld [vmem:[%s0 + $0x350] sm:$0xf]
  %v233 = vld [vmem:[%s0 + $0x354] sm:$0xf]
  %v234 = vld [vmem:[%s0 + $0x358] sm:$0xf]
  %v235 = vld [vmem:[%s0 + $0x35c] sm:$0xf]
  %v236 = vld [vmem:[%s0 + $0x360] sm:$0xf]
  %v237 = vld [vmem:[%s0 + $0x364] sm:$0xf]
  %v238 = vld [vmem:[%s0 + $0x368] sm:$0xf]
  %v239 = vld [vmem:[%s0 + $0x36c] sm:$0xf]
  %v240 = vld [vmem:[%s0 + $0x370] sm:$0xf]
  %v241 = vld [vmem:[%s0 + $0x374] sm:$0xf]
  %v242 = vld [vmem:[%s0 + $0x378] sm:$0xf]
  %v243 = vld [vmem:[%s0 + $0x37c] sm:$0xf]
  %v244 = vld [vmem:[%s0 + $0x380] sm:$0xf]
  %v245 = vld [vmem:[%s0 + $0x384] sm:$0xf]
  %v246 = vld [vmem:[%s0 + $0x388] sm:$0xf]
  %v247 = vld [vmem:[%s0 + $0x38c] sm:$0xf]
  %v248 = vld [vmem:[%s0 + $0x390] sm:$0xf]
  %v249 = vld [vmem:[%s0 + $0x394] sm:$0xf]
  %v250 = vld [vmem:[%s0 + $0x398] sm:$0xf]
  %v251 = vld [vmem:[%s0 + $0x39c] sm:$0xf]
  %v252 = vld [vmem:[%s0 + $0x3a0] sm:$0xf]
  %v253 = vld [vmem:[%s0 + $0x3a4] sm:$0xf]
  %v254 = vld [vmem:[%s0 + $0x3a8] sm:$0xf]
  %v255 = vld [vmem:[%s0 + $0x3ac] sm:$0xf]
  %v256 = vld [vmem:[%s0 + $0x3b0] sm:$0xf]
  %v257 = vld [vmem:[%s0 + $0x3b4] sm:$0xf]
  %v258 = vld [vmem:[%s0 + $0x3b8] sm:$0xf]
  %v259 = vld [vmem:[%s0 + $0x3bc] sm:$0xf]
  %v260 = vld [vmem:[%s0 + $0x3c0] sm:$0xf]
  %v261 = vld [vmem:[%s0 + $0x3c4] sm:$0xf]
  %v262 = vld [vmem:[%s0 + $0x3c8] sm:$0xf]
  %v263 = vld [vmem:[%s0 + $0x3cc] sm:$0xf]
  %v264 = vld [vmem:[%s0 + $0x3d0] sm:$0xf]
  %v265 = vld [vmem:[%s0 + $0x3d4] sm:$0xf]
  %v266 = vld [vmem:[%s0 + $0x3d8] sm:$0xf]
  %v267 = vld [vmem:[%s0 + $0x3dc] sm:$0xf]
  %v268 = vld [vmem:[%s0 + $0x3e0] sm:$0xf]
  %v269 = vld [vmem:[%s0 + $0x3e4] sm:$0xf]
  %v270 = vld [vmem:[%s0 + $0x3e8] sm:$0xf]
  %v271 = vld [vmem:[%s0 + $0x3ec] sm:$0xf]
  %v272 = vld [vmem:[%s0 + $0x3f0] sm:$0xf]
  %v273 = vld [vmem:[%s0 + $0x3f4] sm:$0xf]
  %v274 = vld [vmem:[%s0 + $0x3f8] sm:$0xf]
  %v275 = vld [vmem:[%s0 + $0x3fc] sm:$0xf]
  %v276 = vld [vmem:[%s1] sm:$0xf]
  %v277 = vld [vmem:[%s1 + $0x4] sm:$0xf]
  %v278 = vld [vmem:[%s1 + $0x8] sm:$0xf]
  %v279 = vld [vmem:[%s1 + $0xc] sm:$0x3]
  %v280 = vld [vmem:[%s2] sm:$0x1]
  %v282 = vlaneseq
  %v283 = vshrl.u32 %v282, 7
  %v284 = vsub.s32 0, %v283
  %v285 = vrot.slane %v280, %v284
  %v543 = vunpack.c.l.b16 %v20
  %v544 = vunpack.c.l.b16 %v21
  %v545 = vunpack.c.l.b16 %v22
  %v546 = vunpack.c.l.b16 %v23
  %v547 = vunpack.c.l.b16 %v24
  %v548 = vunpack.c.l.b16 %v25
  %v549 = vunpack.c.l.b16 %v26
  %v550 = vunpack.c.l.b16 %v27
  %v551 = vunpack.c.l.b16 %v28
  %v552 = vunpack.c.l.b16 %v29
  %v553 = vunpack.c.l.b16 %v30
  %v554 = vunpack.c.l.b16 %v31
  %v555 = vunpack.c.l.b16 %v32
  %v556 = vunpack.c.l.b16 %v33
  %v557 = vunpack.c.l.b16 %v34
  %v558 = vunpack.c.l.b16 %v35
  %v559 = vunpack.c.l.b16 %v36
  %v560 = vunpack.c.l.b16 %v37
  %v561 = vunpack.c.l.b16 %v38
  %v562 = vunpack.c.l.b16 %v39
  %v563 = vunpack.c.l.b16 %v40
  %v564 = vunpack.c.l.b16 %v41
  %v565 = vunpack.c.l.b16 %v42
  %v566 = vunpack.c.l.b16 %v43
  %v567 = vunpack.c.l.b16 %v44
  %v568 = vunpack.c.l.b16 %v45
  %v569 = vunpack.c.l.b16 %v46
  %v570 = vunpack.c.l.b16 %v47
  %v571 = vunpack.c.l.b16 %v48
  %v572 = vunpack.c.l.b16 %v49
  %v573 = vunpack.c.l.b16 %v50
  %v574 = vunpack.c.l.b16 %v51
  %v575 = vunpack.c.l.b16 %v52
  %v576 = vunpack.c.l.b16 %v53
  %v577 = vunpack.c.l.b16 %v54
  %v578 = vunpack.c.l.b16 %v55
  %v579 = vunpack.c.l.b16 %v56
  %v580 = vunpack.c.l.b16 %v57
  %v581 = vunpack.c.l.b16 %v58
  %v582 = vunpack.c.l.b16 %v59
  %v583 = vunpack.c.l.b16 %v60
  %v584 = vunpack.c.l.b16 %v61
  %v585 = vunpack.c.l.b16 %v62
  %v586 = vunpack.c.l.b16 %v63
  %v587 = vunpack.c.l.b16 %v64
  %v588 = vunpack.c.l.b16 %v65
  %v589 = vunpack.c.l.b16 %v66
  %v590 = vunpack.c.l.b16 %v67
  %v591 = vunpack.c.l.b16 %v68
  %v592 = vunpack.c.l.b16 %v69
  %v593 = vunpack.c.l.b16 %v70
  %v594 = vunpack.c.l.b16 %v71
  %v595 = vunpack.c.l.b16 %v72
  %v596 = vunpack.c.l.b16 %v73
  %v597 = vunpack.c.l.b16 %v74
  %v598 = vunpack.c.l.b16 %v75
  %v599 = vunpack.c.l.b16 %v76
  %v600 = vunpack.c.l.b16 %v77
  %v601 = vunpack.c.l.b16 %v78
  %v602 = vunpack.c.l.b16 %v79
  %v603 = vunpack.c.l.b16 %v80
  %v604 = vunpack.c.l.b16 %v81
  %v605 = vunpack.c.l.b16 %v82
  %v606 = vunpack.c.l.b16 %v83
  %v607 = vunpack.c.l.b16 %v84
  %v608 = vunpack.c.l.b16 %v85
  %v609 = vunpack.c.l.b16 %v86
  %v610 = vunpack.c.l.b16 %v87
  %v611 = vunpack.c.l.b16 %v88
  %v612 = vunpack.c.l.b16 %v89
  %v613 = vunpack.c.l.b16 %v90
  %v614 = vunpack.c.l.b16 %v91
  %v615 = vunpack.c.l.b16 %v92
  %v616 = vunpack.c.l.b16 %v93
  %v617 = vunpack.c.l.b16 %v94
  %v618 = vunpack.c.l.b16 %v95
  %v619 = vunpack.c.l.b16 %v96
  %v620 = vunpack.c.l.b16 %v97
  %v621 = vunpack.c.l.b16 %v98
  %v622 = vunpack.c.l.b16 %v99
  %v623 = vunpack.c.l.b16 %v100
  %v624 = vunpack.c.l.b16 %v101
  %v625 = vunpack.c.l.b16 %v102
  %v626 = vunpack.c.l.b16 %v103
  %v627 = vunpack.c.l.b16 %v104
  %v628 = vunpack.c.l.b16 %v105
  %v629 = vunpack.c.l.b16 %v106
  %v630 = vunpack.c.l.b16 %v107
  %v631 = vunpack.c.l.b16 %v108
  %v632 = vunpack.c.l.b16 %v109
  %v633 = vunpack.c.l.b16 %v110
  %v634 = vunpack.c.l.b16 %v111
  %v635 = vunpack.c.l.b16 %v112
  %v636 = vunpack.c.l.b16 %v113
  %v637 = vunpack.c.l.b16 %v114
  %v638 = vunpack.c.l.b16 %v115
  %v639 = vunpack.c.l.b16 %v116
  %v640 = vunpack.c.l.b16 %v117
  %v641 = vunpack.c.l.b16 %v118
  %v642 = vunpack.c.l.b16 %v119
  %v643 = vunpack.c.l.b16 %v120
  %v644 = vunpack.c.l.b16 %v121
  %v645 = vunpack.c.l.b16 %v122
  %v646 = vunpack.c.l.b16 %v123
  %v647 = vunpack.c.l.b16 %v124
  %v648 = vunpack.c.l.b16 %v125
  %v649 = vunpack.c.l.b16 %v126
  %v650 = vunpack.c.l.b16 %v127
  %v651 = vunpack.c.l.b16 %v128
  %v652 = vunpack.c.l.b16 %v129
  %v653 = vunpack.c.l.b16 %v130
  %v654 = vunpack.c.l.b16 %v131
  %v655 = vunpack.c.l.b16 %v132
  %v656 = vunpack.c.l.b16 %v133
  %v657 = vunpack.c.l.b16 %v134
  %v658 = vunpack.c.l.b16 %v135
  %v659 = vunpack.c.l.b16 %v136
  %v660 = vunpack.c.l.b16 %v137
  %v661 = vunpack.c.l.b16 %v138
  %v662 = vunpack.c.l.b16 %v139
  %v663 = vunpack.c.l.b16 %v140
  %v664 = vunpack.c.l.b16 %v141
  %v665 = vunpack.c.l.b16 %v142
  %v666 = vunpack.c.l.b16 %v143
  %v667 = vunpack.c.l.b16 %v144
  %v668 = vunpack.c.l.b16 %v145
  %v669 = vunpack.c.l.b16 %v146
  %v670 = vunpack.c.l.b16 %v147
  %v671 = vunpack.c.l.b16 %v148
  %v672 = vunpack.c.l.b16 %v149
  %v673 = vunpack.c.l.b16 %v150
  %v674 = vunpack.c.l.b16 %v151
  %v675 = vunpack.c.l.b16 %v152
  %v676 = vunpack.c.l.b16 %v153
  %v677 = vunpack.c.l.b16 %v154
  %v678 = vunpack.c.l.b16 %v155
  %v679 = vunpack.c.l.b16 %v156
  %v680 = vunpack.c.l.b16 %v157
  %v681 = vunpack.c.l.b16 %v158
  %v682 = vunpack.c.l.b16 %v159
  %v683 = vunpack.c.l.b16 %v160
  %v684 = vunpack.c.l.b16 %v161
  %v685 = vunpack.c.l.b16 %v162
  %v686 = vunpack.c.l.b16 %v163
  %v687 = vunpack.c.l.b16 %v164
  %v688 = vunpack.c.l.b16 %v165
  %v689 = vunpack.c.l.b16 %v166
  %v690 = vunpack.c.l.b16 %v167
  %v691 = vunpack.c.l.b16 %v168
  %v692 = vunpack.c.l.b16 %v169
  %v693 = vunpack.c.l.b16 %v170
  %v694 = vunpack.c.l.b16 %v171
  %v695 = vunpack.c.l.b16 %v172
  %v696 = vunpack.c.l.b16 %v173
  %v697 = vunpack.c.l.b16 %v174
  %v698 = vunpack.c.l.b16 %v175
  %v699 = vunpack.c.l.b16 %v176
  %v700 = vunpack.c.l.b16 %v177
  %v701 = vunpack.c.l.b16 %v178
  %v702 = vunpack.c.l.b16 %v179
  %v703 = vunpack.c.l.b16 %v180
  %v704 = vunpack.c.l.b16 %v181
  %v705 = vunpack.c.l.b16 %v182
  %v706 = vunpack.c.l.b16 %v183
  %v707 = vunpack.c.l.b16 %v184
  %v708 = vunpack.c.l.b16 %v185
  %v709 = vunpack.c.l.b16 %v186
  %v710 = vunpack.c.l.b16 %v187
  %v711 = vunpack.c.l.b16 %v188
  %v712 = vunpack.c.l.b16 %v189
  %v713 = vunpack.c.l.b16 %v190
  %v714 = vunpack.c.l.b16 %v191
  %v715 = vunpack.c.l.b16 %v192
  %v716 = vunpack.c.l.b16 %v193
  %v717 = vunpack.c.l.b16 %v194
  %v718 = vunpack.c.l.b16 %v195
  %v719 = vunpack.c.l.b16 %v196
  %v720 = vunpack.c.l.b16 %v197
  %v721 = vunpack.c.l.b16 %v198
  %v722 = vunpack.c.l.b16 %v199
  %v723 = vunpack.c.l.b16 %v200
  %v724 = vunpack.c.l.b16 %v201
  %v725 = vunpack.c.l.b16 %v202
  %v726 = vunpack.c.l.b16 %v203
  %v727 = vunpack.c.l.b16 %v204
  %v728 = vunpack.c.l.b16 %v205
  %v729 = vunpack.c.l.b16 %v206
  %v730 = vunpack.c.l.b16 %v207
  %v731 = vunpack.c.l.b16 %v208
  %v732 = vunpack.c.l.b16 %v209
  %v733 = vunpack.c.l.b16 %v210
  %v734 = vunpack.c.l.b16 %v211
  %v735 = vunpack.c.l.b16 %v212
  %v736 = vunpack.c.l.b16 %v213
  %v737 = vunpack.c.l.b16 %v214
  %v738 = vunpack.c.l.b16 %v215
  %v739 = vunpack.c.l.b16 %v216
  %v740 = vunpack.c.l.b16 %v217
  %v741 = vunpack.c.l.b16 %v218
  %v742 = vunpack.c.l.b16 %v219
  %v743 = vunpack.c.l.b16 %v220
  %v744 = vunpack.c.l.b16 %v221
  %v745 = vunpack.c.l.b16 %v222
  %v746 = vunpack.c.l.b16 %v223
  %v747 = vunpack.c.l.b16 %v224
  %v748 = vunpack.c.l.b16 %v225
  %v749 = vunpack.c.l.b16 %v226
  %v750 = vunpack.c.l.b16 %v227
  %v751 = vunpack.c.l.b16 %v228
  %v752 = vunpack.c.l.b16 %v229
  %v753 = vunpack.c.l.b16 %v230
  %v754 = vunpack.c.l.b16 %v231
  %v755 = vunpack.c.l.b16 %v232
  %v756 = vunpack.c.l.b16 %v233
  %v757 = vunpack.c.l.b16 %v234
  %v758 = vunpack.c.l.b16 %v235
  %v759 = vunpack.c.l.b16 %v236
  %v760 = vunpack.c.l.b16 %v237
  %v761 = vunpack.c.l.b16 %v238
  %v762 = vunpack.c.l.b16 %v239
  %v763 = vunpack.c.l.b16 %v240
  %v764 = vunpack.c.l.b16 %v241
  %v765 = vunpack.c.l.b16 %v242
  %v766 = vunpack.c.l.b16 %v243
  %v767 = vunpack.c.l.b16 %v244
  %v768 = vunpack.c.l.b16 %v245
  %v769 = vunpack.c.l.b16 %v246
  %v770 = vunpack.c.l.b16 %v247
  %v771 = vunpack.c.l.b16 %v248
  %v772 = vunpack.c.l.b16 %v249
  %v773 = vunpack.c.l.b16 %v250
  %v774 = vunpack.c.l.b16 %v251
  %v775 = vunpack.c.l.b16 %v252
  %v776 = vunpack.c.l.b16 %v253
  %v777 = vunpack.c.l.b16 %v254
  %v778 = vunpack.c.l.b16 %v255
  %v779 = vunpack.c.l.b16 %v256
  %v780 = vunpack.c.l.b16 %v257
  %v781 = vunpack.c.l.b16 %v258
  %v782 = vunpack.c.l.b16 %v259
  %v783 = vunpack.c.l.b16 %v260
  %v784 = vunpack.c.l.b16 %v261
  %v785 = vunpack.c.l.b16 %v262
  %v786 = vunpack.c.l.b16 %v263
  %v787 = vunpack.c.l.b16 %v264
  %v788 = vunpack.c.l.b16 %v265
  %v789 = vunpack.c.l.b16 %v266
  %v790 = vunpack.c.l.b16 %v267
  %v791 = vunpack.c.l.b16 %v268
  %v792 = vunpack.c.l.b16 %v269
  %v793 = vunpack.c.l.b16 %v270
  %v794 = vunpack.c.l.b16 %v271
  %v795 = vunpack.c.l.b16 %v272
  %v796 = vunpack.c.l.b16 %v273
  %v797 = vunpack.c.l.b16 %v274
  %v798 = vunpack.c.l.b16 %v275
  %v799 = vpack.c.b16 %v544, %v543
  %v800 = vpack.c.b16 %v546, %v545
  %v801 = vpack.c.b16 %v548, %v547
  %v802 = vpack.c.b16 %v550, %v549
  %v803 = vpack.c.b16 %v552, %v551
  %v804 = vpack.c.b16 %v554, %v553
  %v805 = vpack.c.b16 %v556, %v555
  %v806 = vpack.c.b16 %v558, %v557
  %v807 = vpack.c.b16 %v560, %v559
  %v808 = vpack.c.b16 %v562, %v561
  %v809 = vpack.c.b16 %v564, %v563
  %v810 = vpack.c.b16 %v566, %v565
  %v811 = vpack.c.b16 %v568, %v567
  %v812 = vpack.c.b16 %v570, %v569
  %v813 = vpack.c.b16 %v572, %v571
  %v814 = vpack.c.b16 %v574, %v573
  %v815 = vpack.c.b16 %v576, %v575
  %v816 = vpack.c.b16 %v578, %v577
  %v817 = vpack.c.b16 %v580, %v579
  %v818 = vpack.c.b16 %v582, %v581
  %v819 = vpack.c.b16 %v584, %v583
  %v820 = vpack.c.b16 %v586, %v585
  %v821 = vpack.c.b16 %v588, %v587
  %v822 = vpack.c.b16 %v590, %v589
  %v823 = vpack.c.b16 %v592, %v591
  %v824 = vpack.c.b16 %v594, %v593
  %v825 = vpack.c.b16 %v596, %v595
  %v826 = vpack.c.b16 %v598, %v597
  %v827 = vpack.c.b16 %v600, %v599
  %v828 = vpack.c.b16 %v602, %v601
  %v829 = vpack.c.b16 %v604, %v603
  %v830 = vpack.c.b16 %v606, %v605
  %v831 = vpack.c.b16 %v608, %v607
  %v832 = vpack.c.b16 %v610, %v609
  %v833 = vpack.c.b16 %v612, %v611
  %v834 = vpack.c.b16 %v614, %v613
  %v835 = vpack.c.b16 %v616, %v615
  %v836 = vpack.c.b16 %v618, %v617
  %v837 = vpack.c.b16 %v620, %v619
  %v838 = vpack.c.b16 %v622, %v621
  %v839 = vpack.c.b16 %v624, %v623
  %v840 = vpack.c.b16 %v626, %v625
  %v841 = vpack.c.b16 %v628, %v627
  %v842 = vpack.c.b16 %v630, %v629
  %v843 = vpack.c.b16 %v632, %v631
  %v844 = vpack.c.b16 %v634, %v633
  %v845 = vpack.c.b16 %v636, %v635
  %v846 = vpack.c.b16 %v638, %v637
  %v847 = vpack.c.b16 %v640, %v639
  %v848 = vpack.c.b16 %v642, %v641
  %v849 = vpack.c.b16 %v644, %v643
  %v850 = vpack.c.b16 %v646, %v645
  %v851 = vpack.c.b16 %v648, %v647
  %v852 = vpack.c.b16 %v650, %v649
  %v853 = vpack.c.b16 %v652, %v651
  %v854 = vpack.c.b16 %v654, %v653
  %v855 = vpack.c.b16 %v656, %v655
  %v856 = vpack.c.b16 %v658, %v657
  %v857 = vpack.c.b16 %v660, %v659
  %v858 = vpack.c.b16 %v662, %v661
  %v859 = vpack.c.b16 %v664, %v663
  %v860 = vpack.c.b16 %v666, %v665
  %v861 = vpack.c.b16 %v668, %v667
  %v862 = vpack.c.b16 %v670, %v669
  %v863 = vpack.c.b16 %v672, %v671
  %v864 = vpack.c.b16 %v674, %v673
  %v865 = vpack.c.b16 %v676, %v675
  %v866 = vpack.c.b16 %v678, %v677
  %v867 = vpack.c.b16 %v680, %v679
  %v868 = vpack.c.b16 %v682, %v681
  %v869 = vpack.c.b16 %v684, %v683
  %v870 = vpack.c.b16 %v686, %v685
  %v871 = vpack.c.b16 %v688, %v687
  %v872 = vpack.c.b16 %v690, %v689
  %v873 = vpack.c.b16 %v692, %v691
  %v874 = vpack.c.b16 %v694, %v693
  %v875 = vpack.c.b16 %v696, %v695
  %v876 = vpack.c.b16 %v698, %v697
  %v877 = vpack.c.b16 %v700, %v699
  %v878 = vpack.c.b16 %v702, %v701
  %v879 = vpack.c.b16 %v704, %v703
  %v880 = vpack.c.b16 %v706, %v705
  %v881 = vpack.c.b16 %v708, %v707
  %v882 = vpack.c.b16 %v710, %v709
  %v883 = vpack.c.b16 %v712, %v711
  %v884 = vpack.c.b16 %v714, %v713
  %v885 = vpack.c.b16 %v716, %v715
  %v886 = vpack.c.b16 %v718, %v717
  %v887 = vpack.c.b16 %v720, %v719
  %v888 = vpack.c.b16 %v722, %v721
  %v889 = vpack.c.b16 %v724, %v723
  %v890 = vpack.c.b16 %v726, %v725
  %v891 = vpack.c.b16 %v728, %v727
  %v892 = vpack.c.b16 %v730, %v729
  %v893 = vpack.c.b16 %v732, %v731
  %v894 = vpack.c.b16 %v734, %v733
  %v895 = vpack.c.b16 %v736, %v735
  %v896 = vpack.c.b16 %v738, %v737
  %v897 = vpack.c.b16 %v740, %v739
  %v898 = vpack.c.b16 %v742, %v741
  %v899 = vpack.c.b16 %v744, %v743
  %v900 = vpack.c.b16 %v746, %v745
  %v901 = vpack.c.b16 %v748, %v747
  %v902 = vpack.c.b16 %v750, %v749
  %v903 = vpack.c.b16 %v752, %v751
  %v904 = vpack.c.b16 %v754, %v753
  %v905 = vpack.c.b16 %v756, %v755
  %v906 = vpack.c.b16 %v758, %v757
  %v907 = vpack.c.b16 %v760, %v759
  %v908 = vpack.c.b16 %v762, %v761
  %v909 = vpack.c.b16 %v764, %v763
  %v910 = vpack.c.b16 %v766, %v765
  %v911 = vpack.c.b16 %v768, %v767
  %v912 = vpack.c.b16 %v770, %v769
  %v913 = vpack.c.b16 %v772, %v771
  %v914 = vpack.c.b16 %v774, %v773
  %v915 = vpack.c.b16 %v776, %v775
  %v916 = vpack.c.b16 %v778, %v777
  %v917 = vpack.c.b16 %v780, %v779
  %v918 = vpack.c.b16 %v782, %v781
  %v919 = vpack.c.b16 %v784, %v783
  %v920 = vpack.c.b16 %v786, %v785
  %v921 = vpack.c.b16 %v788, %v787
  %v922 = vpack.c.b16 %v790, %v789
  %v923 = vpack.c.b16 %v792, %v791
  %v924 = vpack.c.b16 %v794, %v793
  %v925 = vpack.c.b16 %v796, %v795
  %v926 = vpack.c.b16 %v798, %v797
  %v931 = vunpack.c.l.b16 %v276
  %v932 = vunpack.c.l.b16 %v277
  %v933 = vunpack.c.l.b16 %v278
  %v934 = vunpack.c.l.b16 %v279
  %v935 = vpack.c.b16 %v932, %v931
  %v936 = vpack.c.b16 %v934, %v933
  %vm938 = vcmask 220160
  %v940 = vsel %vm938, %v799, 0
  %v943 = vsel %vm938, %v800, 0
  %v946 = vsel %vm938, %v801, 0
  %v949 = vsel %vm938, %v802, 0
  %v952 = vsel %vm938, %v803, 0
  %v955 = vsel %vm938, %v804, 0
  %v958 = vsel %vm938, %v805, 0
  %v961 = vsel %vm938, %v806, 0
  %v964 = vsel %vm938, %v807, 0
  %v967 = vsel %vm938, %v808, 0
  %v970 = vsel %vm938, %v809, 0
  %v973 = vsel %vm938, %v810, 0
  %v976 = vsel %vm938, %v811, 0
  %v979 = vsel %vm938, %v812, 0
  %v982 = vsel %vm938, %v813, 0
  %v985 = vsel %vm938, %v814, 0
  %v988 = vsel %vm938, %v815, 0
  %v991 = vsel %vm938, %v816, 0
  %v994 = vsel %vm938, %v817, 0
  %v997 = vsel %vm938, %v818, 0
  %v1000 = vsel %vm938, %v819, 0
  %v1003 = vsel %vm938, %v820, 0
  %v1006 = vsel %vm938, %v821, 0
  %v1009 = vsel %vm938, %v822, 0
  %v1012 = vsel %vm938, %v823, 0
  %v1015 = vsel %vm938, %v824, 0
  %v1018 = vsel %vm938, %v825, 0
  %v1021 = vsel %vm938, %v826, 0
  %v1024 = vsel %vm938, %v827, 0
  %v1027 = vsel %vm938, %v828, 0
  %v1030 = vsel %vm938, %v829, 0
  %v1033 = vsel %vm938, %v830, 0
  %v1036 = vsel %vm938, %v831, 0
  %v1039 = vsel %vm938, %v832, 0
  %v1042 = vsel %vm938, %v833, 0
  %v1045 = vsel %vm938, %v834, 0
  %v1048 = vsel %vm938, %v835, 0
  %v1051 = vsel %vm938, %v836, 0
  %v1054 = vsel %vm938, %v837, 0
  %v1057 = vsel %vm938, %v838, 0
  %v1060 = vsel %vm938, %v839, 0
  %v1063 = vsel %vm938, %v840, 0
  %v1066 = vsel %vm938, %v841, 0
  %v1069 = vsel %vm938, %v842, 0
  %v1072 = vsel %vm938, %v843, 0
  %v1075 = vsel %vm938, %v844, 0
  %v1078 = vsel %vm938, %v845, 0
  %v1081 = vsel %vm938, %v846, 0
  %v1084 = vsel %vm938, %v847, 0
  %v1087 = vsel %vm938, %v848, 0
  %v1090 = vsel %vm938, %v849, 0
  %v1093 = vsel %vm938, %v850, 0
  %v1096 = vsel %vm938, %v851, 0
  %v1099 = vsel %vm938, %v852, 0
  %v1102 = vsel %vm938, %v853, 0
  %v1105 = vsel %vm938, %v854, 0
  %v1108 = vsel %vm938, %v855, 0
  %v1111 = vsel %vm938, %v856, 0
  %v1114 = vsel %vm938, %v857, 0
  %v1117 = vsel %vm938, %v858, 0
  %v1120 = vsel %vm938, %v859, 0
  %v1123 = vsel %vm938, %v860, 0
  %v1126 = vsel %vm938, %v861, 0
  %v1129 = vsel %vm938, %v862, 0
  %v1132 = vsel %vm938, %v863, 0
  %v1135 = vsel %vm938, %v864, 0
  %v1138 = vsel %vm938, %v865, 0
  %v1141 = vsel %vm938, %v866, 0
  %v1144 = vsel %vm938, %v867, 0
  %v1147 = vsel %vm938, %v868, 0
  %v1150 = vsel %vm938, %v869, 0
  %v1153 = vsel %vm938, %v870, 0
  %v1156 = vsel %vm938, %v871, 0
  %v1159 = vsel %vm938, %v872, 0
  %v1162 = vsel %vm938, %v873, 0
  %v1165 = vsel %vm938, %v874, 0
  %v1168 = vsel %vm938, %v875, 0
  %v1171 = vsel %vm938, %v876, 0
  %v1174 = vsel %vm938, %v877, 0
  %v1177 = vsel %vm938, %v878, 0
  %v1180 = vsel %vm938, %v879, 0
  %v1183 = vsel %vm938, %v880, 0
  %v1186 = vsel %vm938, %v881, 0
  %v1189 = vsel %vm938, %v882, 0
  %v1192 = vsel %vm938, %v883, 0
  %v1195 = vsel %vm938, %v884, 0
  %v1198 = vsel %vm938, %v885, 0
  %v1201 = vsel %vm938, %v886, 0
  %v1204 = vsel %vm938, %v887, 0
  %v1207 = vsel %vm938, %v888, 0
  %v1210 = vsel %vm938, %v889, 0
  %v1213 = vsel %vm938, %v890, 0
  %v1216 = vsel %vm938, %v891, 0
  %v1219 = vsel %vm938, %v892, 0
  %v1222 = vsel %vm938, %v893, 0
  %v1225 = vsel %vm938, %v894, 0
  %v1228 = vsel %vm938, %v895, 0
  %v1231 = vsel %vm938, %v896, 0
  %v1234 = vsel %vm938, %v897, 0
  %v1237 = vsel %vm938, %v898, 0
  %v1240 = vsel %vm938, %v899, 0
  %v1243 = vsel %vm938, %v900, 0
  %v1246 = vsel %vm938, %v901, 0
  %v1249 = vsel %vm938, %v902, 0
  %v1252 = vsel %vm938, %v903, 0
  %v1255 = vsel %vm938, %v904, 0
  %v1258 = vsel %vm938, %v905, 0
  %v1261 = vsel %vm938, %v906, 0
  %v1264 = vsel %vm938, %v907, 0
  %v1267 = vsel %vm938, %v908, 0
  %v1270 = vsel %vm938, %v909, 0
  %v1273 = vsel %vm938, %v910, 0
  %v1276 = vsel %vm938, %v911, 0
  %v1279 = vsel %vm938, %v912, 0
  %v1282 = vsel %vm938, %v913, 0
  %v1285 = vsel %vm938, %v914, 0
  %v1288 = vsel %vm938, %v915, 0
  %v1291 = vsel %vm938, %v916, 0
  %v1294 = vsel %vm938, %v917, 0
  %v1297 = vsel %vm938, %v918, 0
  %v1300 = vsel %vm938, %v919, 0
  %v1303 = vsel %vm938, %v920, 0
  %v1306 = vsel %vm938, %v921, 0
  %v1309 = vsel %vm938, %v922, 0
  %v1312 = vsel %vm938, %v923, 0
  %v1315 = vsel %vm938, %v924, 0
  %v1318 = vsel %vm938, %v925, 0
  %v1321 = vsel %vm938, %v926, 0
  %vm1323 = vcmask 1044480
  %vm1324 = vcmask 1045504
  %v1325 = vsel %vm1323, 4294967295, 65535
  %v1326 = vsel %vm1324, %v1325, 0
  %v1328 = vand.u32 %v936, %v1326
  %1330 = vmatprep.subr.bf16.mxu0 0
  %1331 = vmatpush1.bf16.msra.mxu0 %v935
  %1332 = vmatprep.subr.bf16.mxu0 0
  %1333 = vmatpush1.bf16.msra.mxu0 %v1328
  %1334 = vmatprep.subr.bf16.mxu0 0
  %1335 = vmatpush1.bf16.msra.mxu0 0
  %1336 = vmatprep.subr.bf16.mxu0 0
  %1337 = vmatpush1.bf16.msra.mxu0 0
  %1338 = vmatprep.subr.bf16.mxu0 0
  %1339 = vmatpush1.bf16.msra.mxu0 0
  %1340 = vmatprep.subr.bf16.mxu0 0
  %1341 = vmatpush1.bf16.msra.mxu0 0
  %1342 = vmatprep.subr.bf16.mxu0 0
  %1343 = vmatpush1.bf16.msra.mxu0 0
  %1344 = vmatprep.subr.bf16.mxu0 0
  %1345 = vmatpush1.bf16.msra.mxu0 0
  %1346 = vmatprep.subr.bf16.mxu0 0
  %1347 = vmatpush1.bf16.msra.mxu0 0
  %1348 = vmatprep.subr.bf16.mxu0 0
  %1349 = vmatpush1.bf16.msra.mxu0 0
  %1350 = vmatprep.subr.bf16.mxu0 0
  %1351 = vmatpush1.bf16.msra.mxu0 0
  %1352 = vmatprep.subr.bf16.mxu0 0
  %1353 = vmatpush1.bf16.msra.mxu0 0
  %1354 = vmatprep.subr.bf16.mxu0 0
  %1355 = vmatpush1.bf16.msra.mxu0 0
  %1356 = vmatprep.subr.bf16.mxu0 0
  %1357 = vmatpush1.bf16.msra.mxu0 0
  %1358 = vmatprep.subr.bf16.mxu0 0
  %1359 = vmatpush1.bf16.msra.mxu0 0
  %1360 = vmatprep.subr.bf16.mxu0 0
  %1361 = vmatpush1.bf16.msra.mxu0 0
  %1362 = vmatprep.mubr.bf16.mxu0 0
  %1363 = vmatmul.mubr.bf16.gmra.mrb[0].mxu0 %v940
  %v1364 = vpop.f32.mrb[0].mxu0
  %v1365 = vadd.f32 %v285, %v1364
  %v1366 = vpop.f32.mrb[0].mxu0
  %v1367 = vpop.f32.mrb[0].mxu0
  %v1368 = vadd.f32 %v285, %v1367
  %v1369 = vpop.f32.mrb[0].mxu0
  %1370 = vmatprep.mubr.bf16.mxu0 0
  %1371 = vmatmul.mubr.bf16.gmra.mrb[0].mxu0 %v943
  %v1372 = vpop.f32.mrb[0].mxu0
  %v1373 = vadd.f32 %v285, %v1372
  %v1374 = vpop.f32.mrb[0].mxu0
  %v1375 = vpop.f32.mrb[0].mxu0
  %v1376 = vadd.f32 %v285, %v1375
  %v1377 = vpop.f32.mrb[0].mxu0
  %1378 = vmatprep.mubr.bf16.mxu0 0
  %1379 = vmatmul.mubr.bf16.gmra.mrb[0].mxu0 %v946
  %v1380 = vpop.f32.mrb[0].mxu0
  %v1381 = vadd.f32 %v285, %v1380
  %v1382 = vpop.f32.mrb[0].mxu0
  %v1383 = vpop.f32.mrb[0].mxu0
  %v1384 = vadd.f32 %v285, %v1383
  %v1385 = vpop.f32.mrb[0].mxu0
  %1386 = vmatprep.mubr.bf16.mxu0 0
  %1387 = vmatmul.mubr.bf16.gmra.mrb[0].mxu0 %v949
  %v1388 = vpop.f32.mrb[0].mxu0
  %v1389 = vadd.f32 %v285, %v1388
  %v1390 = vpop.f32.mrb[0].mxu0
  %v1391 = vpop.f32.mrb[0].mxu0
  %v1392 = vadd.f32 %v285, %v1391
  %v1393 = vpop.f32.mrb[0].mxu0
  %1394 = vmatprep.mubr.bf16.mxu0 0
  %1395 = vmatmul.mubr.bf16.gmra.mrb[0].mxu0 %v952
  %v1396 = vpop.f32.mrb[0].mxu0
  %v1397 = vadd.f32 %v285, %v1396
  %v1398 = vpop.f32.mrb[0].mxu0
  %v1399 = vpop.f32.mrb[0].mxu0
  %v1400 = vadd.f32 %v285, %v1399
  %v1401 = vpop.f32.mrb[0].mxu0
  %1402 = vmatprep.mubr.bf16.mxu0 0
  %1403 = vmatmul.mubr.bf16.gmra.mrb[0].mxu0 %v955
  %v1404 = vpop.f32.mrb[0].mxu0
  %v1405 = vadd.f32 %v285, %v1404
  %v1406 = vpop.f32.mrb[0].mxu0
  %v1407 = vpop.f32.mrb[0].mxu0
  %v1408 = vadd.f32 %v285, %v1407
  %v1409 = vpop.f32.mrb[0].mxu0
  %1410 = vmatprep.mubr.bf16.mxu0 0
  %1411 = vmatmul.mubr.bf16.gmra.mrb[0].mxu0 %v958
  %v1412 = vpop.f32.mrb[0].mxu0
  %v1413 = vadd.f32 %v285, %v1412
  %v1414 = vpop.f32.mrb[0].mxu0
  %v1415 = vpop.f32.mrb[0].mxu0
  %v1416 = vadd.f32 %v285, %v1415
  %v1417 = vpop.f32.mrb[0].mxu0
  %1418 = vmatprep.mubr.bf16.mxu0 0
  %1419 = vmatmul.mubr.bf16.gmra.mrb[0].mxu0 %v961
  %v1420 = vpop.f32.mrb[0].mxu0
  %v1421 = vadd.f32 %v285, %v1420
  %v1422 = vpop.f32.mrb[0].mxu0
  %v1423 = vpop.f32.mrb[0].mxu0
  %v1424 = vadd.f32 %v285, %v1423
  %v1425 = vpop.f32.mrb[0].mxu0
  %1426 = vmatprep.mubr.bf16.mxu0 0
  %1427 = vmatmul.mubr.bf16.gmra.mrb[0].mxu0 %v964
  %v1428 = vpop.f32.mrb[0].mxu0
  %v1429 = vadd.f32 %v285, %v1428
  %v1430 = vpop.f32.mrb[0].mxu0
  %v1431 = vpop.f32.mrb[0].mxu0
  %v1432 = vadd.f32 %v285, %v1431
  %v1433 = vpop.f32.mrb[0].mxu0
  %1434 = vmatprep.mubr.bf16.mxu0 0
  %1435 = vmatmul.mubr.bf16.gmra.mrb[0].mxu0 %v967
  %v1436 = vpop.f32.mrb[0].mxu0
  %v1437 = vadd.f32 %v285, %v1436
  %v1438 = vpop.f32.mrb[0].mxu0
  %v1439 = vpop.f32.mrb[0].mxu0
  %v1440 = vadd.f32 %v285, %v1439
  %v1441 = vpop.f32.mrb[0].mxu0
  %1442 = vmatprep.mubr.bf16.mxu0 0
  %1443 = vmatmul.mubr.bf16.gmra.mrb[0].mxu0 %v970
  %v1444 = vpop.f32.mrb[0].mxu0
  %v1445 = vadd.f32 %v285, %v1444
  %v1446 = vpop.f32.mrb[0].mxu0
  %v1447 = vpop.f32.mrb[0].mxu0
  %v1448 = vadd.f32 %v285, %v1447
  %v1449 = vpop.f32.mrb[0].mxu0
  %1450 = vmatprep.mubr.bf16.mxu0 0
  %1451 = vmatmul.mubr.bf16.gmra.mrb[0].mxu0 %v973
  %v1452 = vpop.f32.mrb[0].mxu0
  %v1453 = vadd.f32 %v285, %v1452
  %v1454 = vpop.f32.mrb[0].mxu0
  %v1455 = vpop.f32.mrb[0].mxu0
  %v1456 = vadd.f32 %v285, %v1455
  %v1457 = vpop.f32.mrb[0].mxu0
  %1458 = vmatprep.mubr.bf16.mxu0 0
  %1459 = vmatmul.mubr.bf16.gmra.mrb[0].mxu0 %v976
  %v1460 = vpop.f32.mrb[0].mxu0
  %v1461 = vadd.f32 %v285, %v1460
  %v1462 = vpop.f32.mrb[0].mxu0
  %v1463 = vpop.f32.mrb[0].mxu0
  %v1464 = vadd.f32 %v285, %v1463
  %v1465 = vpop.f32.mrb[0].mxu0
  %1466 = vmatprep.mubr.bf16.mxu0 0
  %1467 = vmatmul.mubr.bf16.gmra.mrb[0].mxu0 %v979
  %v1468 = vpop.f32.mrb[0].mxu0
  %v1469 = vadd.f32 %v285, %v1468
  %v1470 = vpop.f32.mrb[0].mxu0
  %v1471 = vpop.f32.mrb[0].mxu0
  %v1472 = vadd.f32 %v285, %v1471
  %v1473 = vpop.f32.mrb[0].mxu0
  %1474 = vmatprep.mubr.bf16.mxu0 0
  %1475 = vmatmul.mubr.bf16.gmra.mrb[0].mxu0 %v982
  %v1476 = vpop.f32.mrb[0].mxu0
  %v1477 = vadd.f32 %v285, %v1476
  %v1478 = vpop.f32.mrb[0].mxu0
  %v1479 = vpop.f32.mrb[0].mxu0
  %v1480 = vadd.f32 %v285, %v1479
  %v1481 = vpop.f32.mrb[0].mxu0
  %1482 = vmatprep.mubr.bf16.mxu0 0
  %1483 = vmatmul.mubr.bf16.gmra.mrb[0].mxu0 %v985
  %v1484 = vpop.f32.mrb[0].mxu0
  %v1485 = vadd.f32 %v285, %v1484
  %v1486 = vpop.f32.mrb[0].mxu0
  %v1487 = vpop.f32.mrb[0].mxu0
  %v1488 = vadd.f32 %v285, %v1487
  %v1489 = vpop.f32.mrb[0].mxu0
  %1490 = vmatprep.mubr.bf16.mxu0 0
  %1491 = vmatmul.mubr.bf16.gmra.mrb[0].mxu0 %v988
  %v1492 = vpop.f32.mrb[0].mxu0
  %v1493 = vadd.f32 %v285, %v1492
  %v1494 = vpop.f32.mrb[0].mxu0
  %v1495 = vpop.f32.mrb[0].mxu0
  %v1496 = vadd.f32 %v285, %v1495
  %v1497 = vpop.f32.mrb[0].mxu0
  %1498 = vmatprep.mubr.bf16.mxu0 0
  %1499 = vmatmul.mubr.bf16.gmra.mrb[0].mxu0 %v991
  %v1500 = vpop.f32.mrb[0].mxu0
  %v1501 = vadd.f32 %v285, %v1500
  %v1502 = vpop.f32.mrb[0].mxu0
  %v1503 = vpop.f32.mrb[0].mxu0
  %v1504 = vadd.f32 %v285, %v1503
  %v1505 = vpop.f32.mrb[0].mxu0
  %1506 = vmatprep.mubr.bf16.mxu0 0
  %1507 = vmatmul.mubr.bf16.gmra.mrb[0].mxu0 %v994
  %v1508 = vpop.f32.mrb[0].mxu0
  %v1509 = vadd.f32 %v285, %v1508
  %v1510 = vpop.f32.mrb[0].mxu0
  %v1511 = vpop.f32.mrb[0].mxu0
  %v1512 = vadd.f32 %v285, %v1511
  %v1513 = vpop.f32.mrb[0].mxu0
  %1514 = vmatprep.mubr.bf16.mxu0 0
  %1515 = vmatmul.mubr.bf16.gmra.mrb[0].mxu0 %v997
  %v1516 = vpop.f32.mrb[0].mxu0
  %v1517 = vadd.f32 %v285, %v1516
  %v1518 = vpop.f32.mrb[0].mxu0
  %v1519 = vpop.f32.mrb[0].mxu0
  %v1520 = vadd.f32 %v285, %v1519
  %v1521 = vpop.f32.mrb[0].mxu0
  %1522 = vmatprep.mubr.bf16.mxu0 0
  %1523 = vmatmul.mubr.bf16.gmra.mrb[0].mxu0 %v1000
  %v1524 = vpop.f32.mrb[0].mxu0
  %v1525 = vadd.f32 %v285, %v1524
  %v1526 = vpop.f32.mrb[0].mxu0
  %v1527 = vpop.f32.mrb[0].mxu0
  %v1528 = vadd.f32 %v285, %v1527
  %v1529 = vpop.f32.mrb[0].mxu0
  %1530 = vmatprep.mubr.bf16.mxu0 0
  %1531 = vmatmul.mubr.bf16.gmra.mrb[0].mxu0 %v1003
  %v1532 = vpop.f32.mrb[0].mxu0
  %v1533 = vadd.f32 %v285, %v1532
  %v1534 = vpop.f32.mrb[0].mxu0
  %v1535 = vpop.f32.mrb[0].mxu0
  %v1536 = vadd.f32 %v285, %v1535
  %v1537 = vpop.f32.mrb[0].mxu0
  %1538 = vmatprep.mubr.bf16.mxu0 0
  %1539 = vmatmul.mubr.bf16.gmra.mrb[0].mxu0 %v1006
  %v1540 = vpop.f32.mrb[0].mxu0
  %v1541 = vadd.f32 %v285, %v1540
  %v1542 = vpop.f32.mrb[0].mxu0
  %v1543 = vpop.f32.mrb[0].mxu0
  %v1544 = vadd.f32 %v285, %v1543
  %v1545 = vpop.f32.mrb[0].mxu0
  %1546 = vmatprep.mubr.bf16.mxu0 0
  %1547 = vmatmul.mubr.bf16.gmra.mrb[0].mxu0 %v1009
  %v1548 = vpop.f32.mrb[0].mxu0
  %v1549 = vadd.f32 %v285, %v1548
  %v1550 = vpop.f32.mrb[0].mxu0
  %v1551 = vpop.f32.mrb[0].mxu0
  %v1552 = vadd.f32 %v285, %v1551
  %v1553 = vpop.f32.mrb[0].mxu0
  %1554 = vmatprep.mubr.bf16.mxu0 0
  %1555 = vmatmul.mubr.bf16.gmra.mrb[0].mxu0 %v1012
  %v1556 = vpop.f32.mrb[0].mxu0
  %v1557 = vadd.f32 %v285, %v1556
  %v1558 = vpop.f32.mrb[0].mxu0
  %v1559 = vpop.f32.mrb[0].mxu0
  %v1560 = vadd.f32 %v285, %v1559
  %v1561 = vpop.f32.mrb[0].mxu0
  %1562 = vmatprep.mubr.bf16.mxu0 0
  %1563 = vmatmul.mubr.bf16.gmra.mrb[0].mxu0 %v1015
  %v1564 = vpop.f32.mrb[0].mxu0
  %v1565 = vadd.f32 %v285, %v1564
  %v1566 = vpop.f32.mrb[0].mxu0
  %v1567 = vpop.f32.mrb[0].mxu0
  %v1568 = vadd.f32 %v285, %v1567
  %v1569 = vpop.f32.mrb[0].mxu0
  %1570 = vmatprep.mubr.bf16.mxu0 0
  %1571 = vmatmul.mubr.bf16.gmra.mrb[0].mxu0 %v1018
  %v1572 = vpop.f32.mrb[0].mxu0
  %v1573 = vadd.f32 %v285, %v1572
  %v1574 = vpop.f32.mrb[0].mxu0
  %v1575 = vpop.f32.mrb[0].mxu0
  %v1576 = vadd.f32 %v285, %v1575
  %v1577 = vpop.f32.mrb[0].mxu0
  %1578 = vmatprep.mubr.bf16.mxu0 0
  %1579 = vmatmul.mubr.bf16.gmra.mrb[0].mxu0 %v1021
  %v1580 = vpop.f32.mrb[0].mxu0
  %v1581 = vadd.f32 %v285, %v1580
  %v1582 = vpop.f32.mrb[0].mxu0
  %v1583 = vpop.f32.mrb[0].mxu0
  %v1584 = vadd.f32 %v285, %v1583
  %v1585 = vpop.f32.mrb[0].mxu0
  %1586 = vmatprep.mubr.bf16.mxu0 0
  %1587 = vmatmul.mubr.bf16.gmra.mrb[0].mxu0 %v1024
  %v1588 = vpop.f32.mrb[0].mxu0
  %v1589 = vadd.f32 %v285, %v1588
  %v1590 = vpop.f32.mrb[0].mxu0
  %v1591 = vpop.f32.mrb[0].mxu0
  %v1592 = vadd.f32 %v285, %v1591
  %v1593 = vpop.f32.mrb[0].mxu0
  %1594 = vmatprep.mubr.bf16.mxu0 0
  %1595 = vmatmul.mubr.bf16.gmra.mrb[0].mxu0 %v1027
  %v1596 = vpop.f32.mrb[0].mxu0
  %v1597 = vadd.f32 %v285, %v1596
  %v1598 = vpop.f32.mrb[0].mxu0
  %v1599 = vpop.f32.mrb[0].mxu0
  %v1600 = vadd.f32 %v285, %v1599
  %v1601 = vpop.f32.mrb[0].mxu0
  %1602 = vmatprep.mubr.bf16.mxu0 0
  %1603 = vmatmul.mubr.bf16.gmra.mrb[0].mxu0 %v1030
  %v1604 = vpop.f32.mrb[0].mxu0
  %v1605 = vadd.f32 %v285, %v1604
  %v1606 = vpop.f32.mrb[0].mxu0
  %v1607 = vpop.f32.mrb[0].mxu0
  %v1608 = vadd.f32 %v285, %v1607
  %v1609 = vpop.f32.mrb[0].mxu0
  %1610 = vmatprep.mubr.bf16.mxu0 0
  %1611 = vmatmul.mubr.bf16.gmra.mrb[0].mxu0 %v1033
  %v1612 = vpop.f32.mrb[0].mxu0
  %v1613 = vadd.f32 %v285, %v1612
  %v1614 = vpop.f32.mrb[0].mxu0
  %v1615 = vpop.f32.mrb[0].mxu0
  %v1616 = vadd.f32 %v285, %v1615
  %v1617 = vpop.f32.mrb[0].mxu0
  %1618 = vmatprep.mubr.bf16.mxu0 0
  %1619 = vmatmul.mubr.bf16.gmra.mrb[0].mxu0 %v1036
  %v1620 = vpop.f32.mrb[0].mxu0
  %v1621 = vadd.f32 %v285, %v1620
  %v1622 = vpop.f32.mrb[0].mxu0
  %v1623 = vpop.f32.mrb[0].mxu0
  %v1624 = vadd.f32 %v285, %v1623
  %v1625 = vpop.f32.mrb[0].mxu0
  %1626 = vmatprep.mubr.bf16.mxu0 0
  %1627 = vmatmul.mubr.bf16.gmra.mrb[0].mxu0 %v1039
  %v1628 = vpop.f32.mrb[0].mxu0
  %v1629 = vadd.f32 %v285, %v1628
  %v1630 = vpop.f32.mrb[0].mxu0
  %v1631 = vpop.f32.mrb[0].mxu0
  %v1632 = vadd.f32 %v285, %v1631
  %v1633 = vpop.f32.mrb[0].mxu0
  %1634 = vmatprep.mubr.bf16.mxu0 0
  %1635 = vmatmul.mubr.bf16.gmra.mrb[0].mxu0 %v1042
  %v1636 = vpop.f32.mrb[0].mxu0
  %v1637 = vadd.f32 %v285, %v1636
  %v1638 = vpop.f32.mrb[0].mxu0
  %v1639 = vpop.f32.mrb[0].mxu0
  %v1640 = vadd.f32 %v285, %v1639
  %v1641 = vpop.f32.mrb[0].mxu0
  %1642 = vmatprep.mubr.bf16.mxu0 0
  %1643 = vmatmul.mubr.bf16.gmra.mrb[0].mxu0 %v1045
  %v1644 = vpop.f32.mrb[0].mxu0
  %v1645 = vadd.f32 %v285, %v1644
  %v1646 = vpop.f32.mrb[0].mxu0
  %v1647 = vpop.f32.mrb[0].mxu0
  %v1648 = vadd.f32 %v285, %v1647
  %v1649 = vpop.f32.mrb[0].mxu0
  %1650 = vmatprep.mubr.bf16.mxu0 0
  %1651 = vmatmul.mubr.bf16.gmra.mrb[0].mxu0 %v1048
  %v1652 = vpop.f32.mrb[0].mxu0
  %v1653 = vadd.f32 %v285, %v1652
  %v1654 = vpop.f32.mrb[0].mxu0
  %v1655 = vpop.f32.mrb[0].mxu0
  %v1656 = vadd.f32 %v285, %v1655
  %v1657 = vpop.f32.mrb[0].mxu0
  %1658 = vmatprep.mubr.bf16.mxu0 0
  %1659 = vmatmul.mubr.bf16.gmra.mrb[0].mxu0 %v1051
  %v1660 = vpop.f32.mrb[0].mxu0
  %v1661 = vadd.f32 %v285, %v1660
  %v1662 = vpop.f32.mrb[0].mxu0
  %v1663 = vpop.f32.mrb[0].mxu0
  %v1664 = vadd.f32 %v285, %v1663
  %v1665 = vpop.f32.mrb[0].mxu0
  %1666 = vmatprep.mubr.bf16.mxu0 0
  %1667 = vmatmul.mubr.bf16.gmra.mrb[0].mxu0 %v1054
  %v1668 = vpop.f32.mrb[0].mxu0
  %v1669 = vadd.f32 %v285, %v1668
  %v1670 = vpop.f32.mrb[0].mxu0
  %v1671 = vpop.f32.mrb[0].mxu0
  %v1672 = vadd.f32 %v285, %v1671
  %v1673 = vpop.f32.mrb[0].mxu0
  %1674 = vmatprep.mubr.bf16.mxu0 0
  %1675 = vmatmul.mubr.bf16.gmra.mrb[0].mxu0 %v1057
  %v1676 = vpop.f32.mrb[0].mxu0
  %v1677 = vadd.f32 %v285, %v1676
  %v1678 = vpop.f32.mrb[0].mxu0
  %v1679 = vpop.f32.mrb[0].mxu0
  %v1680 = vadd.f32 %v285, %v1679
  %v1681 = vpop.f32.mrb[0].mxu0
  %1682 = vmatprep.mubr.bf16.mxu0 0
  %1683 = vmatmul.mubr.bf16.gmra.mrb[0].mxu0 %v1060
  %v1684 = vpop.f32.mrb[0].mxu0
  %v1685 = vadd.f32 %v285, %v1684
  %v1686 = vpop.f32.mrb[0].mxu0
  %v1687 = vpop.f32.mrb[0].mxu0
  %v1688 = vadd.f32 %v285, %v1687
  %v1689 = vpop.f32.mrb[0].mxu0
  %1690 = vmatprep.mubr.bf16.mxu0 0
  %1691 = vmatmul.mubr.bf16.gmra.mrb[0].mxu0 %v1063
  %v1692 = vpop.f32.mrb[0].mxu0
  %v1693 = vadd.f32 %v285, %v1692
  %v1694 = vpop.f32.mrb[0].mxu0
  %v1695 = vpop.f32.mrb[0].mxu0
  %v1696 = vadd.f32 %v285, %v1695
  %v1697 = vpop.f32.mrb[0].mxu0
  %1698 = vmatprep.mubr.bf16.mxu0 0
  %1699 = vmatmul.mubr.bf16.gmra.mrb[0].mxu0 %v1066
  %v1700 = vpop.f32.mrb[0].mxu0
  %v1701 = vadd.f32 %v285, %v1700
  %v1702 = vpop.f32.mrb[0].mxu0
  %v1703 = vpop.f32.mrb[0].mxu0
  %v1704 = vadd.f32 %v285, %v1703
  %v1705 = vpop.f32.mrb[0].mxu0
  %1706 = vmatprep.mubr.bf16.mxu0 0
  %1707 = vmatmul.mubr.bf16.gmra.mrb[0].mxu0 %v1069
  %v1708 = vpop.f32.mrb[0].mxu0
  %v1709 = vadd.f32 %v285, %v1708
  %v1710 = vpop.f32.mrb[0].mxu0
  %v1711 = vpop.f32.mrb[0].mxu0
  %v1712 = vadd.f32 %v285, %v1711
  %v1713 = vpop.f32.mrb[0].mxu0
  %1714 = vmatprep.mubr.bf16.mxu0 0
  %1715 = vmatmul.mubr.bf16.gmra.mrb[0].mxu0 %v1072
  %v1716 = vpop.f32.mrb[0].mxu0
  %v1717 = vadd.f32 %v285, %v1716
  %v1718 = vpop.f32.mrb[0].mxu0
  %v1719 = vpop.f32.mrb[0].mxu0
  %v1720 = vadd.f32 %v285, %v1719
  %v1721 = vpop.f32.mrb[0].mxu0
  %1722 = vmatprep.mubr.bf16.mxu0 0
  %1723 = vmatmul.mubr.bf16.gmra.mrb[0].mxu0 %v1075
  %v1724 = vpop.f32.mrb[0].mxu0
  %v1725 = vadd.f32 %v285, %v1724
  %v1726 = vpop.f32.mrb[0].mxu0
  %v1727 = vpop.f32.mrb[0].mxu0
  %v1728 = vadd.f32 %v285, %v1727
  %v1729 = vpop.f32.mrb[0].mxu0
  %1730 = vmatprep.mubr.bf16.mxu0 0
  %1731 = vmatmul.mubr.bf16.gmra.mrb[0].mxu0 %v1078
  %v1732 = vpop.f32.mrb[0].mxu0
  %v1733 = vadd.f32 %v285, %v1732
  %v1734 = vpop.f32.mrb[0].mxu0
  %v1735 = vpop.f32.mrb[0].mxu0
  %v1736 = vadd.f32 %v285, %v1735
  %v1737 = vpop.f32.mrb[0].mxu0
  %1738 = vmatprep.mubr.bf16.mxu0 0
  %1739 = vmatmul.mubr.bf16.gmra.mrb[0].mxu0 %v1081
  %v1740 = vpop.f32.mrb[0].mxu0
  %v1741 = vadd.f32 %v285, %v1740
  %v1742 = vpop.f32.mrb[0].mxu0
  %v1743 = vpop.f32.mrb[0].mxu0
  %v1744 = vadd.f32 %v285, %v1743
  %v1745 = vpop.f32.mrb[0].mxu0
  %1746 = vmatprep.mubr.bf16.mxu0 0
  %1747 = vmatmul.mubr.bf16.gmra.mrb[0].mxu0 %v1084
  %v1748 = vpop.f32.mrb[0].mxu0
  %v1749 = vadd.f32 %v285, %v1748
  %v1750 = vpop.f32.mrb[0].mxu0
  %v1751 = vpop.f32.mrb[0].mxu0
  %v1752 = vadd.f32 %v285, %v1751
  %v1753 = vpop.f32.mrb[0].mxu0
  %1754 = vmatprep.mubr.bf16.mxu0 0
  %1755 = vmatmul.mubr.bf16.gmra.mrb[0].mxu0 %v1087
  %v1756 = vpop.f32.mrb[0].mxu0
  %v1757 = vadd.f32 %v285, %v1756
  %v1758 = vpop.f32.mrb[0].mxu0
  %v1759 = vpop.f32.mrb[0].mxu0
  %v1760 = vadd.f32 %v285, %v1759
  %v1761 = vpop.f32.mrb[0].mxu0
  %1762 = vmatprep.mubr.bf16.mxu0 0
  %1763 = vmatmul.mubr.bf16.gmra.mrb[0].mxu0 %v1090
  %v1764 = vpop.f32.mrb[0].mxu0
  %v1765 = vadd.f32 %v285, %v1764
  %v1766 = vpop.f32.mrb[0].mxu0
  %v1767 = vpop.f32.mrb[0].mxu0
  %v1768 = vadd.f32 %v285, %v1767
  %v1769 = vpop.f32.mrb[0].mxu0
  %1770 = vmatprep.mubr.bf16.mxu0 0
  %1771 = vmatmul.mubr.bf16.gmra.mrb[0].mxu0 %v1093
  %v1772 = vpop.f32.mrb[0].mxu0
  %v1773 = vadd.f32 %v285, %v1772
  %v1774 = vpop.f32.mrb[0].mxu0
  %v1775 = vpop.f32.mrb[0].mxu0
  %v1776 = vadd.f32 %v285, %v1775
  %v1777 = vpop.f32.mrb[0].mxu0
  %1778 = vmatprep.mubr.bf16.mxu0 0
  %1779 = vmatmul.mubr.bf16.gmra.mrb[0].mxu0 %v1096
  %v1780 = vpop.f32.mrb[0].mxu0
  %v1781 = vadd.f32 %v285, %v1780
  %v1782 = vpop.f32.mrb[0].mxu0
  %v1783 = vpop.f32.mrb[0].mxu0
  %v1784 = vadd.f32 %v285, %v1783
  %v1785 = vpop.f32.mrb[0].mxu0
  %1786 = vmatprep.mubr.bf16.mxu0 0
  %1787 = vmatmul.mubr.bf16.gmra.mrb[0].mxu0 %v1099
  %v1788 = vpop.f32.mrb[0].mxu0
  %v1789 = vadd.f32 %v285, %v1788
  %v1790 = vpop.f32.mrb[0].mxu0
  %v1791 = vpop.f32.mrb[0].mxu0
  %v1792 = vadd.f32 %v285, %v1791
  %v1793 = vpop.f32.mrb[0].mxu0
  %1794 = vmatprep.mubr.bf16.mxu0 0
  %1795 = vmatmul.mubr.bf16.gmra.mrb[0].mxu0 %v1102
  %v1796 = vpop.f32.mrb[0].mxu0
  %v1797 = vadd.f32 %v285, %v1796
  %v1798 = vpop.f32.mrb[0].mxu0
  %v1799 = vpop.f32.mrb[0].mxu0
  %v1800 = vadd.f32 %v285, %v1799
  %v1801 = vpop.f32.mrb[0].mxu0
  %1802 = vmatprep.mubr.bf16.mxu0 0
  %1803 = vmatmul.mubr.bf16.gmra.mrb[0].mxu0 %v1105
  %v1804 = vpop.f32.mrb[0].mxu0
  %v1805 = vadd.f32 %v285, %v1804
  %v1806 = vpop.f32.mrb[0].mxu0
  %v1807 = vpop.f32.mrb[0].mxu0
  %v1808 = vadd.f32 %v285, %v1807
  %v1809 = vpop.f32.mrb[0].mxu0
  %1810 = vmatprep.mubr.bf16.mxu0 0
  %1811 = vmatmul.mubr.bf16.gmra.mrb[0].mxu0 %v1108
  %v1812 = vpop.f32.mrb[0].mxu0
  %v1813 = vadd.f32 %v285, %v1812
  %v1814 = vpop.f32.mrb[0].mxu0
  %v1815 = vpop.f32.mrb[0].mxu0
  %v1816 = vadd.f32 %v285, %v1815
  %v1817 = vpop.f32.mrb[0].mxu0
  %1818 = vmatprep.mubr.bf16.mxu0 0
  %1819 = vmatmul.mubr.bf16.gmra.mrb[0].mxu0 %v1111
  %v1820 = vpop.f32.mrb[0].mxu0
  %v1821 = vadd.f32 %v285, %v1820
  %v1822 = vpop.f32.mrb[0].mxu0
  %v1823 = vpop.f32.mrb[0].mxu0
  %v1824 = vadd.f32 %v285, %v1823
  %v1825 = vpop.f32.mrb[0].mxu0
  %1826 = vmatprep.mubr.bf16.mxu0 0
  %1827 = vmatmul.mubr.bf16.gmra.mrb[0].mxu0 %v1114
  %v1828 = vpop.f32.mrb[0].mxu0
  %v1829 = vadd.f32 %v285, %v1828
  %v1830 = vpop.f32.mrb[0].mxu0
  %v1831 = vpop.f32.mrb[0].mxu0
  %v1832 = vadd.f32 %v285, %v1831
  %v1833 = vpop.f32.mrb[0].mxu0
  %1834 = vmatprep.mubr.bf16.mxu0 0
  %1835 = vmatmul.mubr.bf16.gmra.mrb[0].mxu0 %v1117
  %v1836 = vpop.f32.mrb[0].mxu0
  %v1837 = vadd.f32 %v285, %v1836
  %v1838 = vpop.f32.mrb[0].mxu0
  %v1839 = vpop.f32.mrb[0].mxu0
  %v1840 = vadd.f32 %v285, %v1839
  %v1841 = vpop.f32.mrb[0].mxu0
  %1842 = vmatprep.mubr.bf16.mxu0 0
  %1843 = vmatmul.mubr.bf16.gmra.mrb[0].mxu0 %v1120
  %v1844 = vpop.f32.mrb[0].mxu0
  %v1845 = vadd.f32 %v285, %v1844
  %v1846 = vpop.f32.mrb[0].mxu0
  %v1847 = vpop.f32.mrb[0].mxu0
  %v1848 = vadd.f32 %v285, %v1847
  %v1849 = vpop.f32.mrb[0].mxu0
  %1850 = vmatprep.mubr.bf16.mxu0 0
  %1851 = vmatmul.mubr.bf16.gmra.mrb[0].mxu0 %v1123
  %v1852 = vpop.f32.mrb[0].mxu0
  %v1853 = vadd.f32 %v285, %v1852
  %v1854 = vpop.f32.mrb[0].mxu0
  %v1855 = vpop.f32.mrb[0].mxu0
  %v1856 = vadd.f32 %v285, %v1855
  %v1857 = vpop.f32.mrb[0].mxu0
  %1858 = vmatprep.mubr.bf16.mxu0 0
  %1859 = vmatmul.mubr.bf16.gmra.mrb[0].mxu0 %v1126
  %v1860 = vpop.f32.mrb[0].mxu0
  %v1861 = vadd.f32 %v285, %v1860
  %v1862 = vpop.f32.mrb[0].mxu0
  %v1863 = vpop.f32.mrb[0].mxu0
  %v1864 = vadd.f32 %v285, %v1863
  %v1865 = vpop.f32.mrb[0].mxu0
  %1866 = vmatprep.mubr.bf16.mxu0 0
  %1867 = vmatmul.mubr.bf16.gmra.mrb[0].mxu0 %v1129
  %v1868 = vpop.f32.mrb[0].mxu0
  %v1869 = vadd.f32 %v285, %v1868
  %v1870 = vpop.f32.mrb[0].mxu0
  %v1871 = vpop.f32.mrb[0].mxu0
  %v1872 = vadd.f32 %v285, %v1871
  %v1873 = vpop.f32.mrb[0].mxu0
  %1874 = vmatprep.mubr.bf16.mxu0 0
  %1875 = vmatmul.mubr.bf16.gmra.mrb[0].mxu0 %v1132
  %v1876 = vpop.f32.mrb[0].mxu0
  %v1877 = vadd.f32 %v285, %v1876
  %v1878 = vpop.f32.mrb[0].mxu0
  %v1879 = vpop.f32.mrb[0].mxu0
  %v1880 = vadd.f32 %v285, %v1879
  %v1881 = vpop.f32.mrb[0].mxu0
  %1882 = vmatprep.mubr.bf16.mxu0 0
  %1883 = vmatmul.mubr.bf16.gmra.mrb[0].mxu0 %v1135
  %v1884 = vpop.f32.mrb[0].mxu0
  %v1885 = vadd.f32 %v285, %v1884
  %v1886 = vpop.f32.mrb[0].mxu0
  %v1887 = vpop.f32.mrb[0].mxu0
  %v1888 = vadd.f32 %v285, %v1887
  %v1889 = vpop.f32.mrb[0].mxu0
  %1890 = vmatprep.mubr.bf16.mxu0 0
  %1891 = vmatmul.mubr.bf16.gmra.mrb[0].mxu0 %v1138
  %v1892 = vpop.f32.mrb[0].mxu0
  %v1893 = vadd.f32 %v285, %v1892
  %v1894 = vpop.f32.mrb[0].mxu0
  %v1895 = vpop.f32.mrb[0].mxu0
  %v1896 = vadd.f32 %v285, %v1895
  %v1897 = vpop.f32.mrb[0].mxu0
  %1898 = vmatprep.mubr.bf16.mxu0 0
  %1899 = vmatmul.mubr.bf16.gmra.mrb[0].mxu0 %v1141
  %v1900 = vpop.f32.mrb[0].mxu0
  %v1901 = vadd.f32 %v285, %v1900
  %v1902 = vpop.f32.mrb[0].mxu0
  %v1903 = vpop.f32.mrb[0].mxu0
  %v1904 = vadd.f32 %v285, %v1903
  %v1905 = vpop.f32.mrb[0].mxu0
  %1906 = vmatprep.mubr.bf16.mxu0 0
  %1907 = vmatmul.mubr.bf16.gmra.mrb[0].mxu0 %v1144
  %v1908 = vpop.f32.mrb[0].mxu0
  %v1909 = vadd.f32 %v285, %v1908
  %v1910 = vpop.f32.mrb[0].mxu0
  %v1911 = vpop.f32.mrb[0].mxu0
  %v1912 = vadd.f32 %v285, %v1911
  %v1913 = vpop.f32.mrb[0].mxu0
  %1914 = vmatprep.mubr.bf16.mxu0 0
  %1915 = vmatmul.mubr.bf16.gmra.mrb[0].mxu0 %v1147
  %v1916 = vpop.f32.mrb[0].mxu0
  %v1917 = vadd.f32 %v285, %v1916
  %v1918 = vpop.f32.mrb[0].mxu0
  %v1919 = vpop.f32.mrb[0].mxu0
  %v1920 = vadd.f32 %v285, %v1919
  %v1921 = vpop.f32.mrb[0].mxu0
  %1922 = vmatprep.mubr.bf16.mxu0 0
  %1923 = vmatmul.mubr.bf16.gmra.mrb[0].mxu0 %v1150
  %v1924 = vpop.f32.mrb[0].mxu0
  %v1925 = vadd.f32 %v285, %v1924
  %v1926 = vpop.f32.mrb[0].mxu0
  %v1927 = vpop.f32.mrb[0].mxu0
  %v1928 = vadd.f32 %v285, %v1927
  %v1929 = vpop.f32.mrb[0].mxu0
  %1930 = vmatprep.mubr.bf16.mxu0 0
  %1931 = vmatmul.mubr.bf16.gmra.mrb[0].mxu0 %v1153
  %v1932 = vpop.f32.mrb[0].mxu0
  %v1933 = vadd.f32 %v285, %v1932
  %v1934 = vpop.f32.mrb[0].mxu0
  %v1935 = vpop.f32.mrb[0].mxu0
  %v1936 = vadd.f32 %v285, %v1935
  %v1937 = vpop.f32.mrb[0].mxu0
  %1938 = vmatprep.mubr.bf16.mxu0 0
  %1939 = vmatmul.mubr.bf16.gmra.mrb[0].mxu0 %v1156
  %v1940 = vpop.f32.mrb[0].mxu0
  %v1941 = vadd.f32 %v285, %v1940
  %v1942 = vpop.f32.mrb[0].mxu0
  %v1943 = vpop.f32.mrb[0].mxu0
  %v1944 = vadd.f32 %v285, %v1943
  %v1945 = vpop.f32.mrb[0].mxu0
  %1946 = vmatprep.mubr.bf16.mxu0 0
  %1947 = vmatmul.mubr.bf16.gmra.mrb[0].mxu0 %v1159
  %v1948 = vpop.f32.mrb[0].mxu0
  %v1949 = vadd.f32 %v285, %v1948
  %v1950 = vpop.f32.mrb[0].mxu0
  %v1951 = vpop.f32.mrb[0].mxu0
  %v1952 = vadd.f32 %v285, %v1951
  %v1953 = vpop.f32.mrb[0].mxu0
  %1954 = vmatprep.mubr.bf16.mxu0 0
  %1955 = vmatmul.mubr.bf16.gmra.mrb[0].mxu0 %v1162
  %v1956 = vpop.f32.mrb[0].mxu0
  %v1957 = vadd.f32 %v285, %v1956
  %v1958 = vpop.f32.mrb[0].mxu0
  %v1959 = vpop.f32.mrb[0].mxu0
  %v1960 = vadd.f32 %v285, %v1959
  %v1961 = vpop.f32.mrb[0].mxu0
  %1962 = vmatprep.mubr.bf16.mxu0 0
  %1963 = vmatmul.mubr.bf16.gmra.mrb[0].mxu0 %v1165
  %v1964 = vpop.f32.mrb[0].mxu0
  %v1965 = vadd.f32 %v285, %v1964
  %v1966 = vpop.f32.mrb[0].mxu0
  %v1967 = vpop.f32.mrb[0].mxu0
  %v1968 = vadd.f32 %v285, %v1967
  %v1969 = vpop.f32.mrb[0].mxu0
  %1970 = vmatprep.mubr.bf16.mxu0 0
  %1971 = vmatmul.mubr.bf16.gmra.mrb[0].mxu0 %v1168
  %v1972 = vpop.f32.mrb[0].mxu0
  %v1973 = vadd.f32 %v285, %v1972
  %v1974 = vpop.f32.mrb[0].mxu0
  %v1975 = vpop.f32.mrb[0].mxu0
  %v1976 = vadd.f32 %v285, %v1975
  %v1977 = vpop.f32.mrb[0].mxu0
  %1978 = vmatprep.mubr.bf16.mxu0 0
  %1979 = vmatmul.mubr.bf16.gmra.mrb[0].mxu0 %v1171
  %v1980 = vpop.f32.mrb[0].mxu0
  %v1981 = vadd.f32 %v285, %v1980
  %v1982 = vpop.f32.mrb[0].mxu0
  %v1983 = vpop.f32.mrb[0].mxu0
  %v1984 = vadd.f32 %v285, %v1983
  %v1985 = vpop.f32.mrb[0].mxu0
  %1986 = vmatprep.mubr.bf16.mxu0 0
  %1987 = vmatmul.mubr.bf16.gmra.mrb[0].mxu0 %v1174
  %v1988 = vpop.f32.mrb[0].mxu0
  %v1989 = vadd.f32 %v285, %v1988
  %v1990 = vpop.f32.mrb[0].mxu0
  %v1991 = vpop.f32.mrb[0].mxu0
  %v1992 = vadd.f32 %v285, %v1991
  %v1993 = vpop.f32.mrb[0].mxu0
  %1994 = vmatprep.mubr.bf16.mxu0 0
  %1995 = vmatmul.mubr.bf16.gmra.mrb[0].mxu0 %v1177
  %v1996 = vpop.f32.mrb[0].mxu0
  %v1997 = vadd.f32 %v285, %v1996
  %v1998 = vpop.f32.mrb[0].mxu0
  %v1999 = vpop.f32.mrb[0].mxu0
  %v2000 = vadd.f32 %v285, %v1999
  %v2001 = vpop.f32.mrb[0].mxu0
  %2002 = vmatprep.mubr.bf16.mxu0 0
  %2003 = vmatmul.mubr.bf16.gmra.mrb[0].mxu0 %v1180
  %v2004 = vpop.f32.mrb[0].mxu0
  %v2005 = vadd.f32 %v285, %v2004
  %v2006 = vpop.f32.mrb[0].mxu0
  %v2007 = vpop.f32.mrb[0].mxu0
  %v2008 = vadd.f32 %v285, %v2007
  %v2009 = vpop.f32.mrb[0].mxu0
  %2010 = vmatprep.mubr.bf16.mxu0 0
  %2011 = vmatmul.mubr.bf16.gmra.mrb[0].mxu0 %v1183
  %v2012 = vpop.f32.mrb[0].mxu0
  %v2013 = vadd.f32 %v285, %v2012
  %v2014 = vpop.f32.mrb[0].mxu0
  %v2015 = vpop.f32.mrb[0].mxu0
  %v2016 = vadd.f32 %v285, %v2015
  %v2017 = vpop.f32.mrb[0].mxu0
  %2018 = vmatprep.mubr.bf16.mxu0 0
  %2019 = vmatmul.mubr.bf16.gmra.mrb[0].mxu0 %v1186
  %v2020 = vpop.f32.mrb[0].mxu0
  %v2021 = vadd.f32 %v285, %v2020
  %v2022 = vpop.f32.mrb[0].mxu0
  %v2023 = vpop.f32.mrb[0].mxu0
  %v2024 = vadd.f32 %v285, %v2023
  %v2025 = vpop.f32.mrb[0].mxu0
  %2026 = vmatprep.mubr.bf16.mxu0 0
  %2027 = vmatmul.mubr.bf16.gmra.mrb[0].mxu0 %v1189
  %v2028 = vpop.f32.mrb[0].mxu0
  %v2029 = vadd.f32 %v285, %v2028
  %v2030 = vpop.f32.mrb[0].mxu0
  %v2031 = vpop.f32.mrb[0].mxu0
  %v2032 = vadd.f32 %v285, %v2031
  %v2033 = vpop.f32.mrb[0].mxu0
  %2034 = vmatprep.mubr.bf16.mxu0 0
  %2035 = vmatmul.mubr.bf16.gmra.mrb[0].mxu0 %v1192
  %v2036 = vpop.f32.mrb[0].mxu0
  %v2037 = vadd.f32 %v285, %v2036
  %v2038 = vpop.f32.mrb[0].mxu0
  %v2039 = vpop.f32.mrb[0].mxu0
  %v2040 = vadd.f32 %v285, %v2039
  %v2041 = vpop.f32.mrb[0].mxu0
  %2042 = vmatprep.mubr.bf16.mxu0 0
  %2043 = vmatmul.mubr.bf16.gmra.mrb[0].mxu0 %v1195
  %v2044 = vpop.f32.mrb[0].mxu0
  %v2045 = vadd.f32 %v285, %v2044
  %v2046 = vpop.f32.mrb[0].mxu0
  %v2047 = vpop.f32.mrb[0].mxu0
  %v2048 = vadd.f32 %v285, %v2047
  %v2049 = vpop.f32.mrb[0].mxu0
  %2050 = vmatprep.mubr.bf16.mxu0 0
  %2051 = vmatmul.mubr.bf16.gmra.mrb[0].mxu0 %v1198
  %v2052 = vpop.f32.mrb[0].mxu0
  %v2053 = vadd.f32 %v285, %v2052
  %v2054 = vpop.f32.mrb[0].mxu0
  %v2055 = vpop.f32.mrb[0].mxu0
  %v2056 = vadd.f32 %v285, %v2055
  %v2057 = vpop.f32.mrb[0].mxu0
  %2058 = vmatprep.mubr.bf16.mxu0 0
  %2059 = vmatmul.mubr.bf16.gmra.mrb[0].mxu0 %v1201
  %v2060 = vpop.f32.mrb[0].mxu0
  %v2061 = vadd.f32 %v285, %v2060
  %v2062 = vpop.f32.mrb[0].mxu0
  %v2063 = vpop.f32.mrb[0].mxu0
  %v2064 = vadd.f32 %v285, %v2063
  %v2065 = vpop.f32.mrb[0].mxu0
  %2066 = vmatprep.mubr.bf16.mxu0 0
  %2067 = vmatmul.mubr.bf16.gmra.mrb[0].mxu0 %v1204
  %v2068 = vpop.f32.mrb[0].mxu0
  %v2069 = vadd.f32 %v285, %v2068
  %v2070 = vpop.f32.mrb[0].mxu0
  %v2071 = vpop.f32.mrb[0].mxu0
  %v2072 = vadd.f32 %v285, %v2071
  %v2073 = vpop.f32.mrb[0].mxu0
  %2074 = vmatprep.mubr.bf16.mxu0 0
  %2075 = vmatmul.mubr.bf16.gmra.mrb[0].mxu0 %v1207
  %v2076 = vpop.f32.mrb[0].mxu0
  %v2077 = vadd.f32 %v285, %v2076
  %v2078 = vpop.f32.mrb[0].mxu0
  %v2079 = vpop.f32.mrb[0].mxu0
  %v2080 = vadd.f32 %v285, %v2079
  %v2081 = vpop.f32.mrb[0].mxu0
  %2082 = vmatprep.mubr.bf16.mxu0 0
  %2083 = vmatmul.mubr.bf16.gmra.mrb[0].mxu0 %v1210
  %v2084 = vpop.f32.mrb[0].mxu0
  %v2085 = vadd.f32 %v285, %v2084
  %v2086 = vpop.f32.mrb[0].mxu0
  %v2087 = vpop.f32.mrb[0].mxu0
  %v2088 = vadd.f32 %v285, %v2087
  %v2089 = vpop.f32.mrb[0].mxu0
  %2090 = vmatprep.mubr.bf16.mxu0 0
  %2091 = vmatmul.mubr.bf16.gmra.mrb[0].mxu0 %v1213
  %v2092 = vpop.f32.mrb[0].mxu0
  %v2093 = vadd.f32 %v285, %v2092
  %v2094 = vpop.f32.mrb[0].mxu0
  %v2095 = vpop.f32.mrb[0].mxu0
  %v2096 = vadd.f32 %v285, %v2095
  %v2097 = vpop.f32.mrb[0].mxu0
  %2098 = vmatprep.mubr.bf16.mxu0 0
  %2099 = vmatmul.mubr.bf16.gmra.mrb[0].mxu0 %v1216
  %v2100 = vpop.f32.mrb[0].mxu0
  %v2101 = vadd.f32 %v285, %v2100
  %v2102 = vpop.f32.mrb[0].mxu0
  %v2103 = vpop.f32.mrb[0].mxu0
  %v2104 = vadd.f32 %v285, %v2103
  %v2105 = vpop.f32.mrb[0].mxu0
  %2106 = vmatprep.mubr.bf16.mxu0 0
  %2107 = vmatmul.mubr.bf16.gmra.mrb[0].mxu0 %v1219
  %v2108 = vpop.f32.mrb[0].mxu0
  %v2109 = vadd.f32 %v285, %v2108
  %v2110 = vpop.f32.mrb[0].mxu0
  %v2111 = vpop.f32.mrb[0].mxu0
  %v2112 = vadd.f32 %v285, %v2111
  %v2113 = vpop.f32.mrb[0].mxu0
  %2114 = vmatprep.mubr.bf16.mxu0 0
  %2115 = vmatmul.mubr.bf16.gmra.mrb[0].mxu0 %v1222
  %v2116 = vpop.f32.mrb[0].mxu0
  %v2117 = vadd.f32 %v285, %v2116
  %v2118 = vpop.f32.mrb[0].mxu0
  %v2119 = vpop.f32.mrb[0].mxu0
  %v2120 = vadd.f32 %v285, %v2119
  %v2121 = vpop.f32.mrb[0].mxu0
  %2122 = vmatprep.mubr.bf16.mxu0 0
  %2123 = vmatmul.mubr.bf16.gmra.mrb[0].mxu0 %v1225
  %v2124 = vpop.f32.mrb[0].mxu0
  %v2125 = vadd.f32 %v285, %v2124
  %v2126 = vpop.f32.mrb[0].mxu0
  %v2127 = vpop.f32.mrb[0].mxu0
  %v2128 = vadd.f32 %v285, %v2127
  %v2129 = vpop.f32.mrb[0].mxu0
  %2130 = vmatprep.mubr.bf16.mxu0 0
  %2131 = vmatmul.mubr.bf16.gmra.mrb[0].mxu0 %v1228
  %v2132 = vpop.f32.mrb[0].mxu0
  %v2133 = vadd.f32 %v285, %v2132
  %v2134 = vpop.f32.mrb[0].mxu0
  %v2135 = vpop.f32.mrb[0].mxu0
  %v2136 = vadd.f32 %v285, %v2135
  %v2137 = vpop.f32.mrb[0].mxu0
  %2138 = vmatprep.mubr.bf16.mxu0 0
  %2139 = vmatmul.mubr.bf16.gmra.mrb[0].mxu0 %v1231
  %v2140 = vpop.f32.mrb[0].mxu0
  %v2141 = vadd.f32 %v285, %v2140
  %v2142 = vpop.f32.mrb[0].mxu0
  %v2143 = vpop.f32.mrb[0].mxu0
  %v2144 = vadd.f32 %v285, %v2143
  %v2145 = vpop.f32.mrb[0].mxu0
  %2146 = vmatprep.mubr.bf16.mxu0 0
  %2147 = vmatmul.mubr.bf16.gmra.mrb[0].mxu0 %v1234
  %v2148 = vpop.f32.mrb[0].mxu0
  %v2149 = vadd.f32 %v285, %v2148
  %v2150 = vpop.f32.mrb[0].mxu0
  %v2151 = vpop.f32.mrb[0].mxu0
  %v2152 = vadd.f32 %v285, %v2151
  %v2153 = vpop.f32.mrb[0].mxu0
  %2154 = vmatprep.mubr.bf16.mxu0 0
  %2155 = vmatmul.mubr.bf16.gmra.mrb[0].mxu0 %v1237
  %v2156 = vpop.f32.mrb[0].mxu0
  %v2157 = vadd.f32 %v285, %v2156
  %v2158 = vpop.f32.mrb[0].mxu0
  %v2159 = vpop.f32.mrb[0].mxu0
  %v2160 = vadd.f32 %v285, %v2159
  %v2161 = vpop.f32.mrb[0].mxu0
  %2162 = vmatprep.mubr.bf16.mxu0 0
  %2163 = vmatmul.mubr.bf16.gmra.mrb[0].mxu0 %v1240
  %v2164 = vpop.f32.mrb[0].mxu0
  %v2165 = vadd.f32 %v285, %v2164
  %v2166 = vpop.f32.mrb[0].mxu0
  %v2167 = vpop.f32.mrb[0].mxu0
  %v2168 = vadd.f32 %v285, %v2167
  %v2169 = vpop.f32.mrb[0].mxu0
  %2170 = vmatprep.mubr.bf16.mxu0 0
  %2171 = vmatmul.mubr.bf16.gmra.mrb[0].mxu0 %v1243
  %v2172 = vpop.f32.mrb[0].mxu0
  %v2173 = vadd.f32 %v285, %v2172
  %v2174 = vpop.f32.mrb[0].mxu0
  %v2175 = vpop.f32.mrb[0].mxu0
  %v2176 = vadd.f32 %v285, %v2175
  %v2177 = vpop.f32.mrb[0].mxu0
  %2178 = vmatprep.mubr.bf16.mxu0 0
  %2179 = vmatmul.mubr.bf16.gmra.mrb[0].mxu0 %v1246
  %v2180 = vpop.f32.mrb[0].mxu0
  %v2181 = vadd.f32 %v285, %v2180
  %v2182 = vpop.f32.mrb[0].mxu0
  %v2183 = vpop.f32.mrb[0].mxu0
  %v2184 = vadd.f32 %v285, %v2183
  %v2185 = vpop.f32.mrb[0].mxu0
  %2186 = vmatprep.mubr.bf16.mxu0 0
  %2187 = vmatmul.mubr.bf16.gmra.mrb[0].mxu0 %v1249
  %v2188 = vpop.f32.mrb[0].mxu0
  %v2189 = vadd.f32 %v285, %v2188
  %v2190 = vpop.f32.mrb[0].mxu0
  %v2191 = vpop.f32.mrb[0].mxu0
  %v2192 = vadd.f32 %v285, %v2191
  %v2193 = vpop.f32.mrb[0].mxu0
  %2194 = vmatprep.mubr.bf16.mxu0 0
  %2195 = vmatmul.mubr.bf16.gmra.mrb[0].mxu0 %v1252
  %v2196 = vpop.f32.mrb[0].mxu0
  %v2197 = vadd.f32 %v285, %v2196
  %v2198 = vpop.f32.mrb[0].mxu0
  %v2199 = vpop.f32.mrb[0].mxu0
  %v2200 = vadd.f32 %v285, %v2199
  %v2201 = vpop.f32.mrb[0].mxu0
  %2202 = vmatprep.mubr.bf16.mxu0 0
  %2203 = vmatmul.mubr.bf16.gmra.mrb[0].mxu0 %v1255
  %v2204 = vpop.f32.mrb[0].mxu0
  %v2205 = vadd.f32 %v285, %v2204
  %v2206 = vpop.f32.mrb[0].mxu0
  %v2207 = vpop.f32.mrb[0].mxu0
  %v2208 = vadd.f32 %v285, %v2207
  %v2209 = vpop.f32.mrb[0].mxu0
  %2210 = vmatprep.mubr.bf16.mxu0 0
  %2211 = vmatmul.mubr.bf16.gmra.mrb[0].mxu0 %v1258
  %v2212 = vpop.f32.mrb[0].mxu0
  %v2213 = vadd.f32 %v285, %v2212
  %v2214 = vpop.f32.mrb[0].mxu0
  %v2215 = vpop.f32.mrb[0].mxu0
  %v2216 = vadd.f32 %v285, %v2215
  %v2217 = vpop.f32.mrb[0].mxu0
  %2218 = vmatprep.mubr.bf16.mxu0 0
  %2219 = vmatmul.mubr.bf16.gmra.mrb[0].mxu0 %v1261
  %v2220 = vpop.f32.mrb[0].mxu0
  %v2221 = vadd.f32 %v285, %v2220
  %v2222 = vpop.f32.mrb[0].mxu0
  %v2223 = vpop.f32.mrb[0].mxu0
  %v2224 = vadd.f32 %v285, %v2223
  %v2225 = vpop.f32.mrb[0].mxu0
  %2226 = vmatprep.mubr.bf16.mxu0 0
  %2227 = vmatmul.mubr.bf16.gmra.mrb[0].mxu0 %v1264
  %v2228 = vpop.f32.mrb[0].mxu0
  %v2229 = vadd.f32 %v285, %v2228
  %v2230 = vpop.f32.mrb[0].mxu0
  %v2231 = vpop.f32.mrb[0].mxu0
  %v2232 = vadd.f32 %v285, %v2231
  %v2233 = vpop.f32.mrb[0].mxu0
  %2234 = vmatprep.mubr.bf16.mxu0 0
  %2235 = vmatmul.mubr.bf16.gmra.mrb[0].mxu0 %v1267
  %v2236 = vpop.f32.mrb[0].mxu0
  %v2237 = vadd.f32 %v285, %v2236
  %v2238 = vpop.f32.mrb[0].mxu0
  %v2239 = vpop.f32.mrb[0].mxu0
  %v2240 = vadd.f32 %v285, %v2239
  %v2241 = vpop.f32.mrb[0].mxu0
  %2242 = vmatprep.mubr.bf16.mxu0 0
  %2243 = vmatmul.mubr.bf16.gmra.mrb[0].mxu0 %v1270
  %v2244 = vpop.f32.mrb[0].mxu0
  %v2245 = vadd.f32 %v285, %v2244
  %v2246 = vpop.f32.mrb[0].mxu0
  %v2247 = vpop.f32.mrb[0].mxu0
  %v2248 = vadd.f32 %v285, %v2247
  %v2249 = vpop.f32.mrb[0].mxu0
  %2250 = vmatprep.mubr.bf16.mxu0 0
  %2251 = vmatmul.mubr.bf16.gmra.mrb[0].mxu0 %v1273
  %v2252 = vpop.f32.mrb[0].mxu0
  %v2253 = vadd.f32 %v285, %v2252
  %v2254 = vpop.f32.mrb[0].mxu0
  %v2255 = vpop.f32.mrb[0].mxu0
  %v2256 = vadd.f32 %v285, %v2255
  %v2257 = vpop.f32.mrb[0].mxu0
  %2258 = vmatprep.mubr.bf16.mxu0 0
  %2259 = vmatmul.mubr.bf16.gmra.mrb[0].mxu0 %v1276
  %v2260 = vpop.f32.mrb[0].mxu0
  %v2261 = vadd.f32 %v285, %v2260
  %v2262 = vpop.f32.mrb[0].mxu0
  %v2263 = vpop.f32.mrb[0].mxu0
  %v2264 = vadd.f32 %v285, %v2263
  %v2265 = vpop.f32.mrb[0].mxu0
  %2266 = vmatprep.mubr.bf16.mxu0 0
  %2267 = vmatmul.mubr.bf16.gmra.mrb[0].mxu0 %v1279
  %v2268 = vpop.f32.mrb[0].mxu0
  %v2269 = vadd.f32 %v285, %v2268
  %v2270 = vpop.f32.mrb[0].mxu0
  %v2271 = vpop.f32.mrb[0].mxu0
  %v2272 = vadd.f32 %v285, %v2271
  %v2273 = vpop.f32.mrb[0].mxu0
  %2274 = vmatprep.mubr.bf16.mxu0 0
  %2275 = vmatmul.mubr.bf16.gmra.mrb[0].mxu0 %v1282
  %v2276 = vpop.f32.mrb[0].mxu0
  %v2277 = vadd.f32 %v285, %v2276
  %v2278 = vpop.f32.mrb[0].mxu0
  %v2279 = vpop.f32.mrb[0].mxu0
  %v2280 = vadd.f32 %v285, %v2279
  %v2281 = vpop.f32.mrb[0].mxu0
  %2282 = vmatprep.mubr.bf16.mxu0 0
  %2283 = vmatmul.mubr.bf16.gmra.mrb[0].mxu0 %v1285
  %v2284 = vpop.f32.mrb[0].mxu0
  %v2285 = vadd.f32 %v285, %v2284
  %v2286 = vpop.f32.mrb[0].mxu0
  %v2287 = vpop.f32.mrb[0].mxu0
  %v2288 = vadd.f32 %v285, %v2287
  %v2289 = vpop.f32.mrb[0].mxu0
  %2290 = vmatprep.mubr.bf16.mxu0 0
  %2291 = vmatmul.mubr.bf16.gmra.mrb[0].mxu0 %v1288
  %v2292 = vpop.f32.mrb[0].mxu0
  %v2293 = vadd.f32 %v285, %v2292
  %v2294 = vpop.f32.mrb[0].mxu0
  %v2295 = vpop.f32.mrb[0].mxu0
  %v2296 = vadd.f32 %v285, %v2295
  %v2297 = vpop.f32.mrb[0].mxu0
  %2298 = vmatprep.mubr.bf16.mxu0 0
  %2299 = vmatmul.mubr.bf16.gmra.mrb[0].mxu0 %v1291
  %v2300 = vpop.f32.mrb[0].mxu0
  %v2301 = vadd.f32 %v285, %v2300
  %v2302 = vpop.f32.mrb[0].mxu0
  %v2303 = vpop.f32.mrb[0].mxu0
  %v2304 = vadd.f32 %v285, %v2303
  %v2305 = vpop.f32.mrb[0].mxu0
  %2306 = vmatprep.mubr.bf16.mxu0 0
  %2307 = vmatmul.mubr.bf16.gmra.mrb[0].mxu0 %v1294
  %v2308 = vpop.f32.mrb[0].mxu0
  %v2309 = vadd.f32 %v285, %v2308
  %v2310 = vpop.f32.mrb[0].mxu0
  %v2311 = vpop.f32.mrb[0].mxu0
  %v2312 = vadd.f32 %v285, %v2311
  %v2313 = vpop.f32.mrb[0].mxu0
  %2314 = vmatprep.mubr.bf16.mxu0 0
  %2315 = vmatmul.mubr.bf16.gmra.mrb[0].mxu0 %v1297
  %v2316 = vpop.f32.mrb[0].mxu0
  %v2317 = vadd.f32 %v285, %v2316
  %v2318 = vpop.f32.mrb[0].mxu0
  %v2319 = vpop.f32.mrb[0].mxu0
  %v2320 = vadd.f32 %v285, %v2319
  %v2321 = vpop.f32.mrb[0].mxu0
  %2322 = vmatprep.mubr.bf16.mxu0 0
  %2323 = vmatmul.mubr.bf16.gmra.mrb[0].mxu0 %v1300
  %v2324 = vpop.f32.mrb[0].mxu0
  %v2325 = vadd.f32 %v285, %v2324
  %v2326 = vpop.f32.mrb[0].mxu0
  %v2327 = vpop.f32.mrb[0].mxu0
  %v2328 = vadd.f32 %v285, %v2327
  %v2329 = vpop.f32.mrb[0].mxu0
  %2330 = vmatprep.mubr.bf16.mxu0 0
  %2331 = vmatmul.mubr.bf16.gmra.mrb[0].mxu0 %v1303
  %v2332 = vpop.f32.mrb[0].mxu0
  %v2333 = vadd.f32 %v285, %v2332
  %v2334 = vpop.f32.mrb[0].mxu0
  %v2335 = vpop.f32.mrb[0].mxu0
  %v2336 = vadd.f32 %v285, %v2335
  %v2337 = vpop.f32.mrb[0].mxu0
  %2338 = vmatprep.mubr.bf16.mxu0 0
  %2339 = vmatmul.mubr.bf16.gmra.mrb[0].mxu0 %v1306
  %v2340 = vpop.f32.mrb[0].mxu0
  %v2341 = vadd.f32 %v285, %v2340
  %v2342 = vpop.f32.mrb[0].mxu0
  %v2343 = vpop.f32.mrb[0].mxu0
  %v2344 = vadd.f32 %v285, %v2343
  %v2345 = vpop.f32.mrb[0].mxu0
  %2346 = vmatprep.mubr.bf16.mxu0 0
  %2347 = vmatmul.mubr.bf16.gmra.mrb[0].mxu0 %v1309
  %v2348 = vpop.f32.mrb[0].mxu0
  %v2349 = vadd.f32 %v285, %v2348
  %v2350 = vpop.f32.mrb[0].mxu0
  %v2351 = vpop.f32.mrb[0].mxu0
  %v2352 = vadd.f32 %v285, %v2351
  %v2353 = vpop.f32.mrb[0].mxu0
  %2354 = vmatprep.mubr.bf16.mxu0 0
  %2355 = vmatmul.mubr.bf16.gmra.mrb[0].mxu0 %v1312
  %v2356 = vpop.f32.mrb[0].mxu0
  %v2357 = vadd.f32 %v285, %v2356
  %v2358 = vpop.f32.mrb[0].mxu0
  %v2359 = vpop.f32.mrb[0].mxu0
  %v2360 = vadd.f32 %v285, %v2359
  %v2361 = vpop.f32.mrb[0].mxu0
  %2362 = vmatprep.mubr.bf16.mxu0 0
  %2363 = vmatmul.mubr.bf16.gmra.mrb[0].mxu0 %v1315
  %v2364 = vpop.f32.mrb[0].mxu0
  %v2365 = vadd.f32 %v285, %v2364
  %v2366 = vpop.f32.mrb[0].mxu0
  %v2367 = vpop.f32.mrb[0].mxu0
  %v2368 = vadd.f32 %v285, %v2367
  %v2369 = vpop.f32.mrb[0].mxu0
  %2370 = vmatprep.mubr.bf16.mxu0 0
  %2371 = vmatmul.mubr.bf16.gmra.mrb[0].mxu0 %v1318
  %v2372 = vpop.f32.mrb[0].mxu0
  %v2373 = vadd.f32 %v285, %v2372
  %v2374 = vpop.f32.mrb[0].mxu0
  %v2375 = vpop.f32.mrb[0].mxu0
  %v2376 = vadd.f32 %v285, %v2375
  %v2377 = vpop.f32.mrb[0].mxu0
  %2378 = vmatprep.mubr.bf16.mxu0 0
  %2379 = vmatmul.mubr.bf16.gmra.mrb[0].mxu0 %v1321
  %v2380 = vpop.f32.mrb[0].mxu0
  %v2381 = vadd.f32 %v285, %v2380
  %v2382 = vpop.f32.mrb[0].mxu0
  %v2383 = vpop.f32.mrb[0].mxu0
  %v2384 = vadd.f32 %v285, %v2383
  %v2385 = vpop.f32.mrb[0].mxu0
  %2386 = vdwg.mxu0
  %v2387 = vmax.f32 %v1365, 0.0
  %v2388 = vmax.f32 %v1368, 0.0
  %v2389 = vmax.f32 %v1373, 0.0
  %v2390 = vmax.f32 %v1376, 0.0
  %v2391 = vmax.f32 %v1381, 0.0
  %v2392 = vmax.f32 %v1384, 0.0
  %v2393 = vmax.f32 %v1389, 0.0
  %v2394 = vmax.f32 %v1392, 0.0
  %v2395 = vmax.f32 %v1397, 0.0
  %v2396 = vmax.f32 %v1400, 0.0
  %v2397 = vmax.f32 %v1405, 0.0
  %v2398 = vmax.f32 %v1408, 0.0
  %v2399 = vmax.f32 %v1413, 0.0
  %v2400 = vmax.f32 %v1416, 0.0
  %v2401 = vmax.f32 %v1421, 0.0
  %v2402 = vmax.f32 %v1424, 0.0
  %v2403 = vmax.f32 %v1429, 0.0
  %v2404 = vmax.f32 %v1432, 0.0
  %v2405 = vmax.f32 %v1437, 0.0
  %v2406 = vmax.f32 %v1440, 0.0
  %v2407 = vmax.f32 %v1445, 0.0
  %v2408 = vmax.f32 %v1448, 0.0
  %v2409 = vmax.f32 %v1453, 0.0
  %v2410 = vmax.f32 %v1456, 0.0
  %v2411 = vmax.f32 %v1461, 0.0
  %v2412 = vmax.f32 %v1464, 0.0
  %v2413 = vmax.f32 %v1469, 0.0
  %v2414 = vmax.f32 %v1472, 0.0
  %v2415 = vmax.f32 %v1477, 0.0
  %v2416 = vmax.f32 %v1480, 0.0
  %v2417 = vmax.f32 %v1485, 0.0
  %v2418 = vmax.f32 %v1488, 0.0
  %v2419 = vmax.f32 %v1493, 0.0
  %v2420 = vmax.f32 %v1496, 0.0
  %v2421 = vmax.f32 %v1501, 0.0
  %v2422 = vmax.f32 %v1504, 0.0
  %v2423 = vmax.f32 %v1509, 0.0
  %v2424 = vmax.f32 %v1512, 0.0
  %v2425 = vmax.f32 %v1517, 0.0
  %v2426 = vmax.f32 %v1520, 0.0
  %v2427 = vmax.f32 %v1525, 0.0
  %v2428 = vmax.f32 %v1528, 0.0
  %v2429 = vmax.f32 %v1533, 0.0
  %v2430 = vmax.f32 %v1536, 0.0
  %v2431 = vmax.f32 %v1541, 0.0
  %v2432 = vmax.f32 %v1544, 0.0
  %v2433 = vmax.f32 %v1549, 0.0
  %v2434 = vmax.f32 %v1552, 0.0
  %v2435 = vmax.f32 %v1557, 0.0
  %v2436 = vmax.f32 %v1560, 0.0
  %v2437 = vmax.f32 %v1565, 0.0
  %v2438 = vmax.f32 %v1568, 0.0
  %v2439 = vmax.f32 %v1573, 0.0
  %v2440 = vmax.f32 %v1576, 0.0
  %v2441 = vmax.f32 %v1581, 0.0
  %v2442 = vmax.f32 %v1584, 0.0
  %v2443 = vmax.f32 %v1589, 0.0
  %v2444 = vmax.f32 %v1592, 0.0
  %v2445 = vmax.f32 %v1597, 0.0
  %v2446 = vmax.f32 %v1600, 0.0
  %v2447 = vmax.f32 %v1605, 0.0
  %v2448 = vmax.f32 %v1608, 0.0
  %v2449 = vmax.f32 %v1613, 0.0
  %v2450 = vmax.f32 %v1616, 0.0
  %v2451 = vmax.f32 %v1621, 0.0
  %v2452 = vmax.f32 %v1624, 0.0
  %v2453 = vmax.f32 %v1629, 0.0
  %v2454 = vmax.f32 %v1632, 0.0
  %v2455 = vmax.f32 %v1637, 0.0
  %v2456 = vmax.f32 %v1640, 0.0
  %v2457 = vmax.f32 %v1645, 0.0
  %v2458 = vmax.f32 %v1648, 0.0
  %v2459 = vmax.f32 %v1653, 0.0
  %v2460 = vmax.f32 %v1656, 0.0
  %v2461 = vmax.f32 %v1661, 0.0
  %v2462 = vmax.f32 %v1664, 0.0
  %v2463 = vmax.f32 %v1669, 0.0
  %v2464 = vmax.f32 %v1672, 0.0
  %v2465 = vmax.f32 %v1677, 0.0
  %v2466 = vmax.f32 %v1680, 0.0
  %v2467 = vmax.f32 %v1685, 0.0
  %v2468 = vmax.f32 %v1688, 0.0
  %v2469 = vmax.f32 %v1693, 0.0
  %v2470 = vmax.f32 %v1696, 0.0
  %v2471 = vmax.f32 %v1701, 0.0
  %v2472 = vmax.f32 %v1704, 0.0
  %v2473 = vmax.f32 %v1709, 0.0
  %v2474 = vmax.f32 %v1712, 0.0
  %v2475 = vmax.f32 %v1717, 0.0
  %v2476 = vmax.f32 %v1720, 0.0
  %v2477 = vmax.f32 %v1725, 0.0
  %v2478 = vmax.f32 %v1728, 0.0
  %v2479 = vmax.f32 %v1733, 0.0
  %v2480 = vmax.f32 %v1736, 0.0
  %v2481 = vmax.f32 %v1741, 0.0
  %v2482 = vmax.f32 %v1744, 0.0
  %v2483 = vmax.f32 %v1749, 0.0
  %v2484 = vmax.f32 %v1752, 0.0
  %v2485 = vmax.f32 %v1757, 0.0
  %v2486 = vmax.f32 %v1760, 0.0
  %v2487 = vmax.f32 %v1765, 0.0
  %v2488 = vmax.f32 %v1768, 0.0
  %v2489 = vmax.f32 %v1773, 0.0
  %v2490 = vmax.f32 %v1776, 0.0
  %v2491 = vmax.f32 %v1781, 0.0
  %v2492 = vmax.f32 %v1784, 0.0
  %v2493 = vmax.f32 %v1789, 0.0
  %v2494 = vmax.f32 %v1792, 0.0
  %v2495 = vmax.f32 %v1797, 0.0
  %v2496 = vmax.f32 %v1800, 0.0
  %v2497 = vmax.f32 %v1805, 0.0
  %v2498 = vmax.f32 %v1808, 0.0
  %v2499 = vmax.f32 %v1813, 0.0
  %v2500 = vmax.f32 %v1816, 0.0
  %v2501 = vmax.f32 %v1821, 0.0
  %v2502 = vmax.f32 %v1824, 0.0
  %v2503 = vmax.f32 %v1829, 0.0
  %v2504 = vmax.f32 %v1832, 0.0
  %v2505 = vmax.f32 %v1837, 0.0
  %v2506 = vmax.f32 %v1840, 0.0
  %v2507 = vmax.f32 %v1845, 0.0
  %v2508 = vmax.f32 %v1848, 0.0
  %v2509 = vmax.f32 %v1853, 0.0
  %v2510 = vmax.f32 %v1856, 0.0
  %v2511 = vmax.f32 %v1861, 0.0
  %v2512 = vmax.f32 %v1864, 0.0
  %v2513 = vmax.f32 %v1869, 0.0
  %v2514 = vmax.f32 %v1872, 0.0
  %v2515 = vmax.f32 %v1877, 0.0
  %v2516 = vmax.f32 %v1880, 0.0
  %v2517 = vmax.f32 %v1885, 0.0
  %v2518 = vmax.f32 %v1888, 0.0
  %v2519 = vmax.f32 %v1893, 0.0
  %v2520 = vmax.f32 %v1896, 0.0
  %v2521 = vmax.f32 %v1901, 0.0
  %v2522 = vmax.f32 %v1904, 0.0
  %v2523 = vmax.f32 %v1909, 0.0
  %v2524 = vmax.f32 %v1912, 0.0
  %v2525 = vmax.f32 %v1917, 0.0
  %v2526 = vmax.f32 %v1920, 0.0
  %v2527 = vmax.f32 %v1925, 0.0
  %v2528 = vmax.f32 %v1928, 0.0
  %v2529 = vmax.f32 %v1933, 0.0
  %v2530 = vmax.f32 %v1936, 0.0
  %v2531 = vmax.f32 %v1941, 0.0
  %v2532 = vmax.f32 %v1944, 0.0
  %v2533 = vmax.f32 %v1949, 0.0
  %v2534 = vmax.f32 %v1952, 0.0
  %v2535 = vmax.f32 %v1957, 0.0
  %v2536 = vmax.f32 %v1960, 0.0
  %v2537 = vmax.f32 %v1965, 0.0
  %v2538 = vmax.f32 %v1968, 0.0
  %v2539 = vmax.f32 %v1973, 0.0
  %v2540 = vmax.f32 %v1976, 0.0
  %v2541 = vmax.f32 %v1981, 0.0
  %v2542 = vmax.f32 %v1984, 0.0
  %v2543 = vmax.f32 %v1989, 0.0
  %v2544 = vmax.f32 %v1992, 0.0
  %v2545 = vmax.f32 %v1997, 0.0
  %v2546 = vmax.f32 %v2000, 0.0
  %v2547 = vmax.f32 %v2005, 0.0
  %v2548 = vmax.f32 %v2008, 0.0
  %v2549 = vmax.f32 %v2013, 0.0
  %v2550 = vmax.f32 %v2016, 0.0
  %v2551 = vmax.f32 %v2021, 0.0
  %v2552 = vmax.f32 %v2024, 0.0
  %v2553 = vmax.f32 %v2029, 0.0
  %v2554 = vmax.f32 %v2032, 0.0
  %v2555 = vmax.f32 %v2037, 0.0
  %v2556 = vmax.f32 %v2040, 0.0
  %v2557 = vmax.f32 %v2045, 0.0
  %v2558 = vmax.f32 %v2048, 0.0
  %v2559 = vmax.f32 %v2053, 0.0
  %v2560 = vmax.f32 %v2056, 0.0
  %v2561 = vmax.f32 %v2061, 0.0
  %v2562 = vmax.f32 %v2064, 0.0
  %v2563 = vmax.f32 %v2069, 0.0
  %v2564 = vmax.f32 %v2072, 0.0
  %v2565 = vmax.f32 %v2077, 0.0
  %v2566 = vmax.f32 %v2080, 0.0
  %v2567 = vmax.f32 %v2085, 0.0
  %v2568 = vmax.f32 %v2088, 0.0
  %v2569 = vmax.f32 %v2093, 0.0
  %v2570 = vmax.f32 %v2096, 0.0
  %v2571 = vmax.f32 %v2101, 0.0
  %v2572 = vmax.f32 %v2104, 0.0
  %v2573 = vmax.f32 %v2109, 0.0
  %v2574 = vmax.f32 %v2112, 0.0
  %v2575 = vmax.f32 %v2117, 0.0
  %v2576 = vmax.f32 %v2120, 0.0
  %v2577 = vmax.f32 %v2125, 0.0
  %v2578 = vmax.f32 %v2128, 0.0
  %v2579 = vmax.f32 %v2133, 0.0
  %v2580 = vmax.f32 %v2136, 0.0
  %v2581 = vmax.f32 %v2141, 0.0
  %v2582 = vmax.f32 %v2144, 0.0
  %v2583 = vmax.f32 %v2149, 0.0
  %v2584 = vmax.f32 %v2152, 0.0
  %v2585 = vmax.f32 %v2157, 0.0
  %v2586 = vmax.f32 %v2160, 0.0
  %v2587 = vmax.f32 %v2165, 0.0
  %v2588 = vmax.f32 %v2168, 0.0
  %v2589 = vmax.f32 %v2173, 0.0
  %v2590 = vmax.f32 %v2176, 0.0
  %v2591 = vmax.f32 %v2181, 0.0
  %v2592 = vmax.f32 %v2184, 0.0
  %v2593 = vmax.f32 %v2189, 0.0
  %v2594 = vmax.f32 %v2192, 0.0
  %v2595 = vmax.f32 %v2197, 0.0
  %v2596 = vmax.f32 %v2200, 0.0
  %v2597 = vmax.f32 %v2205, 0.0
  %v2598 = vmax.f32 %v2208, 0.0
  %v2599 = vmax.f32 %v2213, 0.0
  %v2600 = vmax.f32 %v2216, 0.0
  %v2601 = vmax.f32 %v2221, 0.0
  %v2602 = vmax.f32 %v2224, 0.0
  %v2603 = vmax.f32 %v2229, 0.0
  %v2604 = vmax.f32 %v2232, 0.0
  %v2605 = vmax.f32 %v2237, 0.0
  %v2606 = vmax.f32 %v2240, 0.0
  %v2607 = vmax.f32 %v2245, 0.0
  %v2608 = vmax.f32 %v2248, 0.0
  %v2609 = vmax.f32 %v2253, 0.0
  %v2610 = vmax.f32 %v2256, 0.0
  %v2611 = vmax.f32 %v2261, 0.0
  %v2612 = vmax.f32 %v2264, 0.0
  %v2613 = vmax.f32 %v2269, 0.0
  %v2614 = vmax.f32 %v2272, 0.0
  %v2615 = vmax.f32 %v2277, 0.0
  %v2616 = vmax.f32 %v2280, 0.0
  %v2617 = vmax.f32 %v2285, 0.0
  %v2618 = vmax.f32 %v2288, 0.0
  %v2619 = vmax.f32 %v2293, 0.0
  %v2620 = vmax.f32 %v2296, 0.0
  %v2621 = vmax.f32 %v2301, 0.0
  %v2622 = vmax.f32 %v2304, 0.0
  %v2623 = vmax.f32 %v2309, 0.0
  %v2624 = vmax.f32 %v2312, 0.0
  %v2625 = vmax.f32 %v2317, 0.0
  %v2626 = vmax.f32 %v2320, 0.0
  %v2627 = vmax.f32 %v2325, 0.0
  %v2628 = vmax.f32 %v2328, 0.0
  %v2629 = vmax.f32 %v2333, 0.0
  %v2630 = vmax.f32 %v2336, 0.0
  %v2631 = vmax.f32 %v2341, 0.0
  %v2632 = vmax.f32 %v2344, 0.0
  %v2633 = vmax.f32 %v2349, 0.0
  %v2634 = vmax.f32 %v2352, 0.0
  %v2635 = vmax.f32 %v2357, 0.0
  %v2636 = vmax.f32 %v2360, 0.0
  %v2637 = vmax.f32 %v2365, 0.0
  %v2638 = vmax.f32 %v2368, 0.0
  %v2639 = vmax.f32 %v2373, 0.0
  %v2640 = vmax.f32 %v2376, 0.0
  %v2641 = vmax.f32 %v2381, 0.0
  %v2642 = vmax.f32 %v2384, 0.0
  %v2643 = vld [vmem:[#allocation2] sm:$0xff]
  %v2644 = vadd.f32 %v2387, %v2388
  %v2645 = vadd.f32 %v2644, %v2389
  %v2646 = vadd.f32 %v2645, %v2390
  %v2647 = vadd.f32 %v2646, %v2391
  %v2648 = vadd.f32 %v2647, %v2392
  %v2649 = vadd.f32 %v2648, %v2393
  %v2650 = vadd.f32 %v2649, %v2394
  %v2651 = vadd.f32 %v2650, %v2395
  %v2652 = vadd.f32 %v2651, %v2396
  %v2653 = vadd.f32 %v2652, %v2397
  %v2654 = vadd.f32 %v2653, %v2398
  %v2655 = vadd.f32 %v2654, %v2399
  %v2656 = vadd.f32 %v2655, %v2400
  %v2657 = vadd.f32 %v2656, %v2401
  %v2658 = vadd.f32 %v2657, %v2402
  %v2659 = vadd.f32 %v2658, %v2403
  %v2660 = vadd.f32 %v2659, %v2404
  %v2661 = vadd.f32 %v2660, %v2405
  %v2662 = vadd.f32 %v2661, %v2406
  %v2663 = vadd.f32 %v2662, %v2407
  %v2664 = vadd.f32 %v2663, %v2408
  %v2665 = vadd.f32 %v2664, %v2409
  %v2666 = vadd.f32 %v2665, %v2410
  %v2667 = vadd.f32 %v2666, %v2411
  %v2668 = vadd.f32 %v2667, %v2412
  %v2669 = vadd.f32 %v2668, %v2413
  %v2670 = vadd.f32 %v2669, %v2414
  %v2671 = vadd.f32 %v2670, %v2415
  %v2672 = vadd.f32 %v2671, %v2416
  %v2673 = vadd.f32 %v2672, %v2417
  %v2674 = vadd.f32 %v2673, %v2418
  %v2675 = vrot.slane %v2674, 4
  %v2676 = vadd.f32 %v2674, %v2675
  %v2677 = vrot.slane %v2676, 2
  %v2678 = vadd.f32 %v2676, %v2677
  %v2679 = vrot.slane %v2678, 1
  %v2680 = vadd.f32 %v2678, %v2679
  %v2681 = vadd.f32 %v2419, %v2420
  %v2682 = vadd.f32 %v2681, %v2421
  %v2683 = vadd.f32 %v2682, %v2422
  %v2684 = vadd.f32 %v2683, %v2423
  %v2685 = vadd.f32 %v2684, %v2424
  %v2686 = vadd.f32 %v2685, %v2425
  %v2687 = vadd.f32 %v2686, %v2426
  %v2688 = vadd.f32 %v2687, %v2427
  %v2689 = vadd.f32 %v2688, %v2428
  %v2690 = vadd.f32 %v2689, %v2429
  %v2691 = vadd.f32 %v2690, %v2430
  %v2692 = vadd.f32 %v2691, %v2431
  %v2693 = vadd.f32 %v2692, %v2432
  %v2694 = vadd.f32 %v2693, %v2433
  %v2695 = vadd.f32 %v2694, %v2434
  %v2696 = vadd.f32 %v2695, %v2435
  %v2697 = vadd.f32 %v2696, %v2436
  %v2698 = vadd.f32 %v2697, %v2437
  %v2699 = vadd.f32 %v2698, %v2438
  %v2700 = vadd.f32 %v2699, %v2439
  %v2701 = vadd.f32 %v2700, %v2440
  %v2702 = vadd.f32 %v2701, %v2441
  %v2703 = vadd.f32 %v2702, %v2442
  %v2704 = vadd.f32 %v2703, %v2443
  %v2705 = vadd.f32 %v2704, %v2444
  %v2706 = vadd.f32 %v2705, %v2445
  %v2707 = vadd.f32 %v2706, %v2446
  %v2708 = vadd.f32 %v2707, %v2447
  %v2709 = vadd.f32 %v2708, %v2448
  %v2710 = vadd.f32 %v2709, %v2449
  %v2711 = vadd.f32 %v2710, %v2450
  %v2712 = vrot.slane %v2711, 4
  %v2713 = vadd.f32 %v2711, %v2712
  %v2714 = vrot.slane %v2713, 2
  %v2715 = vadd.f32 %v2713, %v2714
  %v2716 = vrot.slane %v2715, 1
  %v2717 = vadd.f32 %v2715, %v2716
  %v2718 = vadd.f32 %v2451, %v2452
  %v2719 = vadd.f32 %v2718, %v2453
  %v2720 = vadd.f32 %v2719, %v2454
  %v2721 = vadd.f32 %v2720, %v2455
  %v2722 = vadd.f32 %v2721, %v2456
  %v2723 = vadd.f32 %v2722, %v2457
  %v2724 = vadd.f32 %v2723, %v2458
  %v2725 = vadd.f32 %v2724, %v2459
  %v2726 = vadd.f32 %v2725, %v2460
  %v2727 = vadd.f32 %v2726, %v2461
  %v2728 = vadd.f32 %v2727, %v2462
  %v2729 = vadd.f32 %v2728, %v2463
  %v2730 = vadd.f32 %v2729, %v2464
  %v2731 = vadd.f32 %v2730, %v2465
  %v2732 = vadd.f32 %v2731, %v2466
  %v2733 = vadd.f32 %v2732, %v2467
  %v2734 = vadd.f32 %v2733, %v2468
  %v2735 = vadd.f32 %v2734, %v2469
  %v2736 = vadd.f32 %v2735, %v2470
  %v2737 = vadd.f32 %v2736, %v2471
  %v2738 = vadd.f32 %v2737, %v2472
  %v2739 = vadd.f32 %v2738, %v2473
  %v2740 = vadd.f32 %v2739, %v2474
  %v2741 = vadd.f32 %v2740, %v2475
  %v2742 = vadd.f32 %v2741, %v2476
  %v2743 = vadd.f32 %v2742, %v2477
  %v2744 = vadd.f32 %v2743, %v2478
  %v2745 = vadd.f32 %v2744, %v2479
  %v2746 = vadd.f32 %v2745, %v2480
  %v2747 = vadd.f32 %v2746, %v2481
  %v2748 = vadd.f32 %v2747, %v2482
  %v2749 = vrot.slane %v2748, 4
  %v2750 = vadd.f32 %v2748, %v2749
  %v2751 = vrot.slane %v2750, 2
  %v2752 = vadd.f32 %v2750, %v2751
  %v2753 = vrot.slane %v2752, 1
  %v2754 = vadd.f32 %v2752, %v2753
  %v2755 = vadd.f32 %v2483, %v2484
  %v2756 = vadd.f32 %v2755, %v2485
  %v2757 = vadd.f32 %v2756, %v2486
  %v2758 = vadd.f32 %v2757, %v2487
  %v2759 = vadd.f32 %v2758, %v2488
  %v2760 = vadd.f32 %v2759, %v2489
  %v2761 = vadd.f32 %v2760, %v2490
  %v2762 = vadd.f32 %v2761, %v2491
  %v2763 = vadd.f32 %v2762, %v2492
  %v2764 = vadd.f32 %v2763, %v2493
  %v2765 = vadd.f32 %v2764, %v2494
  %v2766 = vadd.f32 %v2765, %v2495
  %v2767 = vadd.f32 %v2766, %v2496
  %v2768 = vadd.f32 %v2767, %v2497
  %v2769 = vadd.f32 %v2768, %v2498
  %v2770 = vadd.f32 %v2769, %v2499
  %v2771 = vadd.f32 %v2770, %v2500
  %v2772 = vadd.f32 %v2771, %v2501
  %v2773 = vadd.f32 %v2772, %v2502
  %v2774 = vadd.f32 %v2773, %v2503
  %v2775 = vadd.f32 %v2774, %v2504
  %v2776 = vadd.f32 %v2775, %v2505
  %v2777 = vadd.f32 %v2776, %v2506
  %v2778 = vadd.f32 %v2777, %v2507
  %v2779 = vadd.f32 %v2778, %v2508
  %v2780 = vadd.f32 %v2779, %v2509
  %v2781 = vadd.f32 %v2780, %v2510
  %v2782 = vadd.f32 %v2781, %v2511
  %v2783 = vadd.f32 %v2782, %v2512
  %v2784 = vadd.f32 %v2783, %v2513
  %v2785 = vadd.f32 %v2784, %v2514
  %v2786 = vrot.slane %v2785, 4
  %v2787 = vadd.f32 %v2785, %v2786
  %v2788 = vrot.slane %v2787, 2
  %v2789 = vadd.f32 %v2787, %v2788
  %v2790 = vrot.slane %v2789, 1
  %v2791 = vadd.f32 %v2789, %v2790
  %v2792 = vadd.f32 %v2515, %v2516
  %v2793 = vadd.f32 %v2792, %v2517
  %v2794 = vadd.f32 %v2793, %v2518
  %v2795 = vadd.f32 %v2794, %v2519
  %v2796 = vadd.f32 %v2795, %v2520
  %v2797 = vadd.f32 %v2796, %v2521
  %v2798 = vadd.f32 %v2797, %v2522
  %v2799 = vadd.f32 %v2798, %v2523
  %v2800 = vadd.f32 %v2799, %v2524
  %v2801 = vadd.f32 %v2800, %v2525
  %v2802 = vadd.f32 %v2801, %v2526
  %v2803 = vadd.f32 %v2802, %v2527
  %v2804 = vadd.f32 %v2803, %v2528
  %v2805 = vadd.f32 %v2804, %v2529
  %v2806 = vadd.f32 %v2805, %v2530
  %v2807 = vadd.f32 %v2806, %v2531
  %v2808 = vadd.f32 %v2807, %v2532
  %v2809 = vadd.f32 %v2808, %v2533
  %v2810 = vadd.f32 %v2809, %v2534
  %v2811 = vadd.f32 %v2810, %v2535
  %v2812 = vadd.f32 %v2811, %v2536
  %v2813 = vadd.f32 %v2812, %v2537
  %v2814 = vadd.f32 %v2813, %v2538
  %v2815 = vadd.f32 %v2814, %v2539
  %v2816 = vadd.f32 %v2815, %v2540
  %v2817 = vadd.f32 %v2816, %v2541
  %v2818 = vadd.f32 %v2817, %v2542
  %v2819 = vadd.f32 %v2818, %v2543
  %v2820 = vadd.f32 %v2819, %v2544
  %v2821 = vadd.f32 %v2820, %v2545
  %v2822 = vadd.f32 %v2821, %v2546
  %v2823 = vrot.slane %v2822, 4
  %v2824 = vadd.f32 %v2822, %v2823
  %v2825 = vrot.slane %v2824, 2
  %v2826 = vadd.f32 %v2824, %v2825
  %v2827 = vrot.slane %v2826, 1
  %v2828 = vadd.f32 %v2826, %v2827
  %v2829 = vadd.f32 %v2547, %v2548
  %v2830 = vadd.f32 %v2829, %v2549
  %v2831 = vadd.f32 %v2830, %v2550
  %v2832 = vadd.f32 %v2831, %v2551
  %v2833 = vadd.f32 %v2832, %v2552
  %v2834 = vadd.f32 %v2833, %v2553
  %v2835 = vadd.f32 %v2834, %v2554
  %v2836 = vadd.f32 %v2835, %v2555
  %v2837 = vadd.f32 %v2836, %v2556
  %v2838 = vadd.f32 %v2837, %v2557
  %v2839 = vadd.f32 %v2838, %v2558
  %v2840 = vadd.f32 %v2839, %v2559
  %v2841 = vadd.f32 %v2840, %v2560
  %v2842 = vadd.f32 %v2841, %v2561
  %v2843 = vadd.f32 %v2842, %v2562
  %v2844 = vadd.f32 %v2843, %v2563
  %v2845 = vadd.f32 %v2844, %v2564
  %v2846 = vadd.f32 %v2845, %v2565
  %v2847 = vadd.f32 %v2846, %v2566
  %v2848 = vadd.f32 %v2847, %v2567
  %v2849 = vadd.f32 %v2848, %v2568
  %v2850 = vadd.f32 %v2849, %v2569
  %v2851 = vadd.f32 %v2850, %v2570
  %v2852 = vadd.f32 %v2851, %v2571
  %v2853 = vadd.f32 %v2852, %v2572
  %v2854 = vadd.f32 %v2853, %v2573
  %v2855 = vadd.f32 %v2854, %v2574
  %v2856 = vadd.f32 %v2855, %v2575
  %v2857 = vadd.f32 %v2856, %v2576
  %v2858 = vadd.f32 %v2857, %v2577
  %v2859 = vadd.f32 %v2858, %v2578
  %v2860 = vrot.slane %v2859, 4
  %v2861 = vadd.f32 %v2859, %v2860
  %v2862 = vrot.slane %v2861, 2
  %v2863 = vadd.f32 %v2861, %v2862
  %v2864 = vrot.slane %v2863, 1
  %v2865 = vadd.f32 %v2863, %v2864
  %v2866 = vadd.f32 %v2579, %v2580
  %v2867 = vadd.f32 %v2866, %v2581
  %v2868 = vadd.f32 %v2867, %v2582
  %v2869 = vadd.f32 %v2868, %v2583
  %v2870 = vadd.f32 %v2869, %v2584
  %v2871 = vadd.f32 %v2870, %v2585
  %v2872 = vadd.f32 %v2871, %v2586
  %v2873 = vadd.f32 %v2872, %v2587
  %v2874 = vadd.f32 %v2873, %v2588
  %v2875 = vadd.f32 %v2874, %v2589
  %v2876 = vadd.f32 %v2875, %v2590
  %v2877 = vadd.f32 %v2876, %v2591
  %v2878 = vadd.f32 %v2877, %v2592
  %v2879 = vadd.f32 %v2878, %v2593
  %v2880 = vadd.f32 %v2879, %v2594
  %v2881 = vadd.f32 %v2880, %v2595
  %v2882 = vadd.f32 %v2881, %v2596
  %v2883 = vadd.f32 %v2882, %v2597
  %v2884 = vadd.f32 %v2883, %v2598
  %v2885 = vadd.f32 %v2884, %v2599
  %v2886 = vadd.f32 %v2885, %v2600
  %v2887 = vadd.f32 %v2886, %v2601
  %v2888 = vadd.f32 %v2887, %v2602
  %v2889 = vadd.f32 %v2888, %v2603
  %v2890 = vadd.f32 %v2889, %v2604
  %v2891 = vadd.f32 %v2890, %v2605
  %v2892 = vadd.f32 %v2891, %v2606
  %v2893 = vadd.f32 %v2892, %v2607
  %v2894 = vadd.f32 %v2893, %v2608
  %v2895 = vadd.f32 %v2894, %v2609
  %v2896 = vadd.f32 %v2895, %v2610
  %v2897 = vrot.slane %v2896, 4
  %v2898 = vadd.f32 %v2896, %v2897
  %v2899 = vrot.slane %v2898, 2
  %v2900 = vadd.f32 %v2898, %v2899
  %v2901 = vrot.slane %v2900, 1
  %v2902 = vadd.f32 %v2900, %v2901
  %v2903 = vadd.f32 %v2611, %v2612
  %v2904 = vadd.f32 %v2903, %v2613
  %v2905 = vadd.f32 %v2904, %v2614
  %v2906 = vadd.f32 %v2905, %v2615
  %v2907 = vadd.f32 %v2906, %v2616
  %v2908 = vadd.f32 %v2907, %v2617
  %v2909 = vadd.f32 %v2908, %v2618
  %v2910 = vadd.f32 %v2909, %v2619
  %v2911 = vadd.f32 %v2910, %v2620
  %v2912 = vadd.f32 %v2911, %v2621
  %v2913 = vadd.f32 %v2912, %v2622
  %v2914 = vadd.f32 %v2913, %v2623
  %v2915 = vadd.f32 %v2914, %v2624
  %v2916 = vadd.f32 %v2915, %v2625
  %v2917 = vadd.f32 %v2916, %v2626
  %v2918 = vadd.f32 %v2917, %v2627
  %v2919 = vadd.f32 %v2918, %v2628
  %v2920 = vadd.f32 %v2919, %v2629
  %v2921 = vadd.f32 %v2920, %v2630
  %v2922 = vadd.f32 %v2921, %v2631
  %v2923 = vadd.f32 %v2922, %v2632
  %v2924 = vadd.f32 %v2923, %v2633
  %v2925 = vadd.f32 %v2924, %v2634
  %v2926 = vadd.f32 %v2925, %v2635
  %v2927 = vadd.f32 %v2926, %v2636
  %v2928 = vadd.f32 %v2927, %v2637
  %v2929 = vadd.f32 %v2928, %v2638
  %v2930 = vadd.f32 %v2929, %v2639
  %v2931 = vadd.f32 %v2930, %v2640
  %v2932 = vadd.f32 %v2931, %v2641
  %v2933 = vadd.f32 %v2932, %v2642
  %v2934 = vrot.slane %v2933, 4
  %v2935 = vadd.f32 %v2933, %v2934
  %v2936 = vrot.slane %v2935, 2
  %v2937 = vadd.f32 %v2935, %v2936
  %v2938 = vrot.slane %v2937, 1
  %v2939 = vadd.f32 %v2937, %v2938
  %vm2948 = vcmask 1041409
  %v2949 = vsel %vm2948, %v2717, %v2680
  %vm2950 = vcmask 1042434
  %v2951 = vsel %vm2950, %v2754, %v2949
  %vm2952 = vcmask 1043459
  %v2953 = vsel %vm2952, %v2791, %v2951
  %vm2954 = vcmask 1044484
  %v2955 = vsel %vm2954, %v2828, %v2953
  %vm2956 = vcmask 1045509
  %v2957 = vsel %vm2956, %v2865, %v2955
  %vm2958 = vcmask 1046534
  %v2959 = vsel %vm2958, %v2902, %v2957
  %vm2960 = vcmask 1047559
  %v2961 = vsel %vm2960, %v2939, %v2959
  %v2963 = vadd.f32 %v2643, %v2961
  %2964 = vst [vmem:[#allocation2] sm:$0xff] %v2963
  // Predicated region
  $region18: #{_lambda_.2} parent=0 // pred_check
    %p2965 = pneg %p15
  $region19: #{_lambda_.2} parent=0 // pred_check_branch
    %2967 = sbr.rel (%p2965) target = $region21
  $region20: #{_lambda_.2} parent=0 // pred_region
    %v2968 = vld [vmem:[#allocation2] sm:$0xff]
    %v2969 = vmul.f32 %v2968, 0.00390625
    %v2970 = vpack.c.bf16 %v2969, %v2969
    %2971 = vst [vmem:[%s3] sm:$0xf] %v2970
  $region21: #{_lambda_.2} parent=0 // pred_fallthru
    _
  // Predicated region
  $region22: #{_lambda_.2} parent=0 // pred_check
    _
  $region23: #{_lambda_.2} parent=0 // pred_check_branch
    %2973 = sbr.rel (0) target = $region25
  $region24: #{_lambda_.2} parent=0 // pred_region
    _
  $region25: #{_lambda_.2} parent=0 // pred_fallthru
    _
  // Predicated region
  $region26: #{_lambda_.2} parent=0 // pred_check
    _
  $region27: #{_lambda_.2} parent=0 // pred_check_branch
    %2975 = sbr.rel (0) target = $region29
  $region28: #{_lambda_.2} parent=0 // pred_region
    _
  $region29: #{_lambda_.2} parent=0 // pred_fallthru
    _

</llo_original>
